<compile_context>
chip_gen: v7x
topology: tpu7x:2x2x1
jax: 0.10.0
libtpu: 0.0.40
codegen_flags: <defaults>
</compile_context>

<pallas_src>
import functools

import jax
import jax.numpy as jnp
from jax.experimental import pallas as pl
from jax.experimental.pallas import tpu as pltpu

LANE = 128


def _round_up(a, m):
    return (a + m - 1) // m * m


def _hw_defaults():
    """(relu_in_bf16, tm_cap) chosen from the local TPU generation."""
    try:
        kind = jax.devices()[0].device_kind.lower()
    except Exception:  # pragma: no cover - defensive
        kind = ""
    if "v7" in kind:
        return True, 1024   # 2 TCs: split batch only when B > 1024
    if "v6" in kind:
        return True, 512    # single TC, huge VMEM headroom
    return False, 256       # v5e/older: no bf16 VPU, keep f32 ReLU


def _mlp_kernel(x_ref, w1t_ref, w2t_ref, w3t_ref, o_ref, *, relu_in_bf16):
    # x_ref:   (TM, dim)        f32
    # w1t_ref: (dim, K)         bf16 (compute dtype)
    # w2t_ref: (K, K)           bf16
    # w3t_ref: (K, N_padded)    bf16 (zero-padded columns)
    # o_ref:   (TM, N_padded)   f32
    cdt = w1t_ref.dtype
    x = x_ref[...].astype(cdt)

    h1 = jnp.dot(x, w1t_ref[...], preferred_element_type=jnp.float32)
    if relu_in_bf16:
        h1 = jnp.maximum(h1.astype(cdt), 0)          # bf16 ReLU (v6e/v7x VPU)
    else:
        h1 = jnp.maximum(h1, 0.0).astype(cdt)        # f32 ReLU (v5e), cast for MXU

    h2 = jnp.dot(h1, w2t_ref[...], preferred_element_type=jnp.float32)
    if relu_in_bf16:
        h2 = jnp.maximum(h2.astype(cdt), 0)
    else:
        h2 = jnp.maximum(h2, 0.0).astype(cdt)

    out = jnp.dot(h2, w3t_ref[...], preferred_element_type=jnp.float32)
    o_ref[...] = out.astype(o_ref.dtype)


def prepare_params(w1, w2, w3, *, compute_dtype=jnp.bfloat16):
    """One-time parameter prep: transpose, cast, and lane-pad W3^T.

    w1: (k, dim)          = first.weight
    w2: (k, k)            = fc[1].weight
    w3: (num_classes, k)  = fc[3].weight
    Returns (w1t, w2t, w3t_padded, num_classes).
    """
    num_classes = w3.shape[0]
    w1t = jnp.asarray(w1).T.astype(compute_dtype)           # (dim, k)
    w2t = jnp.asarray(w2).T.astype(compute_dtype)           # (k, k)
    w3t = jnp.asarray(w3).T.astype(compute_dtype)           # (k, num_classes)
    n_pad = _round_up(num_classes, LANE) - num_classes
    if n_pad:
        w3t = jnp.pad(w3t, ((0, 0), (0, n_pad)))             # (k, N_padded)
    return w1t, w2t, w3t, num_classes


def net_forward(x, w1t, w2t, w3t_padded, num_classes, *, tm=None):
    """Forward pass. x: [B, dim] f32; params from prepare_params()."""
    B, dim = x.shape
    k = w1t.shape[1]
    n_padded = w3t_padded.shape[1]

    relu_in_bf16, tm_cap = _hw_defaults()

    if tm is None:
        # Single grid step whenever B fits under the per-generation cap;
        # 16-row alignment matches the bf16 (16,128) vreg tile.
        tm = min(tm_cap, _round_up(max(B, 16), 16))
    tm = _round_up(tm, 16)

    b_pad = _round_up(B, tm) - B
    if b_pad:
        x = jnp.pad(x, ((0, b_pad), (0, 0)))
    Bp = B + b_pad
    grid = (Bp // tm,)

    # Only claim batch parallelism (megacore split on v7x) when there is
    # actually more than one tile of work; otherwise keep it arbitrary so a
    # single core owns the single weight fetch.
    semantics = ("parallel",) if grid[0] > 1 else ("arbitrary",)

    kernel = functools.partial(_mlp_kernel, relu_in_bf16=relu_in_bf16)

    out = pl.pallas_call(
        kernel,
        out_shape=jax.ShapeDtypeStruct((Bp, n_padded), jnp.float32),
        grid_spec=pltpu.PrefetchScalarGridSpec(
            num_scalar_prefetch=0,
            grid=grid,
            in_specs=[
                pl.BlockSpec((tm, dim), lambda i: (i, 0)),            # x tile (streamed)
                pl.BlockSpec((dim, k), lambda i: (0, 0)),             # W1^T (resident)
                pl.BlockSpec((k, k), lambda i: (0, 0)),               # W2^T (resident)
                pl.BlockSpec((k, n_padded), lambda i: (0, 0)),        # W3^T padded (resident)
            ],
            out_specs=pl.BlockSpec((tm, n_padded), lambda i: (i, 0)),  # lane-dense output
        ),
        compiler_params=pltpu.CompilerParams(
            dimension_semantics=semantics,
            vmem_limit_bytes=32 << 20,
        ),
    )(x, w1t, w2t, w3t_padded)

    return out[:B, :num_classes]


def _init_params(key, dim, k=1024, num_classes=10):
    """Deterministic init matching the module's shapes.

    first.weight ~ Normal(0, 0.005); fc Linears use the default 1/sqrt(fan_in) bound.
    """
    k1, k2, k3 = jax.random.split(key, 3)
    w1 = 0.005 * jax.random.normal(k1, (k, dim), dtype=jnp.float32)
    b = 1.0 / jnp.sqrt(k)
    w2 = jax.random.uniform(k2, (k, k), minval=-b, maxval=b, dtype=jnp.float32)
    w3 = jax.random.uniform(k3, (num_classes, k), minval=-b, maxval=b,
                            dtype=jnp.float32)
    return w1, w2, w3


if __name__ == "__main__":
    B, dim, k, num_classes = 16, 32, 1024, 10

    key = jax.random.PRNGKey(0)
    kx, kp = jax.random.split(key)
    x = jax.random.normal(kx, (B, dim), dtype=jnp.float32)
    w1, w2, w3 = _init_params(kp, dim, k=k, num_classes=num_classes)

    # One-time param prep (transpose + bf16 cast + lane padding), outside hot path.
    w1t, w2t, w3t_padded, nc = prepare_params(w1, w2, w3)

    out = net_forward(x, w1t, w2t, w3t_padded, nc)
    out = jax.block_until_ready(out)
    assert out.shape == (B, num_classes)

    # Reference with the same bf16-input / f32-accumulate math (plain JAX).
    # (ReLU commutes with the bf16 rounding cast, so this matches both the
    # f32-ReLU and bf16-ReLU kernel paths.)
    cdt = w1t.dtype
    ref = jnp.maximum(jnp.dot(x.astype(cdt), w1t, preferred_element_type=jnp.float32), 0.0)
    ref = jnp.maximum(jnp.dot(ref.astype(cdt), w2t, preferred_element_type=jnp.float32), 0.0)
    ref = jnp.dot(ref.astype(cdt), w3t_padded,
                  preferred_element_type=jnp.float32)[:, :num_classes]
    assert jnp.allclose(out, ref, atol=1e-2, rtol=1e-2), "mismatch vs bf16/f32 reference"

    # Sanity vs. pure-f32 math (looser tolerance for the bf16 weight cast).
    ref32 = jnp.maximum(x @ w1.T, 0.0)
    ref32 = jnp.maximum(ref32 @ w2.T, 0.0)
    ref32 = ref32 @ w3.T
    assert jnp.allclose(out, ref32, atol=5e-2, rtol=5e-2), "mismatch vs f32 reference"

    print("KERNEL_OK")
</pallas_src>

<mosaic_0001>
module attributes {stable_mosaic.version = 11 : i64} {
  func.func @_mlp_kernel(%arg0: i32, %arg1: memref<16x32xf32, #tpu.memory_space<vmem>>, %arg2: memref<32x1024xbf16, #tpu.memory_space<vmem>>, %arg3: memref<1024x1024xbf16, #tpu.memory_space<vmem>>, %arg4: memref<1024x128xbf16, #tpu.memory_space<vmem>>, %arg5: memref<16x128xf32, #tpu.memory_space<vmem>>) attributes {dimension_semantics = [#tpu.dimension_semantics<arbitrary>], iteration_bounds = array<i64: 1>, scalar_prefetch = 0 : i64, scratch_operands = 0 : i64, tpu.core_type = #tpu.core_type<tc>, window_params = [{transform_indices = @transform_0, window_bounds = array<i64: 16, 32>}, {pipeline_mode = #tpu.pipeline_mode<synchronous>, transform_indices = @transform_1, window_bounds = array<i64: 32, 1024>}, {pipeline_mode = #tpu.pipeline_mode<synchronous>, transform_indices = @transform_2, window_bounds = array<i64: 1024, 1024>}, {pipeline_mode = #tpu.pipeline_mode<synchronous>, transform_indices = @transform_3, window_bounds = array<i64: 1024, 128>}, {transform_indices = @transform_4, window_bounds = array<i64: 16, 128>}]} {
    %c0 = arith.constant 0 : index
    %c0_0 = arith.constant 0 : index
    %0 = vector.load %arg1[%c0, %c0_0] : memref<16x32xf32, #tpu.memory_space<vmem>>, vector<16x32xf32>
    %1 = arith.truncf %0 : vector<16x32xf32> to vector<16x32xbf16>
    %c0_1 = arith.constant 0 : index
    %c0_2 = arith.constant 0 : index
    %2 = vector.load %arg2[%c0_1, %c0_2] : memref<32x1024xbf16, #tpu.memory_space<vmem>>, vector<32x1024xbf16>
    %cst = arith.constant dense<0.000000e+00> : vector<16x1024xf32>
    %3 = tpu.matmul %1, %2, %cst {dimension_numbers = #tpu.dot_dimension_numbers<[1], [0], [0], [1], [0, 0, 1, 1], [], []>} : vector<16x32xbf16>, vector<32x1024xbf16>, vector<16x1024xf32> -> vector<16x1024xf32>
    %cst_3 = arith.constant 0.000000e+00 : f32
    %4 = vector.broadcast %cst_3 : f32 to vector<16x1024xf32>
    %5 = arith.maximumf %3, %4 : vector<16x1024xf32>
    %6 = arith.truncf %5 : vector<16x1024xf32> to vector<16x1024xbf16>
    %c0_4 = arith.constant 0 : index
    %c0_5 = arith.constant 0 : index
    %7 = vector.load %arg3[%c0_4, %c0_5] : memref<1024x1024xbf16, #tpu.memory_space<vmem>>, vector<1024x1024xbf16>
    %cst_6 = arith.constant dense<0.000000e+00> : vector<16x1024xf32>
    %8 = tpu.matmul %6, %7, %cst_6 {dimension_numbers = #tpu.dot_dimension_numbers<[1], [0], [0], [1], [0, 0, 1, 1], [], []>} : vector<16x1024xbf16>, vector<1024x1024xbf16>, vector<16x1024xf32> -> vector<16x1024xf32>
    %cst_7 = arith.constant 0.000000e+00 : f32
    %9 = vector.broadcast %cst_7 : f32 to vector<16x1024xf32>
    %10 = arith.maximumf %8, %9 : vector<16x1024xf32>
    %11 = arith.truncf %10 : vector<16x1024xf32> to vector<16x1024xbf16>
    %c0_8 = arith.constant 0 : index
    %c0_9 = arith.constant 0 : index
    %12 = vector.load %arg4[%c0_8, %c0_9] : memref<1024x128xbf16, #tpu.memory_space<vmem>>, vector<1024x128xbf16>
    %cst_10 = arith.constant dense<0.000000e+00> : vector<16x128xf32>
    %13 = tpu.matmul %11, %12, %cst_10 {dimension_numbers = #tpu.dot_dimension_numbers<[1], [0], [0], [1], [0, 0, 1, 1], [], []>} : vector<16x1024xbf16>, vector<1024x128xbf16>, vector<16x128xf32> -> vector<16x128xf32>
    %c0_11 = arith.constant 0 : index
    %c0_12 = arith.constant 0 : index
    %14 = vector.load %arg5[%c0_11, %c0_12] : memref<16x128xf32, #tpu.memory_space<vmem>>, vector<16x128xf32>
    tpu.vector_store %arg5[%c0_11, %c0_12], %13 {strides = array<i32>} : memref<16x128xf32, #tpu.memory_space<vmem>>, vector<16x128xf32>,
    return
  }
  func.func @transform_0(%arg0: i32) -> (i32, i32) {
    %c0_i32 = arith.constant 0 : i32
    %c0_i32_0 = arith.constant 0 : i32
    return %arg0, %c0_i32 : i32, i32
  }
  func.func @transform_1(%arg0: i32) -> (i32, i32) {
    %c0_i32 = arith.constant 0 : i32
    %c0_i32_0 = arith.constant 0 : i32
    %c0_i32_1 = arith.constant 0 : i32
    return %c0_i32, %c0_i32_0 : i32, i32
  }
  func.func @transform_2(%arg0: i32) -> (i32, i32) {
    %c0_i32 = arith.constant 0 : i32
    %c0_i32_0 = arith.constant 0 : i32
    %c0_i32_1 = arith.constant 0 : i32
    return %c0_i32, %c0_i32_0 : i32, i32
  }
  func.func @transform_3(%arg0: i32) -> (i32, i32) {
    %c0_i32 = arith.constant 0 : i32
    %c0_i32_0 = arith.constant 0 : i32
    %c0_i32_1 = arith.constant 0 : i32
    return %c0_i32, %c0_i32_0 : i32, i32
  }
  func.func @transform_4(%arg0: i32) -> (i32, i32) {
    %c0_i32 = arith.constant 0 : i32
    %c0_i32_0 = arith.constant 0 : i32
    return %arg0, %c0_i32 : i32, i32
  }
}

</mosaic_0001>

<llo_original>
// kernel: tpu_custom_call.1
$region0: #{tpu_custom_call.1}
  #allocation0 [shape = 'u32[]', space=smem, size = 0x4, offset = 0x4, fixed_abs, tag = 'smem constant byte address 0x4 - core index']
  #allocation1 [shape = 'u32[144,128]{1,0:T(1,128)}', space=vmem, size = 0x12000, scoped, tag = 'internal scratch']
  %s0 = inlined_call_operand.hbm [shape: f32[16,32], index: 0, kind: input, shape index: {}]
  %s1 = inlined_call_operand.hbm [shape: bf16[32,1024], index: 1, kind: input, shape index: {}]
  %s2 = inlined_call_operand.hbm [shape: bf16[1024,1024], index: 2, kind: input, shape index: {}]
  %s3 = inlined_call_operand.hbm [shape: bf16[1024,128], index: 3, kind: input, shape index: {}]
  %s4 = inlined_call_operand.hbm [shape: f32[16,128], index: 4, kind: output, shape index: {}]
  %s5 = sld [smem:[#allocation0]]
  $region42: #{tpu_custom_call.1} parent=0
    _
  %s7 = ssub.s32 1, %s5
  %s8 = scalar_select 0, %s7, %s5
  $region1: #{tpu_custom_call.1} parent=0
    #allocation2 [shape = 'u8[8192]{0}', space=vmem, size = 0x2000, scoped, tag = 'input window, operand 0, single buffered']
    #allocation3 [shape = 's32[1]{0}', space=sflag, size = 0x4, scoped, tag = 'scoped memory for tpu_custom_call.1']
    #allocation4 [shape = 's32[1]{0}', space=sflag, size = 0x4, scoped, tag = 'scoped memory for tpu_custom_call.1']
    #allocation5 [shape = 'u8[65536]{0}', space=vmem, size = 0x10000, scoped, tag = 'input window, operand 1, single buffered']
    #allocation6 [shape = 's32[1]{0}', space=sflag, size = 0x4, scoped, tag = 'scoped memory for tpu_custom_call.1']
    #allocation7 [shape = 'u8[2097152]{0}', space=vmem, size = 0x200000, scoped, tag = 'input window, operand 2, single buffered']
    #allocation8 [shape = 'u8[262144]{0}', space=vmem, size = 0x40000, scoped, tag = 'input window, operand 3, single buffered']
    #allocation9 [shape = 's32[1]{0}', space=sflag, size = 0x4, scoped, tag = 'scoped memory for tpu_custom_call.1']
    #allocation10 [shape = 'u8[8192]{0}', space=vmem, size = 0x2000, scoped, tag = 'output window, operand 0, single buffered']
    %9 = vsyncpa [#allocation3], 0
    %10 = vsyncpa [#allocation6], 0
    %11 = vsyncpa [#allocation9], 0
    %12 = vsyncpa [#allocation4], 0
    // Predicated region
    $region2: #{tpu_custom_call.1} parent=1 // pred_check
      _
    $region3: #{tpu_custom_call.1} parent=1 // pred_check_branch
      %14 = sbr.rel (0) target = $region5
    $region4: #{tpu_custom_call.1} parent=1 // pred_region
      %s16 = ssub.s32 256, 256
      %17 = vsyncadd [#allocation3], %s16
      %s18 = sshll.u32 [#allocation2], 4
      %s19 = int_to_ptr.vmem [resolvable:$true] %s18
      %24 = dma.hbm_to_vmem [thread:$0]  %s0, 256, %s19, [#allocation3], 128, 128, 8
    $region5: #{tpu_custom_call.1} parent=1 // pred_fallthru
      _
    // Predicated region
    $region6: #{tpu_custom_call.1} parent=1 // pred_check
      _
    $region7: #{tpu_custom_call.1} parent=1 // pred_check_branch
      %26 = sbr.rel (0) target = $region9
    $region8: #{tpu_custom_call.1} parent=1 // pred_region
      %s28 = ssub.s32 2048, 2048
      %29 = vsyncadd [#allocation6], %s28
      %s30 = sshll.u32 [#allocation5], 4
      %s31 = int_to_ptr.vmem [resolvable:$true] %s30
      %36 = dma.hbm_to_vmem [thread:$0]  %s1, 2048, %s31, [#allocation6], 512, 512, 32
    $region9: #{tpu_custom_call.1} parent=1 // pred_fallthru
      _
    // Predicated region
    $region10: #{tpu_custom_call.1} parent=1 // pred_check
      _
    $region11: #{tpu_custom_call.1} parent=1 // pred_check_branch
      %38 = sbr.rel (0) target = $region13
    $region12: #{tpu_custom_call.1} parent=1 // pred_region
      %s40 = ssub.s32 65536, 65536
      %41 = vsyncadd [#allocation6], %s40
      %s42 = sshll.u32 [#allocation7], 4
      %s43 = int_to_ptr.vmem [resolvable:$true] %s42
      %48 = dma.hbm_to_vmem [thread:$0]  %s2, 65536, %s43, [#allocation6], 512, 512, 32
    $region13: #{tpu_custom_call.1} parent=1 // pred_fallthru
      _
    // Predicated region
    $region14: #{tpu_custom_call.1} parent=1 // pred_check
      _
    $region15: #{tpu_custom_call.1} parent=1 // pred_check_branch
      %50 = sbr.rel (0) target = $region17
    $region16: #{tpu_custom_call.1} parent=1 // pred_region
      %s52 = ssub.s32 8192, 8192
      %53 = vsyncadd [#allocation9], %s52
      %s54 = sshll.u32 [#allocation8], 4
      %s55 = int_to_ptr.vmem [resolvable:$true] %s54
      %60 = dma.hbm_to_vmem [thread:$0]  %s3, 8192, %s55, [#allocation9], 64, 64, 4
    $region17: #{tpu_custom_call.1} parent=1 // pred_fallthru
      _
    // Predicated region
    $region18: #{tpu_custom_call.1} parent=1 // pred_check
      _
    $region19: #{tpu_custom_call.1} parent=1 // pred_check_branch
      %62 = sbr.rel (0) target = $region21
    $region20: #{tpu_custom_call.1} parent=1 // pred_region
      %63 = dma.done [#allocation3], 256
    $region21: #{tpu_custom_call.1} parent=1 // pred_fallthru
      _
    // Predicated region
    $region22: #{tpu_custom_call.1} parent=1 // pred_check
      _
    $region23: #{tpu_custom_call.1} parent=1 // pred_check_branch
      %65 = sbr.rel (0) target = $region25
    $region24: #{tpu_custom_call.1} parent=1 // pred_region
      %66 = dma.done [#allocation6], 2048
    $region25: #{tpu_custom_call.1} parent=1 // pred_fallthru
      _
    // Predicated region
    $region26: #{tpu_custom_call.1} parent=1 // pred_check
      _
    $region27: #{tpu_custom_call.1} parent=1 // pred_check_branch
      %68 = sbr.rel (0) target = $region29
    $region28: #{tpu_custom_call.1} parent=1 // pred_region
      %69 = dma.done [#allocation6], 65536
    $region29: #{tpu_custom_call.1} parent=1 // pred_fallthru
      _
    // Predicated region
    $region30: #{tpu_custom_call.1} parent=1 // pred_check
      _
    $region31: #{tpu_custom_call.1} parent=1 // pred_check_branch
      %71 = sbr.rel (0) target = $region33
    $region32: #{tpu_custom_call.1} parent=1 // pred_region
      %72 = dma.done [#allocation9], 8192
    $region33: #{tpu_custom_call.1} parent=1 // pred_fallthru
      _
    %v74 = vld [vmem:[#allocation2] sm:$0xff]
    %v75 = vld [vmem:[#allocation2 + $0x8] sm:$0xff]
    %v76 = vpack.c.bf16 %v75, %v74
    %v77 = vld [vmem:[#allocation5] sm:$0xff]
    %v78 = vld [vmem:[#allocation5 + $0x8] sm:$0xff]
    %v79 = vld [vmem:[#allocation5 + $0x10] sm:$0xff]
    %v80 = vld [vmem:[#allocation5 + $0x18] sm:$0xff]
    %v81 = vld [vmem:[#allocation5 + $0x20] sm:$0xff]
    %v82 = vld [vmem:[#allocation5 + $0x28] sm:$0xff]
    %v83 = vld [vmem:[#allocation5 + $0x30] sm:$0xff]
    %v84 = vld [vmem:[#allocation5 + $0x38] sm:$0xff]
    %v85 = vld [vmem:[#allocation5 + $0x40] sm:$0xff]
    %v86 = vld [vmem:[#allocation5 + $0x48] sm:$0xff]
    %v87 = vld [vmem:[#allocation5 + $0x50] sm:$0xff]
    %v88 = vld [vmem:[#allocation5 + $0x58] sm:$0xff]
    %v89 = vld [vmem:[#allocation5 + $0x60] sm:$0xff]
    %v90 = vld [vmem:[#allocation5 + $0x68] sm:$0xff]
    %v91 = vld [vmem:[#allocation5 + $0x70] sm:$0xff]
    %v92 = vld [vmem:[#allocation5 + $0x78] sm:$0xff]
    %v109 = vunpack.c.l.b16 %v77
    %v110 = vunpack.c.h.b16 %v77
    %v111 = vunpack.c.l.b16 %v78
    %v112 = vunpack.c.h.b16 %v78
    %v113 = vunpack.c.l.b16 %v79
    %v114 = vunpack.c.h.b16 %v79
    %v115 = vunpack.c.l.b16 %v80
    %v116 = vunpack.c.h.b16 %v80
    %v117 = vunpack.c.l.b16 %v81
    %v118 = vunpack.c.h.b16 %v81
    %v119 = vunpack.c.l.b16 %v82
    %v120 = vunpack.c.h.b16 %v82
    %v121 = vunpack.c.l.b16 %v83
    %v122 = vunpack.c.h.b16 %v83
    %v123 = vunpack.c.l.b16 %v84
    %v124 = vunpack.c.h.b16 %v84
    %v125 = vunpack.c.l.b16 %v85
    %v126 = vunpack.c.h.b16 %v85
    %v127 = vunpack.c.l.b16 %v86
    %v128 = vunpack.c.h.b16 %v86
    %v129 = vunpack.c.l.b16 %v87
    %v130 = vunpack.c.h.b16 %v87
    %v131 = vunpack.c.l.b16 %v88
    %v132 = vunpack.c.h.b16 %v88
    %v133 = vunpack.c.l.b16 %v89
    %v134 = vunpack.c.h.b16 %v89
    %v135 = vunpack.c.l.b16 %v90
    %v136 = vunpack.c.h.b16 %v90
    %v137 = vunpack.c.l.b16 %v91
    %v138 = vunpack.c.h.b16 %v91
    %v139 = vunpack.c.l.b16 %v92
    %v140 = vunpack.c.h.b16 %v92
    %v141 = vpack.c.b16 %v117, %v109
    %v142 = vpack.c.b16 %v118, %v110
    %v143 = vpack.c.b16 %v119, %v111
    %v144 = vpack.c.b16 %v120, %v112
    %v145 = vpack.c.b16 %v121, %v113
    %v146 = vpack.c.b16 %v122, %v114
    %v147 = vpack.c.b16 %v123, %v115
    %v148 = vpack.c.b16 %v124, %v116
    %v149 = vpack.c.b16 %v133, %v125
    %v150 = vpack.c.b16 %v134, %v126
    %v151 = vpack.c.b16 %v135, %v127
    %v152 = vpack.c.b16 %v136, %v128
    %v153 = vpack.c.b16 %v137, %v129
    %v154 = vpack.c.b16 %v138, %v130
    %v155 = vpack.c.b16 %v139, %v131
    %v156 = vpack.c.b16 %v140, %v132
    %vm173 = vcmask 261120
    %v175 = vsel %vm173, %v76, 0
    %177 = vmatprep.subr.bf16.mxu0 %v142
    %178 = vmatpush1.bf16.msra.mxu0 %v141
    %179 = vmatprep.subr.bf16.mxu0 %v150
    %180 = vmatpush1.bf16.msra.mxu0 %v149
    %181 = vmatprep.subr.bf16.mxu0 0
    %182 = vmatpush1.bf16.msra.mxu0 0
    %183 = vmatprep.subr.bf16.mxu0 0
    %184 = vmatpush1.bf16.msra.mxu0 0
    %185 = vmatprep.subr.bf16.mxu0 0
    %186 = vmatpush1.bf16.msra.mxu0 0
    %187 = vmatprep.subr.bf16.mxu0 0
    %188 = vmatpush1.bf16.msra.mxu0 0
    %189 = vmatprep.subr.bf16.mxu0 0
    %190 = vmatpush1.bf16.msra.mxu0 0
    %191 = vmatprep.subr.bf16.mxu0 0
    %192 = vmatpush1.bf16.msra.mxu0 0
    %193 = vmatprep.subr.bf16.mxu0 0
    %194 = vmatpush1.bf16.msra.mxu0 0
    %195 = vmatprep.subr.bf16.mxu0 0
    %196 = vmatpush1.bf16.msra.mxu0 0
    %197 = vmatprep.subr.bf16.mxu0 0
    %198 = vmatpush1.bf16.msra.mxu0 0
    %199 = vmatprep.subr.bf16.mxu0 0
    %200 = vmatpush1.bf16.msra.mxu0 0
    %201 = vmatprep.subr.bf16.mxu0 0
    %202 = vmatpush1.bf16.msra.mxu0 0
    %203 = vmatprep.subr.bf16.mxu0 0
    %204 = vmatpush1.bf16.msra.mxu0 0
    %205 = vmatprep.subr.bf16.mxu0 0
    %206 = vmatpush1.bf16.msra.mxu0 0
    %207 = vmatprep.subr.bf16.mxu0 0
    %208 = vmatpush1.bf16.msra.mxu0 0
    %209 = vmatprep.mubr.bf16.mxu0 0
    %210 = vmatmul.mubr.bf16.gmra.mrb[0].mxu0 %v175
    %v211 = vpop.f32.mrb[0].mxu0
    %v212 = vadd.f32 0.0, %v211
    %v213 = vpop.f32.mrb[0].mxu0
    %v214 = vadd.f32 0.0, %v213
    %v215 = vpop.f32.mrb[0].mxu0
    %v216 = vadd.f32 0.0, %v215
    %v217 = vpop.f32.mrb[0].mxu0
    %v218 = vadd.f32 0.0, %v217
    %219 = vdwg.mxu0
    %220 = vmatprep.subr.bf16.mxu0 %v144
    %221 = vmatpush1.bf16.msra.mxu0 %v143
    %222 = vmatprep.subr.bf16.mxu0 %v152
    %223 = vmatpush1.bf16.msra.mxu0 %v151
    %224 = vmatprep.subr.bf16.mxu0 0
    %225 = vmatpush1.bf16.msra.mxu0 0
    %226 = vmatprep.subr.bf16.mxu0 0
    %227 = vmatpush1.bf16.msra.mxu0 0
    %228 = vmatprep.subr.bf16.mxu0 0
    %229 = vmatpush1.bf16.msra.mxu0 0
    %230 = vmatprep.subr.bf16.mxu0 0
    %231 = vmatpush1.bf16.msra.mxu0 0
    %232 = vmatprep.subr.bf16.mxu0 0
    %233 = vmatpush1.bf16.msra.mxu0 0
    %234 = vmatprep.subr.bf16.mxu0 0
    %235 = vmatpush1.bf16.msra.mxu0 0
    %236 = vmatprep.subr.bf16.mxu0 0
    %237 = vmatpush1.bf16.msra.mxu0 0
    %238 = vmatprep.subr.bf16.mxu0 0
    %239 = vmatpush1.bf16.msra.mxu0 0
    %240 = vmatprep.subr.bf16.mxu0 0
    %241 = vmatpush1.bf16.msra.mxu0 0
    %242 = vmatprep.subr.bf16.mxu0 0
    %243 = vmatpush1.bf16.msra.mxu0 0
    %244 = vmatprep.subr.bf16.mxu0 0
    %245 = vmatpush1.bf16.msra.mxu0 0
    %246 = vmatprep.subr.bf16.mxu0 0
    %247 = vmatpush1.bf16.msra.mxu0 0
    %248 = vmatprep.subr.bf16.mxu0 0
    %249 = vmatpush1.bf16.msra.mxu0 0
    %250 = vmatprep.subr.bf16.mxu0 0
    %251 = vmatpush1.bf16.msra.mxu0 0
    %252 = vmatprep.mubr.bf16.mxu0 0
    %253 = vmatmul.mubr.bf16.gmra.mrb[0].mxu0 %v175
    %v254 = vpop.f32.mrb[0].mxu0
    %v255 = vadd.f32 0.0, %v254
    %v256 = vpop.f32.mrb[0].mxu0
    %v257 = vadd.f32 0.0, %v256
    %v258 = vpop.f32.mrb[0].mxu0
    %v259 = vadd.f32 0.0, %v258
    %v260 = vpop.f32.mrb[0].mxu0
    %v261 = vadd.f32 0.0, %v260
    %262 = vdwg.mxu0
    %263 = vmatprep.subr.bf16.mxu0 %v146
    %264 = vmatpush1.bf16.msra.mxu0 %v145
    %265 = vmatprep.subr.bf16.mxu0 %v154
    %266 = vmatpush1.bf16.msra.mxu0 %v153
    %267 = vmatprep.subr.bf16.mxu0 0
    %268 = vmatpush1.bf16.msra.mxu0 0
    %269 = vmatprep.subr.bf16.mxu0 0
    %270 = vmatpush1.bf16.msra.mxu0 0
    %271 = vmatprep.subr.bf16.mxu0 0
    %272 = vmatpush1.bf16.msra.mxu0 0
    %273 = vmatprep.subr.bf16.mxu0 0
    %274 = vmatpush1.bf16.msra.mxu0 0
    %275 = vmatprep.subr.bf16.mxu0 0
    %276 = vmatpush1.bf16.msra.mxu0 0
    %277 = vmatprep.subr.bf16.mxu0 0
    %278 = vmatpush1.bf16.msra.mxu0 0
    %279 = vmatprep.subr.bf16.mxu0 0
    %280 = vmatpush1.bf16.msra.mxu0 0
    %281 = vmatprep.subr.bf16.mxu0 0
    %282 = vmatpush1.bf16.msra.mxu0 0
    %283 = vmatprep.subr.bf16.mxu0 0
    %284 = vmatpush1.bf16.msra.mxu0 0
    %285 = vmatprep.subr.bf16.mxu0 0
    %286 = vmatpush1.bf16.msra.mxu0 0
    %287 = vmatprep.subr.bf16.mxu0 0
    %288 = vmatpush1.bf16.msra.mxu0 0
    %289 = vmatprep.subr.bf16.mxu0 0
    %290 = vmatpush1.bf16.msra.mxu0 0
    %291 = vmatprep.subr.bf16.mxu0 0
    %292 = vmatpush1.bf16.msra.mxu0 0
    %293 = vmatprep.subr.bf16.mxu0 0
    %294 = vmatpush1.bf16.msra.mxu0 0
    %295 = vmatprep.mubr.bf16.mxu0 0
    %296 = vmatmul.mubr.bf16.gmra.mrb[0].mxu0 %v175
    %v297 = vpop.f32.mrb[0].mxu0
    %v298 = vadd.f32 0.0, %v297
    %v299 = vpop.f32.mrb[0].mxu0
    %v300 = vadd.f32 0.0, %v299
    %v301 = vpop.f32.mrb[0].mxu0
    %v302 = vadd.f32 0.0, %v301
    %v303 = vpop.f32.mrb[0].mxu0
    %v304 = vadd.f32 0.0, %v303
    %305 = vdwg.mxu0
    %306 = vmatprep.subr.bf16.mxu0 %v148
    %307 = vmatpush1.bf16.msra.mxu0 %v147
    %308 = vmatprep.subr.bf16.mxu0 %v156
    %309 = vmatpush1.bf16.msra.mxu0 %v155
    %310 = vmatprep.subr.bf16.mxu0 0
    %311 = vmatpush1.bf16.msra.mxu0 0
    %312 = vmatprep.subr.bf16.mxu0 0
    %313 = vmatpush1.bf16.msra.mxu0 0
    %314 = vmatprep.subr.bf16.mxu0 0
    %315 = vmatpush1.bf16.msra.mxu0 0
    %316 = vmatprep.subr.bf16.mxu0 0
    %317 = vmatpush1.bf16.msra.mxu0 0
    %318 = vmatprep.subr.bf16.mxu0 0
    %319 = vmatpush1.bf16.msra.mxu0 0
    %320 = vmatprep.subr.bf16.mxu0 0
    %321 = vmatpush1.bf16.msra.mxu0 0
    %322 = vmatprep.subr.bf16.mxu0 0
    %323 = vmatpush1.bf16.msra.mxu0 0
    %324 = vmatprep.subr.bf16.mxu0 0
    %325 = vmatpush1.bf16.msra.mxu0 0
    %326 = vmatprep.subr.bf16.mxu0 0
    %327 = vmatpush1.bf16.msra.mxu0 0
    %328 = vmatprep.subr.bf16.mxu0 0
    %329 = vmatpush1.bf16.msra.mxu0 0
    %330 = vmatprep.subr.bf16.mxu0 0
    %331 = vmatpush1.bf16.msra.mxu0 0
    %332 = vmatprep.subr.bf16.mxu0 0
    %333 = vmatpush1.bf16.msra.mxu0 0
    %334 = vmatprep.subr.bf16.mxu0 0
    %335 = vmatpush1.bf16.msra.mxu0 0
    %336 = vmatprep.subr.bf16.mxu0 0
    %337 = vmatpush1.bf16.msra.mxu0 0
    %338 = vmatprep.mubr.bf16.mxu0 0
    %339 = vmatmul.mubr.bf16.gmra.mrb[0].mxu0 %v175
    %v340 = vpop.f32.mrb[0].mxu0
    %v341 = vadd.f32 0.0, %v340
    %v342 = vpop.f32.mrb[0].mxu0
    %v343 = vadd.f32 0.0, %v342
    %v344 = vpop.f32.mrb[0].mxu0
    %v345 = vadd.f32 0.0, %v344
    %v346 = vpop.f32.mrb[0].mxu0
    %v347 = vadd.f32 0.0, %v346
    %348 = vdwg.mxu0
    %v349 = vmax.f32 %v212, 0.0
    %v350 = vmax.f32 %v214, 0.0
    %v351 = vmax.f32 %v255, 0.0
    %v352 = vmax.f32 %v257, 0.0
    %v353 = vmax.f32 %v298, 0.0
    %v354 = vmax.f32 %v300, 0.0
    %v355 = vmax.f32 %v341, 0.0
    %v356 = vmax.f32 %v343, 0.0
    %v357 = vmax.f32 %v216, 0.0
    %v358 = vmax.f32 %v218, 0.0
    %v359 = vmax.f32 %v259, 0.0
    %v360 = vmax.f32 %v261, 0.0
    %v361 = vmax.f32 %v302, 0.0
    %v362 = vmax.f32 %v304, 0.0
    %v363 = vmax.f32 %v345, 0.0
    %v364 = vmax.f32 %v347, 0.0
    %v365 = vpack.c.bf16 %v357, %v349
    %v366 = vpack.c.bf16 %v358, %v350
    %v367 = vpack.c.bf16 %v359, %v351
    %v368 = vpack.c.bf16 %v360, %v352
    %v369 = vpack.c.bf16 %v361, %v353
    %v370 = vpack.c.bf16 %v362, %v354
    %v371 = vpack.c.bf16 %v363, %v355
    %v372 = vpack.c.bf16 %v364, %v356
    %v373 = vld [vmem:[#allocation7] sm:$0xff]
    %v374 = vld [vmem:[#allocation7 + $0x8] sm:$0xff]
    %v375 = vld [vmem:[#allocation7 + $0x10] sm:$0xff]
    %v376 = vld [vmem:[#allocation7 + $0x18] sm:$0xff]
    %v377 = vld [vmem:[#allocation7 + $0x20] sm:$0xff]
    %v378 = vld [vmem:[#allocation7 + $0x28] sm:$0xff]
    %v379 = vld [vmem:[#allocation7 + $0x30] sm:$0xff]
    %v380 = vld [vmem:[#allocation7 + $0x38] sm:$0xff]
    %v381 = vld [vmem:[#allocation7 + $0x40] sm:$0xff]
    %v382 = vld [vmem:[#allocation7 + $0x48] sm:$0xff]
    %v383 = vld [vmem:[#allocation7 + $0x50] sm:$0xff]
    %v384 = vld [vmem:[#allocation7 + $0x58] sm:$0xff]
    %v385 = vld [vmem:[#allocation7 + $0x60] sm:$0xff]
    %v386 = vld [vmem:[#allocation7 + $0x68] sm:$0xff]
    %v387 = vld [vmem:[#allocation7 + $0x70] sm:$0xff]
    %v388 = vld [vmem:[#allocation7 + $0x78] sm:$0xff]
    %v389 = vld [vmem:[#allocation7 + $0x80] sm:$0xff]
    %v390 = vld [vmem:[#allocation7 + $0x88] sm:$0xff]
    %v391 = vld [vmem:[#allocation7 + $0x90] sm:$0xff]
    %v392 = vld [vmem:[#allocation7 + $0x98] sm:$0xff]
    %v393 = vld [vmem:[#allocation7 + $0xa0] sm:$0xff]
    %v394 = vld [vmem:[#allocation7 + $0xa8] sm:$0xff]
    %v395 = vld [vmem:[#allocation7 + $0xb0] sm:$0xff]
    %v396 = vld [vmem:[#allocation7 + $0xb8] sm:$0xff]
    %v397 = vld [vmem:[#allocation7 + $0xc0] sm:$0xff]
    %v398 = vld [vmem:[#allocation7 + $0xc8] sm:$0xff]
    %v399 = vld [vmem:[#allocation7 + $0xd0] sm:$0xff]
    %v400 = vld [vmem:[#allocation7 + $0xd8] sm:$0xff]
    %v401 = vld [vmem:[#allocation7 + $0xe0] sm:$0xff]
    %v402 = vld [vmem:[#allocation7 + $0xe8] sm:$0xff]
    %v403 = vld [vmem:[#allocation7 + $0xf0] sm:$0xff]
    %v404 = vld [vmem:[#allocation7 + $0xf8] sm:$0xff]
    %v405 = vld [vmem:[#allocation7 + $0x100] sm:$0xff]
    %v406 = vld [vmem:[#allocation7 + $0x108] sm:$0xff]
    %v407 = vld [vmem:[#allocation7 + $0x110] sm:$0xff]
    %v408 = vld [vmem:[#allocation7 + $0x118] sm:$0xff]
    %v409 = vld [vmem:[#allocation7 + $0x120] sm:$0xff]
    %v410 = vld [vmem:[#allocation7 + $0x128] sm:$0xff]
    %v411 = vld [vmem:[#allocation7 + $0x130] sm:$0xff]
    %v412 = vld [vmem:[#allocation7 + $0x138] sm:$0xff]
    %v413 = vld [vmem:[#allocation7 + $0x140] sm:$0xff]
    %v414 = vld [vmem:[#allocation7 + $0x148] sm:$0xff]
    %v415 = vld [vmem:[#allocation7 + $0x150] sm:$0xff]
    %v416 = vld [vmem:[#allocation7 + $0x158] sm:$0xff]
    %v417 = vld [vmem:[#allocation7 + $0x160] sm:$0xff]
    %v418 = vld [vmem:[#allocation7 + $0x168] sm:$0xff]
    %v419 = vld [vmem:[#allocation7 + $0x170] sm:$0xff]
    %v420 = vld [vmem:[#allocation7 + $0x178] sm:$0xff]
    %v421 = vld [vmem:[#allocation7 + $0x180] sm:$0xff]
    %v422 = vld [vmem:[#allocation7 + $0x188] sm:$0xff]
    %v423 = vld [vmem:[#allocation7 + $0x190] sm:$0xff]
    %v424 = vld [vmem:[#allocation7 + $0x198] sm:$0xff]
    %v425 = vld [vmem:[#allocation7 + $0x1a0] sm:$0xff]
    %v426 = vld [vmem:[#allocation7 + $0x1a8] sm:$0xff]
    %v427 = vld [vmem:[#allocation7 + $0x1b0] sm:$0xff]
    %v428 = vld [vmem:[#allocation7 + $0x1b8] sm:$0xff]
    %v429 = vld [vmem:[#allocation7 + $0x1c0] sm:$0xff]
    %v430 = vld [vmem:[#allocation7 + $0x1c8] sm:$0xff]
    %v431 = vld [vmem:[#allocation7 + $0x1d0] sm:$0xff]
    %v432 = vld [vmem:[#allocation7 + $0x1d8] sm:$0xff]
    %v433 = vld [vmem:[#allocation7 + $0x1e0] sm:$0xff]
    %v434 = vld [vmem:[#allocation7 + $0x1e8] sm:$0xff]
    %v435 = vld [vmem:[#allocation7 + $0x1f0] sm:$0xff]
    %v436 = vld [vmem:[#allocation7 + $0x1f8] sm:$0xff]
    %v437 = vld [vmem:[#allocation7 + $0x200] sm:$0xff]
    %v438 = vld [vmem:[#allocation7 + $0x208] sm:$0xff]
    %v439 = vld [vmem:[#allocation7 + $0x210] sm:$0xff]
    %v440 = vld [vmem:[#allocation7 + $0x218] sm:$0xff]
    %v441 = vld [vmem:[#allocation7 + $0x220] sm:$0xff]
    %v442 = vld [vmem:[#allocation7 + $0x228] sm:$0xff]
    %v443 = vld [vmem:[#allocation7 + $0x230] sm:$0xff]
    %v444 = vld [vmem:[#allocation7 + $0x238] sm:$0xff]
    %v445 = vld [vmem:[#allocation7 + $0x240] sm:$0xff]
    %v446 = vld [vmem:[#allocation7 + $0x248] sm:$0xff]
    %v447 = vld [vmem:[#allocation7 + $0x250] sm:$0xff]
    %v448 = vld [vmem:[#allocation7 + $0x258] sm:$0xff]
    %v449 = vld [vmem:[#allocation7 + $0x260] sm:$0xff]
    %v450 = vld [vmem:[#allocation7 + $0x268] sm:$0xff]
    %v451 = vld [vmem:[#allocation7 + $0x270] sm:$0xff]
    %v452 = vld [vmem:[#allocation7 + $0x278] sm:$0xff]
    %v453 = vld [vmem:[#allocation7 + $0x280] sm:$0xff]
    %v454 = vld [vmem:[#allocation7 + $0x288] sm:$0xff]
    %v455 = vld [vmem:[#allocation7 + $0x290] sm:$0xff]
    %v456 = vld [vmem:[#allocation7 + $0x298] sm:$0xff]
    %v457 = vld [vmem:[#allocation7 + $0x2a0] sm:$0xff]
    %v458 = vld [vmem:[#allocation7 + $0x2a8] sm:$0xff]
    %v459 = vld [vmem:[#allocation7 + $0x2b0] sm:$0xff]
    %v460 = vld [vmem:[#allocation7 + $0x2b8] sm:$0xff]
    %v461 = vld [vmem:[#allocation7 + $0x2c0] sm:$0xff]
    %v462 = vld [vmem:[#allocation7 + $0x2c8] sm:$0xff]
    %v463 = vld [vmem:[#allocation7 + $0x2d0] sm:$0xff]
    %v464 = vld [vmem:[#allocation7 + $0x2d8] sm:$0xff]
    %v465 = vld [vmem:[#allocation7 + $0x2e0] sm:$0xff]
    %v466 = vld [vmem:[#allocation7 + $0x2e8] sm:$0xff]
    %v467 = vld [vmem:[#allocation7 + $0x2f0] sm:$0xff]
    %v468 = vld [vmem:[#allocation7 + $0x2f8] sm:$0xff]
    %v469 = vld [vmem:[#allocation7 + $0x300] sm:$0xff]
    %v470 = vld [vmem:[#allocation7 + $0x308] sm:$0xff]
    %v471 = vld [vmem:[#allocation7 + $0x310] sm:$0xff]
    %v472 = vld [vmem:[#allocation7 + $0x318] sm:$0xff]
    %v473 = vld [vmem:[#allocation7 + $0x320] sm:$0xff]
    %v474 = vld [vmem:[#allocation7 + $0x328] sm:$0xff]
    %v475 = vld [vmem:[#allocation7 + $0x330] sm:$0xff]
    %v476 = vld [vmem:[#allocation7 + $0x338] sm:$0xff]
    %v477 = vld [vmem:[#allocation7 + $0x340] sm:$0xff]
    %v478 = vld [vmem:[#allocation7 + $0x348] sm:$0xff]
    %v479 = vld [vmem:[#allocation7 + $0x350] sm:$0xff]
    %v480 = vld [vmem:[#allocation7 + $0x358] sm:$0xff]
    %v481 = vld [vmem:[#allocation7 + $0x360] sm:$0xff]
    %v482 = vld [vmem:[#allocation7 + $0x368] sm:$0xff]
    %v483 = vld [vmem:[#allocation7 + $0x370] sm:$0xff]
    %v484 = vld [vmem:[#allocation7 + $0x378] sm:$0xff]
    %v485 = vld [vmem:[#allocation7 + $0x380] sm:$0xff]
    %v486 = vld [vmem:[#allocation7 + $0x388] sm:$0xff]
    %v487 = vld [vmem:[#allocation7 + $0x390] sm:$0xff]
    %v488 = vld [vmem:[#allocation7 + $0x398] sm:$0xff]
    %v489 = vld [vmem:[#allocation7 + $0x3a0] sm:$0xff]
    %v490 = vld [vmem:[#allocation7 + $0x3a8] sm:$0xff]
    %v491 = vld [vmem:[#allocation7 + $0x3b0] sm:$0xff]
    %v492 = vld [vmem:[#allocation7 + $0x3b8] sm:$0xff]
    %v493 = vld [vmem:[#allocation7 + $0x3c0] sm:$0xff]
    %v494 = vld [vmem:[#allocation7 + $0x3c8] sm:$0xff]
    %v495 = vld [vmem:[#allocation7 + $0x3d0] sm:$0xff]
    %v496 = vld [vmem:[#allocation7 + $0x3d8] sm:$0xff]
    %v497 = vld [vmem:[#allocation7 + $0x3e0] sm:$0xff]
    %v498 = vld [vmem:[#allocation7 + $0x3e8] sm:$0xff]
    %v499 = vld [vmem:[#allocation7 + $0x3f0] sm:$0xff]
    %v500 = vld [vmem:[#allocation7 + $0x3f8] sm:$0xff]
    %v501 = vld [vmem:[#allocation7 + $0x400] sm:$0xff]
    %v502 = vld [vmem:[#allocation7 + $0x408] sm:$0xff]
    %v503 = vld [vmem:[#allocation7 + $0x410] sm:$0xff]
    %v504 = vld [vmem:[#allocation7 + $0x418] sm:$0xff]
    %v505 = vld [vmem:[#allocation7 + $0x420] sm:$0xff]
    %v506 = vld [vmem:[#allocation7 + $0x428] sm:$0xff]
    %v507 = vld [vmem:[#allocation7 + $0x430] sm:$0xff]
    %v508 = vld [vmem:[#allocation7 + $0x438] sm:$0xff]
    %v509 = vld [vmem:[#allocation7 + $0x440] sm:$0xff]
    %v510 = vld [vmem:[#allocation7 + $0x448] sm:$0xff]
    %v511 = vld [vmem:[#allocation7 + $0x450] sm:$0xff]
    %v512 = vld [vmem:[#allocation7 + $0x458] sm:$0xff]
    %v513 = vld [vmem:[#allocation7 + $0x460] sm:$0xff]
    %v514 = vld [vmem:[#allocation7 + $0x468] sm:$0xff]
    %v515 = vld [vmem:[#allocation7 + $0x470] sm:$0xff]
    %v516 = vld [vmem:[#allocation7 + $0x478] sm:$0xff]
    %v517 = vld [vmem:[#allocation7 + $0x480] sm:$0xff]
    %v518 = vld [vmem:[#allocation7 + $0x488] sm:$0xff]
    %v519 = vld [vmem:[#allocation7 + $0x490] sm:$0xff]
    %v520 = vld [vmem:[#allocation7 + $0x498] sm:$0xff]
    %v521 = vld [vmem:[#allocation7 + $0x4a0] sm:$0xff]
    %v522 = vld [vmem:[#allocation7 + $0x4a8] sm:$0xff]
    %v523 = vld [vmem:[#allocation7 + $0x4b0] sm:$0xff]
    %v524 = vld [vmem:[#allocation7 + $0x4b8] sm:$0xff]
    %v525 = vld [vmem:[#allocation7 + $0x4c0] sm:$0xff]
    %v526 = vld [vmem:[#allocation7 + $0x4c8] sm:$0xff]
    %v527 = vld [vmem:[#allocation7 + $0x4d0] sm:$0xff]
    %v528 = vld [vmem:[#allocation7 + $0x4d8] sm:$0xff]
    %v529 = vld [vmem:[#allocation7 + $0x4e0] sm:$0xff]
    %v530 = vld [vmem:[#allocation7 + $0x4e8] sm:$0xff]
    %v531 = vld [vmem:[#allocation7 + $0x4f0] sm:$0xff]
    %v532 = vld [vmem:[#allocation7 + $0x4f8] sm:$0xff]
    %v533 = vld [vmem:[#allocation7 + $0x500] sm:$0xff]
    %v534 = vld [vmem:[#allocation7 + $0x508] sm:$0xff]
    %v535 = vld [vmem:[#allocation7 + $0x510] sm:$0xff]
    %v536 = vld [vmem:[#allocation7 + $0x518] sm:$0xff]
    %v537 = vld [vmem:[#allocation7 + $0x520] sm:$0xff]
    %v538 = vld [vmem:[#allocation7 + $0x528] sm:$0xff]
    %v539 = vld [vmem:[#allocation7 + $0x530] sm:$0xff]
    %v540 = vld [vmem:[#allocation7 + $0x538] sm:$0xff]
    %v541 = vld [vmem:[#allocation7 + $0x540] sm:$0xff]
    %v542 = vld [vmem:[#allocation7 + $0x548] sm:$0xff]
    %v543 = vld [vmem:[#allocation7 + $0x550] sm:$0xff]
    %v544 = vld [vmem:[#allocation7 + $0x558] sm:$0xff]
    %v545 = vld [vmem:[#allocation7 + $0x560] sm:$0xff]
    %v546 = vld [vmem:[#allocation7 + $0x568] sm:$0xff]
    %v547 = vld [vmem:[#allocation7 + $0x570] sm:$0xff]
    %v548 = vld [vmem:[#allocation7 + $0x578] sm:$0xff]
    %v549 = vld [vmem:[#allocation7 + $0x580] sm:$0xff]
    %v550 = vld [vmem:[#allocation7 + $0x588] sm:$0xff]
    %v551 = vld [vmem:[#allocation7 + $0x590] sm:$0xff]
    %v552 = vld [vmem:[#allocation7 + $0x598] sm:$0xff]
    %v553 = vld [vmem:[#allocation7 + $0x5a0] sm:$0xff]
    %v554 = vld [vmem:[#allocation7 + $0x5a8] sm:$0xff]
    %v555 = vld [vmem:[#allocation7 + $0x5b0] sm:$0xff]
    %v556 = vld [vmem:[#allocation7 + $0x5b8] sm:$0xff]
    %v557 = vld [vmem:[#allocation7 + $0x5c0] sm:$0xff]
    %v558 = vld [vmem:[#allocation7 + $0x5c8] sm:$0xff]
    %v559 = vld [vmem:[#allocation7 + $0x5d0] sm:$0xff]
    %v560 = vld [vmem:[#allocation7 + $0x5d8] sm:$0xff]
    %v561 = vld [vmem:[#allocation7 + $0x5e0] sm:$0xff]
    %v562 = vld [vmem:[#allocation7 + $0x5e8] sm:$0xff]
    %v563 = vld [vmem:[#allocation7 + $0x5f0] sm:$0xff]
    %v564 = vld [vmem:[#allocation7 + $0x5f8] sm:$0xff]
    %v565 = vld [vmem:[#allocation7 + $0x600] sm:$0xff]
    %v566 = vld [vmem:[#allocation7 + $0x608] sm:$0xff]
    %v567 = vld [vmem:[#allocation7 + $0x610] sm:$0xff]
    %v568 = vld [vmem:[#allocation7 + $0x618] sm:$0xff]
    %v569 = vld [vmem:[#allocation7 + $0x620] sm:$0xff]
    %v570 = vld [vmem:[#allocation7 + $0x628] sm:$0xff]
    %v571 = vld [vmem:[#allocation7 + $0x630] sm:$0xff]
    %v572 = vld [vmem:[#allocation7 + $0x638] sm:$0xff]
    %v573 = vld [vmem:[#allocation7 + $0x640] sm:$0xff]
    %v574 = vld [vmem:[#allocation7 + $0x648] sm:$0xff]
    %v575 = vld [vmem:[#allocation7 + $0x650] sm:$0xff]
    %v576 = vld [vmem:[#allocation7 + $0x658] sm:$0xff]
    %v577 = vld [vmem:[#allocation7 + $0x660] sm:$0xff]
    %v578 = vld [vmem:[#allocation7 + $0x668] sm:$0xff]
    %v579 = vld [vmem:[#allocation7 + $0x670] sm:$0xff]
    %v580 = vld [vmem:[#allocation7 + $0x678] sm:$0xff]
    %v581 = vld [vmem:[#allocation7 + $0x680] sm:$0xff]
    %v582 = vld [vmem:[#allocation7 + $0x688] sm:$0xff]
    %v583 = vld [vmem:[#allocation7 + $0x690] sm:$0xff]
    %v584 = vld [vmem:[#allocation7 + $0x698] sm:$0xff]
    %v585 = vld [vmem:[#allocation7 + $0x6a0] sm:$0xff]
    %v586 = vld [vmem:[#allocation7 + $0x6a8] sm:$0xff]
    %v587 = vld [vmem:[#allocation7 + $0x6b0] sm:$0xff]
    %v588 = vld [vmem:[#allocation7 + $0x6b8] sm:$0xff]
    %v589 = vld [vmem:[#allocation7 + $0x6c0] sm:$0xff]
    %v590 = vld [vmem:[#allocation7 + $0x6c8] sm:$0xff]
    %v591 = vld [vmem:[#allocation7 + $0x6d0] sm:$0xff]
    %v592 = vld [vmem:[#allocation7 + $0x6d8] sm:$0xff]
    %v593 = vld [vmem:[#allocation7 + $0x6e0] sm:$0xff]
    %v594 = vld [vmem:[#allocation7 + $0x6e8] sm:$0xff]
    %v595 = vld [vmem:[#allocation7 + $0x6f0] sm:$0xff]
    %v596 = vld [vmem:[#allocation7 + $0x6f8] sm:$0xff]
    %v597 = vld [vmem:[#allocation7 + $0x700] sm:$0xff]
    %v598 = vld [vmem:[#allocation7 + $0x708] sm:$0xff]
    %v599 = vld [vmem:[#allocation7 + $0x710] sm:$0xff]
    %v600 = vld [vmem:[#allocation7 + $0x718] sm:$0xff]
    %v601 = vld [vmem:[#allocation7 + $0x720] sm:$0xff]
    %v602 = vld [vmem:[#allocation7 + $0x728] sm:$0xff]
    %v603 = vld [vmem:[#allocation7 + $0x730] sm:$0xff]
    %v604 = vld [vmem:[#allocation7 + $0x738] sm:$0xff]
    %v605 = vld [vmem:[#allocation7 + $0x740] sm:$0xff]
    %v606 = vld [vmem:[#allocation7 + $0x748] sm:$0xff]
    %v607 = vld [vmem:[#allocation7 + $0x750] sm:$0xff]
    %v608 = vld [vmem:[#allocation7 + $0x758] sm:$0xff]
    %v609 = vld [vmem:[#allocation7 + $0x760] sm:$0xff]
    %v610 = vld [vmem:[#allocation7 + $0x768] sm:$0xff]
    %v611 = vld [vmem:[#allocation7 + $0x770] sm:$0xff]
    %v612 = vld [vmem:[#allocation7 + $0x778] sm:$0xff]
    %v613 = vld [vmem:[#allocation7 + $0x780] sm:$0xff]
    %v614 = vld [vmem:[#allocation7 + $0x788] sm:$0xff]
    %v615 = vld [vmem:[#allocation7 + $0x790] sm:$0xff]
    %v616 = vld [vmem:[#allocation7 + $0x798] sm:$0xff]
    %v617 = vld [vmem:[#allocation7 + $0x7a0] sm:$0xff]
    %v618 = vld [vmem:[#allocation7 + $0x7a8] sm:$0xff]
    %v619 = vld [vmem:[#allocation7 + $0x7b0] sm:$0xff]
    %v620 = vld [vmem:[#allocation7 + $0x7b8] sm:$0xff]
    %v621 = vld [vmem:[#allocation7 + $0x7c0] sm:$0xff]
    %v622 = vld [vmem:[#allocation7 + $0x7c8] sm:$0xff]
    %v623 = vld [vmem:[#allocation7 + $0x7d0] sm:$0xff]
    %v624 = vld [vmem:[#allocation7 + $0x7d8] sm:$0xff]
    %v625 = vld [vmem:[#allocation7 + $0x7e0] sm:$0xff]
    %v626 = vld [vmem:[#allocation7 + $0x7e8] sm:$0xff]
    %v627 = vld [vmem:[#allocation7 + $0x7f0] sm:$0xff]
    %v628 = vld [vmem:[#allocation7 + $0x7f8] sm:$0xff]
    %v629 = vld [vmem:[#allocation7 + $0x800] sm:$0xff]
    %v630 = vld [vmem:[#allocation7 + $0x808] sm:$0xff]
    %v631 = vld [vmem:[#allocation7 + $0x810] sm:$0xff]
    %v632 = vld [vmem:[#allocation7 + $0x818] sm:$0xff]
    %v633 = vld [vmem:[#allocation7 + $0x820] sm:$0xff]
    %v634 = vld [vmem:[#allocation7 + $0x828] sm:$0xff]
    %v635 = vld [vmem:[#allocation7 + $0x830] sm:$0xff]
    %v636 = vld [vmem:[#allocation7 + $0x838] sm:$0xff]
    %v637 = vld [vmem:[#allocation7 + $0x840] sm:$0xff]
    %v638 = vld [vmem:[#allocation7 + $0x848] sm:$0xff]
    %v639 = vld [vmem:[#allocation7 + $0x850] sm:$0xff]
    %v640 = vld [vmem:[#allocation7 + $0x858] sm:$0xff]
    %v641 = vld [vmem:[#allocation7 + $0x860] sm:$0xff]
    %v642 = vld [vmem:[#allocation7 + $0x868] sm:$0xff]
    %v643 = vld [vmem:[#allocation7 + $0x870] sm:$0xff]
    %v644 = vld [vmem:[#allocation7 + $0x878] sm:$0xff]
    %v645 = vld [vmem:[#allocation7 + $0x880] sm:$0xff]
    %v646 = vld [vmem:[#allocation7 + $0x888] sm:$0xff]
    %v647 = vld [vmem:[#allocation7 + $0x890] sm:$0xff]
    %v648 = vld [vmem:[#allocation7 + $0x898] sm:$0xff]
    %v649 = vld [vmem:[#allocation7 + $0x8a0] sm:$0xff]
    %v650 = vld [vmem:[#allocation7 + $0x8a8] sm:$0xff]
    %v651 = vld [vmem:[#allocation7 + $0x8b0] sm:$0xff]
    %v652 = vld [vmem:[#allocation7 + $0x8b8] sm:$0xff]
    %v653 = vld [vmem:[#allocation7 + $0x8c0] sm:$0xff]
    %v654 = vld [vmem:[#allocation7 + $0x8c8] sm:$0xff]
    %v655 = vld [vmem:[#allocation7 + $0x8d0] sm:$0xff]
    %v656 = vld [vmem:[#allocation7 + $0x8d8] sm:$0xff]
    %v657 = vld [vmem:[#allocation7 + $0x8e0] sm:$0xff]
    %v658 = vld [vmem:[#allocation7 + $0x8e8] sm:$0xff]
    %v659 = vld [vmem:[#allocation7 + $0x8f0] sm:$0xff]
    %v660 = vld [vmem:[#allocation7 + $0x8f8] sm:$0xff]
    %v661 = vld [vmem:[#allocation7 + $0x900] sm:$0xff]
    %v662 = vld [vmem:[#allocation7 + $0x908] sm:$0xff]
    %v663 = vld [vmem:[#allocation7 + $0x910] sm:$0xff]
    %v664 = vld [vmem:[#allocation7 + $0x918] sm:$0xff]
    %v665 = vld [vmem:[#allocation7 + $0x920] sm:$0xff]
    %v666 = vld [vmem:[#allocation7 + $0x928] sm:$0xff]
    %v667 = vld [vmem:[#allocation7 + $0x930] sm:$0xff]
    %v668 = vld [vmem:[#allocation7 + $0x938] sm:$0xff]
    %v669 = vld [vmem:[#allocation7 + $0x940] sm:$0xff]
    %v670 = vld [vmem:[#allocation7 + $0x948] sm:$0xff]
    %v671 = vld [vmem:[#allocation7 + $0x950] sm:$0xff]
    %v672 = vld [vmem:[#allocation7 + $0x958] sm:$0xff]
    %v673 = vld [vmem:[#allocation7 + $0x960] sm:$0xff]
    %v674 = vld [vmem:[#allocation7 + $0x968] sm:$0xff]
    %v675 = vld [vmem:[#allocation7 + $0x970] sm:$0xff]
    %v676 = vld [vmem:[#allocation7 + $0x978] sm:$0xff]
    %v677 = vld [vmem:[#allocation7 + $0x980] sm:$0xff]
    %v678 = vld [vmem:[#allocation7 + $0x988] sm:$0xff]
    %v679 = vld [vmem:[#allocation7 + $0x990] sm:$0xff]
    %v680 = vld [vmem:[#allocation7 + $0x998] sm:$0xff]
    %v681 = vld [vmem:[#allocation7 + $0x9a0] sm:$0xff]
    %v682 = vld [vmem:[#allocation7 + $0x9a8] sm:$0xff]
    %v683 = vld [vmem:[#allocation7 + $0x9b0] sm:$0xff]
    %v684 = vld [vmem:[#allocation7 + $0x9b8] sm:$0xff]
    %v685 = vld [vmem:[#allocation7 + $0x9c0] sm:$0xff]
    %v686 = vld [vmem:[#allocation7 + $0x9c8] sm:$0xff]
    %v687 = vld [vmem:[#allocation7 + $0x9d0] sm:$0xff]
    %v688 = vld [vmem:[#allocation7 + $0x9d8] sm:$0xff]
    %v689 = vld [vmem:[#allocation7 + $0x9e0] sm:$0xff]
    %v690 = vld [vmem:[#allocation7 + $0x9e8] sm:$0xff]
    %v691 = vld [vmem:[#allocation7 + $0x9f0] sm:$0xff]
    %v692 = vld [vmem:[#allocation7 + $0x9f8] sm:$0xff]
    %v693 = vld [vmem:[#allocation7 + $0xa00] sm:$0xff]
    %v694 = vld [vmem:[#allocation7 + $0xa08] sm:$0xff]
    %v695 = vld [vmem:[#allocation7 + $0xa10] sm:$0xff]
    %v696 = vld [vmem:[#allocation7 + $0xa18] sm:$0xff]
    %v697 = vld [vmem:[#allocation7 + $0xa20] sm:$0xff]
    %v698 = vld [vmem:[#allocation7 + $0xa28] sm:$0xff]
    %v699 = vld [vmem:[#allocation7 + $0xa30] sm:$0xff]
    %v700 = vld [vmem:[#allocation7 + $0xa38] sm:$0xff]
    %v701 = vld [vmem:[#allocation7 + $0xa40] sm:$0xff]
    %v702 = vld [vmem:[#allocation7 + $0xa48] sm:$0xff]
    %v703 = vld [vmem:[#allocation7 + $0xa50] sm:$0xff]
    %v704 = vld [vmem:[#allocation7 + $0xa58] sm:$0xff]
    %v705 = vld [vmem:[#allocation7 + $0xa60] sm:$0xff]
    %v706 = vld [vmem:[#allocation7 + $0xa68] sm:$0xff]
    %v707 = vld [vmem:[#allocation7 + $0xa70] sm:$0xff]
    %v708 = vld [vmem:[#allocation7 + $0xa78] sm:$0xff]
    %v709 = vld [vmem:[#allocation7 + $0xa80] sm:$0xff]
    %v710 = vld [vmem:[#allocation7 + $0xa88] sm:$0xff]
    %v711 = vld [vmem:[#allocation7 + $0xa90] sm:$0xff]
    %v712 = vld [vmem:[#allocation7 + $0xa98] sm:$0xff]
    %v713 = vld [vmem:[#allocation7 + $0xaa0] sm:$0xff]
    %v714 = vld [vmem:[#allocation7 + $0xaa8] sm:$0xff]
    %v715 = vld [vmem:[#allocation7 + $0xab0] sm:$0xff]
    %v716 = vld [vmem:[#allocation7 + $0xab8] sm:$0xff]
    %v717 = vld [vmem:[#allocation7 + $0xac0] sm:$0xff]
    %v718 = vld [vmem:[#allocation7 + $0xac8] sm:$0xff]
    %v719 = vld [vmem:[#allocation7 + $0xad0] sm:$0xff]
    %v720 = vld [vmem:[#allocation7 + $0xad8] sm:$0xff]
    %v721 = vld [vmem:[#allocation7 + $0xae0] sm:$0xff]
    %v722 = vld [vmem:[#allocation7 + $0xae8] sm:$0xff]
    %v723 = vld [vmem:[#allocation7 + $0xaf0] sm:$0xff]
    %v724 = vld [vmem:[#allocation7 + $0xaf8] sm:$0xff]
    %v725 = vld [vmem:[#allocation7 + $0xb00] sm:$0xff]
    %v726 = vld [vmem:[#allocation7 + $0xb08] sm:$0xff]
    %v727 = vld [vmem:[#allocation7 + $0xb10] sm:$0xff]
    %v728 = vld [vmem:[#allocation7 + $0xb18] sm:$0xff]
    %v729 = vld [vmem:[#allocation7 + $0xb20] sm:$0xff]
    %v730 = vld [vmem:[#allocation7 + $0xb28] sm:$0xff]
    %v731 = vld [vmem:[#allocation7 + $0xb30] sm:$0xff]
    %v732 = vld [vmem:[#allocation7 + $0xb38] sm:$0xff]
    %v733 = vld [vmem:[#allocation7 + $0xb40] sm:$0xff]
    %v734 = vld [vmem:[#allocation7 + $0xb48] sm:$0xff]
    %v735 = vld [vmem:[#allocation7 + $0xb50] sm:$0xff]
    %v736 = vld [vmem:[#allocation7 + $0xb58] sm:$0xff]
    %v737 = vld [vmem:[#allocation7 + $0xb60] sm:$0xff]
    %v738 = vld [vmem:[#allocation7 + $0xb68] sm:$0xff]
    %v739 = vld [vmem:[#allocation7 + $0xb70] sm:$0xff]
    %v740 = vld [vmem:[#allocation7 + $0xb78] sm:$0xff]
    %v741 = vld [vmem:[#allocation7 + $0xb80] sm:$0xff]
    %v742 = vld [vmem:[#allocation7 + $0xb88] sm:$0xff]
    %v743 = vld [vmem:[#allocation7 + $0xb90] sm:$0xff]
    %v744 = vld [vmem:[#allocation7 + $0xb98] sm:$0xff]
    %v745 = vld [vmem:[#allocation7 + $0xba0] sm:$0xff]
    %v746 = vld [vmem:[#allocation7 + $0xba8] sm:$0xff]
    %v747 = vld [vmem:[#allocation7 + $0xbb0] sm:$0xff]
    %v748 = vld [vmem:[#allocation7 + $0xbb8] sm:$0xff]
    %v749 = vld [vmem:[#allocation7 + $0xbc0] sm:$0xff]
    %v750 = vld [vmem:[#allocation7 + $0xbc8] sm:$0xff]
    %v751 = vld [vmem:[#allocation7 + $0xbd0] sm:$0xff]
    %v752 = vld [vmem:[#allocation7 + $0xbd8] sm:$0xff]
    %v753 = vld [vmem:[#allocation7 + $0xbe0] sm:$0xff]
    %v754 = vld [vmem:[#allocation7 + $0xbe8] sm:$0xff]
    %v755 = vld [vmem:[#allocation7 + $0xbf0] sm:$0xff]
    %v756 = vld [vmem:[#allocation7 + $0xbf8] sm:$0xff]
    %v757 = vld [vmem:[#allocation7 + $0xc00] sm:$0xff]
    %v758 = vld [vmem:[#allocation7 + $0xc08] sm:$0xff]
    %v759 = vld [vmem:[#allocation7 + $0xc10] sm:$0xff]
    %v760 = vld [vmem:[#allocation7 + $0xc18] sm:$0xff]
    %v761 = vld [vmem:[#allocation7 + $0xc20] sm:$0xff]
    %v762 = vld [vmem:[#allocation7 + $0xc28] sm:$0xff]
    %v763 = vld [vmem:[#allocation7 + $0xc30] sm:$0xff]
    %v764 = vld [vmem:[#allocation7 + $0xc38] sm:$0xff]
    %v765 = vld [vmem:[#allocation7 + $0xc40] sm:$0xff]
    %v766 = vld [vmem:[#allocation7 + $0xc48] sm:$0xff]
    %v767 = vld [vmem:[#allocation7 + $0xc50] sm:$0xff]
    %v768 = vld [vmem:[#allocation7 + $0xc58] sm:$0xff]
    %v769 = vld [vmem:[#allocation7 + $0xc60] sm:$0xff]
    %v770 = vld [vmem:[#allocation7 + $0xc68] sm:$0xff]
    %v771 = vld [vmem:[#allocation7 + $0xc70] sm:$0xff]
    %v772 = vld [vmem:[#allocation7 + $0xc78] sm:$0xff]
    %v773 = vld [vmem:[#allocation7 + $0xc80] sm:$0xff]
    %v774 = vld [vmem:[#allocation7 + $0xc88] sm:$0xff]
    %v775 = vld [vmem:[#allocation7 + $0xc90] sm:$0xff]
    %v776 = vld [vmem:[#allocation7 + $0xc98] sm:$0xff]
    %v777 = vld [vmem:[#allocation7 + $0xca0] sm:$0xff]
    %v778 = vld [vmem:[#allocation7 + $0xca8] sm:$0xff]
    %v779 = vld [vmem:[#allocation7 + $0xcb0] sm:$0xff]
    %v780 = vld [vmem:[#allocation7 + $0xcb8] sm:$0xff]
    %v781 = vld [vmem:[#allocation7 + $0xcc0] sm:$0xff]
    %v782 = vld [vmem:[#allocation7 + $0xcc8] sm:$0xff]
    %v783 = vld [vmem:[#allocation7 + $0xcd0] sm:$0xff]
    %v784 = vld [vmem:[#allocation7 + $0xcd8] sm:$0xff]
    %v785 = vld [vmem:[#allocation7 + $0xce0] sm:$0xff]
    %v786 = vld [vmem:[#allocation7 + $0xce8] sm:$0xff]
    %v787 = vld [vmem:[#allocation7 + $0xcf0] sm:$0xff]
    %v788 = vld [vmem:[#allocation7 + $0xcf8] sm:$0xff]
    %v789 = vld [vmem:[#allocation7 + $0xd00] sm:$0xff]
    %v790 = vld [vmem:[#allocation7 + $0xd08] sm:$0xff]
    %v791 = vld [vmem:[#allocation7 + $0xd10] sm:$0xff]
    %v792 = vld [vmem:[#allocation7 + $0xd18] sm:$0xff]
    %v793 = vld [vmem:[#allocation7 + $0xd20] sm:$0xff]
    %v794 = vld [vmem:[#allocation7 + $0xd28] sm:$0xff]
    %v795 = vld [vmem:[#allocation7 + $0xd30] sm:$0xff]
    %v796 = vld [vmem:[#allocation7 + $0xd38] sm:$0xff]
    %v797 = vld [vmem:[#allocation7 + $0xd40] sm:$0xff]
    %v798 = vld [vmem:[#allocation7 + $0xd48] sm:$0xff]
    %v799 = vld [vmem:[#allocation7 + $0xd50] sm:$0xff]
    %v800 = vld [vmem:[#allocation7 + $0xd58] sm:$0xff]
    %v801 = vld [vmem:[#allocation7 + $0xd60] sm:$0xff]
    %v802 = vld [vmem:[#allocation7 + $0xd68] sm:$0xff]
    %v803 = vld [vmem:[#allocation7 + $0xd70] sm:$0xff]
    %v804 = vld [vmem:[#allocation7 + $0xd78] sm:$0xff]
    %v805 = vld [vmem:[#allocation7 + $0xd80] sm:$0xff]
    %v806 = vld [vmem:[#allocation7 + $0xd88] sm:$0xff]
    %v807 = vld [vmem:[#allocation7 + $0xd90] sm:$0xff]
    %v808 = vld [vmem:[#allocation7 + $0xd98] sm:$0xff]
    %v809 = vld [vmem:[#allocation7 + $0xda0] sm:$0xff]
    %v810 = vld [vmem:[#allocation7 + $0xda8] sm:$0xff]
    %v811 = vld [vmem:[#allocation7 + $0xdb0] sm:$0xff]
    %v812 = vld [vmem:[#allocation7 + $0xdb8] sm:$0xff]
    %v813 = vld [vmem:[#allocation7 + $0xdc0] sm:$0xff]
    %v814 = vld [vmem:[#allocation7 + $0xdc8] sm:$0xff]
    %v815 = vld [vmem:[#allocation7 + $0xdd0] sm:$0xff]
    %v816 = vld [vmem:[#allocation7 + $0xdd8] sm:$0xff]
    %v817 = vld [vmem:[#allocation7 + $0xde0] sm:$0xff]
    %v818 = vld [vmem:[#allocation7 + $0xde8] sm:$0xff]
    %v819 = vld [vmem:[#allocation7 + $0xdf0] sm:$0xff]
    %v820 = vld [vmem:[#allocation7 + $0xdf8] sm:$0xff]
    %v821 = vld [vmem:[#allocation7 + $0xe00] sm:$0xff]
    %v822 = vld [vmem:[#allocation7 + $0xe08] sm:$0xff]
    %v823 = vld [vmem:[#allocation7 + $0xe10] sm:$0xff]
    %v824 = vld [vmem:[#allocation7 + $0xe18] sm:$0xff]
    %v825 = vld [vmem:[#allocation7 + $0xe20] sm:$0xff]
    %v826 = vld [vmem:[#allocation7 + $0xe28] sm:$0xff]
    %v827 = vld [vmem:[#allocation7 + $0xe30] sm:$0xff]
    %v828 = vld [vmem:[#allocation7 + $0xe38] sm:$0xff]
    %v829 = vld [vmem:[#allocation7 + $0xe40] sm:$0xff]
    %v830 = vld [vmem:[#allocation7 + $0xe48] sm:$0xff]
    %v831 = vld [vmem:[#allocation7 + $0xe50] sm:$0xff]
    %v832 = vld [vmem:[#allocation7 + $0xe58] sm:$0xff]
    %v833 = vld [vmem:[#allocation7 + $0xe60] sm:$0xff]
    %v834 = vld [vmem:[#allocation7 + $0xe68] sm:$0xff]
    %v835 = vld [vmem:[#allocation7 + $0xe70] sm:$0xff]
    %v836 = vld [vmem:[#allocation7 + $0xe78] sm:$0xff]
    %v837 = vld [vmem:[#allocation7 + $0xe80] sm:$0xff]
    %v838 = vld [vmem:[#allocation7 + $0xe88] sm:$0xff]
    %v839 = vld [vmem:[#allocation7 + $0xe90] sm:$0xff]
    %v840 = vld [vmem:[#allocation7 + $0xe98] sm:$0xff]
    %v841 = vld [vmem:[#allocation7 + $0xea0] sm:$0xff]
    %v842 = vld [vmem:[#allocation7 + $0xea8] sm:$0xff]
    %v843 = vld [vmem:[#allocation7 + $0xeb0] sm:$0xff]
    %v844 = vld [vmem:[#allocation7 + $0xeb8] sm:$0xff]
    %v845 = vld [vmem:[#allocation7 + $0xec0] sm:$0xff]
    %v846 = vld [vmem:[#allocation7 + $0xec8] sm:$0xff]
    %v847 = vld [vmem:[#allocation7 + $0xed0] sm:$0xff]
    %v848 = vld [vmem:[#allocation7 + $0xed8] sm:$0xff]
    %v849 = vld [vmem:[#allocation7 + $0xee0] sm:$0xff]
    %v850 = vld [vmem:[#allocation7 + $0xee8] sm:$0xff]
    %v851 = vld [vmem:[#allocation7 + $0xef0] sm:$0xff]
    %v852 = vld [vmem:[#allocation7 + $0xef8] sm:$0xff]
    %v853 = vld [vmem:[#allocation7 + $0xf00] sm:$0xff]
    %v854 = vld [vmem:[#allocation7 + $0xf08] sm:$0xff]
    %v855 = vld [vmem:[#allocation7 + $0xf10] sm:$0xff]
    %v856 = vld [vmem:[#allocation7 + $0xf18] sm:$0xff]
    %v857 = vld [vmem:[#allocation7 + $0xf20] sm:$0xff]
    %v858 = vld [vmem:[#allocation7 + $0xf28] sm:$0xff]
    %v859 = vld [vmem:[#allocation7 + $0xf30] sm:$0xff]
    %v860 = vld [vmem:[#allocation7 + $0xf38] sm:$0xff]
    %v861 = vld [vmem:[#allocation7 + $0xf40] sm:$0xff]
    %v862 = vld [vmem:[#allocation7 + $0xf48] sm:$0xff]
    %v863 = vld [vmem:[#allocation7 + $0xf50] sm:$0xff]
    %v864 = vld [vmem:[#allocation7 + $0xf58] sm:$0xff]
    %v865 = vld [vmem:[#allocation7 + $0xf60] sm:$0xff]
    %v866 = vld [vmem:[#allocation7 + $0xf68] sm:$0xff]
    %v867 = vld [vmem:[#allocation7 + $0xf70] sm:$0xff]
    %v868 = vld [vmem:[#allocation7 + $0xf78] sm:$0xff]
    %v869 = vld [vmem:[#allocation7 + $0xf80] sm:$0xff]
    %v870 = vld [vmem:[#allocation7 + $0xf88] sm:$0xff]
    %v871 = vld [vmem:[#allocation7 + $0xf90] sm:$0xff]
    %v872 = vld [vmem:[#allocation7 + $0xf98] sm:$0xff]
    %v873 = vld [vmem:[#allocation7 + $0xfa0] sm:$0xff]
    %v874 = vld [vmem:[#allocation7 + $0xfa8] sm:$0xff]
    %v875 = vld [vmem:[#allocation7 + $0xfb0] sm:$0xff]
    %v876 = vld [vmem:[#allocation7 + $0xfb8] sm:$0xff]
    %v877 = vld [vmem:[#allocation7 + $0xfc0] sm:$0xff]
    %v878 = vld [vmem:[#allocation7 + $0xfc8] sm:$0xff]
    %v879 = vld [vmem:[#allocation7 + $0xfd0] sm:$0xff]
    %v880 = vld [vmem:[#allocation7 + $0xfd8] sm:$0xff]
    %v881 = vld [vmem:[#allocation7 + $0xfe0] sm:$0xff]
    %v882 = vld [vmem:[#allocation7 + $0xfe8] sm:$0xff]
    %v883 = vld [vmem:[#allocation7 + $0xff0] sm:$0xff]
    %v884 = vld [vmem:[#allocation7 + $0xff8] sm:$0xff]
    %v1397 = vunpack.c.l.b16 %v373
    %v1398 = vunpack.c.h.b16 %v373
    %v1399 = vunpack.c.l.b16 %v374
    %v1400 = vunpack.c.h.b16 %v374
    %v1401 = vunpack.c.l.b16 %v375
    %v1402 = vunpack.c.h.b16 %v375
    %v1403 = vunpack.c.l.b16 %v376
    %v1404 = vunpack.c.h.b16 %v376
    %v1405 = vunpack.c.l.b16 %v377
    %v1406 = vunpack.c.h.b16 %v377
    %v1407 = vunpack.c.l.b16 %v378
    %v1408 = vunpack.c.h.b16 %v378
    %v1409 = vunpack.c.l.b16 %v379
    %v1410 = vunpack.c.h.b16 %v379
    %v1411 = vunpack.c.l.b16 %v380
    %v1412 = vunpack.c.h.b16 %v380
    %v1413 = vunpack.c.l.b16 %v381
    %v1414 = vunpack.c.h.b16 %v381
    %v1415 = vunpack.c.l.b16 %v382
    %v1416 = vunpack.c.h.b16 %v382
    %v1417 = vunpack.c.l.b16 %v383
    %v1418 = vunpack.c.h.b16 %v383
    %v1419 = vunpack.c.l.b16 %v384
    %v1420 = vunpack.c.h.b16 %v384
    %v1421 = vunpack.c.l.b16 %v385
    %v1422 = vunpack.c.h.b16 %v385
    %v1423 = vunpack.c.l.b16 %v386
    %v1424 = vunpack.c.h.b16 %v386
    %v1425 = vunpack.c.l.b16 %v387
    %v1426 = vunpack.c.h.b16 %v387
    %v1427 = vunpack.c.l.b16 %v388
    %v1428 = vunpack.c.h.b16 %v388
    %v1429 = vunpack.c.l.b16 %v389
    %v1430 = vunpack.c.h.b16 %v389
    %v1431 = vunpack.c.l.b16 %v390
    %v1432 = vunpack.c.h.b16 %v390
    %v1433 = vunpack.c.l.b16 %v391
    %v1434 = vunpack.c.h.b16 %v391
    %v1435 = vunpack.c.l.b16 %v392
    %v1436 = vunpack.c.h.b16 %v392
    %v1437 = vunpack.c.l.b16 %v393
    %v1438 = vunpack.c.h.b16 %v393
    %v1439 = vunpack.c.l.b16 %v394
    %v1440 = vunpack.c.h.b16 %v394
    %v1441 = vunpack.c.l.b16 %v395
    %v1442 = vunpack.c.h.b16 %v395
    %v1443 = vunpack.c.l.b16 %v396
    %v1444 = vunpack.c.h.b16 %v396
    %v1445 = vunpack.c.l.b16 %v397
    %v1446 = vunpack.c.h.b16 %v397
    %v1447 = vunpack.c.l.b16 %v398
    %v1448 = vunpack.c.h.b16 %v398
    %v1449 = vunpack.c.l.b16 %v399
    %v1450 = vunpack.c.h.b16 %v399
    %v1451 = vunpack.c.l.b16 %v400
    %v1452 = vunpack.c.h.b16 %v400
    %v1453 = vunpack.c.l.b16 %v401
    %v1454 = vunpack.c.h.b16 %v401
    %v1455 = vunpack.c.l.b16 %v402
    %v1456 = vunpack.c.h.b16 %v402
    %v1457 = vunpack.c.l.b16 %v403
    %v1458 = vunpack.c.h.b16 %v403
    %v1459 = vunpack.c.l.b16 %v404
    %v1460 = vunpack.c.h.b16 %v404
    %v1461 = vunpack.c.l.b16 %v405
    %v1462 = vunpack.c.h.b16 %v405
    %v1463 = vunpack.c.l.b16 %v406
    %v1464 = vunpack.c.h.b16 %v406
    %v1465 = vunpack.c.l.b16 %v407
    %v1466 = vunpack.c.h.b16 %v407
    %v1467 = vunpack.c.l.b16 %v408
    %v1468 = vunpack.c.h.b16 %v408
    %v1469 = vunpack.c.l.b16 %v409
    %v1470 = vunpack.c.h.b16 %v409
    %v1471 = vunpack.c.l.b16 %v410
    %v1472 = vunpack.c.h.b16 %v410
    %v1473 = vunpack.c.l.b16 %v411
    %v1474 = vunpack.c.h.b16 %v411
    %v1475 = vunpack.c.l.b16 %v412
    %v1476 = vunpack.c.h.b16 %v412
    %v1477 = vunpack.c.l.b16 %v413
    %v1478 = vunpack.c.h.b16 %v413
    %v1479 = vunpack.c.l.b16 %v414
    %v1480 = vunpack.c.h.b16 %v414
    %v1481 = vunpack.c.l.b16 %v415
    %v1482 = vunpack.c.h.b16 %v415
    %v1483 = vunpack.c.l.b16 %v416
    %v1484 = vunpack.c.h.b16 %v416
    %v1485 = vunpack.c.l.b16 %v417
    %v1486 = vunpack.c.h.b16 %v417
    %v1487 = vunpack.c.l.b16 %v418
    %v1488 = vunpack.c.h.b16 %v418
    %v1489 = vunpack.c.l.b16 %v419
    %v1490 = vunpack.c.h.b16 %v419
    %v1491 = vunpack.c.l.b16 %v420
    %v1492 = vunpack.c.h.b16 %v420
    %v1493 = vunpack.c.l.b16 %v421
    %v1494 = vunpack.c.h.b16 %v421
    %v1495 = vunpack.c.l.b16 %v422
    %v1496 = vunpack.c.h.b16 %v422
    %v1497 = vunpack.c.l.b16 %v423
    %v1498 = vunpack.c.h.b16 %v423
    %v1499 = vunpack.c.l.b16 %v424
    %v1500 = vunpack.c.h.b16 %v424
    %v1501 = vunpack.c.l.b16 %v425
    %v1502 = vunpack.c.h.b16 %v425
    %v1503 = vunpack.c.l.b16 %v426
    %v1504 = vunpack.c.h.b16 %v426
    %v1505 = vunpack.c.l.b16 %v427
    %v1506 = vunpack.c.h.b16 %v427
    %v1507 = vunpack.c.l.b16 %v428
    %v1508 = vunpack.c.h.b16 %v428
    %v1509 = vunpack.c.l.b16 %v429
    %v1510 = vunpack.c.h.b16 %v429
    %v1511 = vunpack.c.l.b16 %v430
    %v1512 = vunpack.c.h.b16 %v430
    %v1513 = vunpack.c.l.b16 %v431
    %v1514 = vunpack.c.h.b16 %v431
    %v1515 = vunpack.c.l.b16 %v432
    %v1516 = vunpack.c.h.b16 %v432
    %v1517 = vunpack.c.l.b16 %v433
    %v1518 = vunpack.c.h.b16 %v433
    %v1519 = vunpack.c.l.b16 %v434
    %v1520 = vunpack.c.h.b16 %v434
    %v1521 = vunpack.c.l.b16 %v435
    %v1522 = vunpack.c.h.b16 %v435
    %v1523 = vunpack.c.l.b16 %v436
    %v1524 = vunpack.c.h.b16 %v436
    %v1525 = vunpack.c.l.b16 %v437
    %v1526 = vunpack.c.h.b16 %v437
    %v1527 = vunpack.c.l.b16 %v438
    %v1528 = vunpack.c.h.b16 %v438
    %v1529 = vunpack.c.l.b16 %v439
    %v1530 = vunpack.c.h.b16 %v439
    %v1531 = vunpack.c.l.b16 %v440
    %v1532 = vunpack.c.h.b16 %v440
    %v1533 = vunpack.c.l.b16 %v441
    %v1534 = vunpack.c.h.b16 %v441
    %v1535 = vunpack.c.l.b16 %v442
    %v1536 = vunpack.c.h.b16 %v442
    %v1537 = vunpack.c.l.b16 %v443
    %v1538 = vunpack.c.h.b16 %v443
    %v1539 = vunpack.c.l.b16 %v444
    %v1540 = vunpack.c.h.b16 %v444
    %v1541 = vunpack.c.l.b16 %v445
    %v1542 = vunpack.c.h.b16 %v445
    %v1543 = vunpack.c.l.b16 %v446
    %v1544 = vunpack.c.h.b16 %v446
    %v1545 = vunpack.c.l.b16 %v447
    %v1546 = vunpack.c.h.b16 %v447
    %v1547 = vunpack.c.l.b16 %v448
    %v1548 = vunpack.c.h.b16 %v448
    %v1549 = vunpack.c.l.b16 %v449
    %v1550 = vunpack.c.h.b16 %v449
    %v1551 = vunpack.c.l.b16 %v450
    %v1552 = vunpack.c.h.b16 %v450
    %v1553 = vunpack.c.l.b16 %v451
    %v1554 = vunpack.c.h.b16 %v451
    %v1555 = vunpack.c.l.b16 %v452
    %v1556 = vunpack.c.h.b16 %v452
    %v1557 = vunpack.c.l.b16 %v453
    %v1558 = vunpack.c.h.b16 %v453
    %v1559 = vunpack.c.l.b16 %v454
    %v1560 = vunpack.c.h.b16 %v454
    %v1561 = vunpack.c.l.b16 %v455
    %v1562 = vunpack.c.h.b16 %v455
    %v1563 = vunpack.c.l.b16 %v456
    %v1564 = vunpack.c.h.b16 %v456
    %v1565 = vunpack.c.l.b16 %v457
    %v1566 = vunpack.c.h.b16 %v457
    %v1567 = vunpack.c.l.b16 %v458
    %v1568 = vunpack.c.h.b16 %v458
    %v1569 = vunpack.c.l.b16 %v459
    %v1570 = vunpack.c.h.b16 %v459
    %v1571 = vunpack.c.l.b16 %v460
    %v1572 = vunpack.c.h.b16 %v460
    %v1573 = vunpack.c.l.b16 %v461
    %v1574 = vunpack.c.h.b16 %v461
    %v1575 = vunpack.c.l.b16 %v462
    %v1576 = vunpack.c.h.b16 %v462
    %v1577 = vunpack.c.l.b16 %v463
    %v1578 = vunpack.c.h.b16 %v463
    %v1579 = vunpack.c.l.b16 %v464
    %v1580 = vunpack.c.h.b16 %v464
    %v1581 = vunpack.c.l.b16 %v465
    %v1582 = vunpack.c.h.b16 %v465
    %v1583 = vunpack.c.l.b16 %v466
    %v1584 = vunpack.c.h.b16 %v466
    %v1585 = vunpack.c.l.b16 %v467
    %v1586 = vunpack.c.h.b16 %v467
    %v1587 = vunpack.c.l.b16 %v468
    %v1588 = vunpack.c.h.b16 %v468
    %v1589 = vunpack.c.l.b16 %v469
    %v1590 = vunpack.c.h.b16 %v469
    %v1591 = vunpack.c.l.b16 %v470
    %v1592 = vunpack.c.h.b16 %v470
    %v1593 = vunpack.c.l.b16 %v471
    %v1594 = vunpack.c.h.b16 %v471
    %v1595 = vunpack.c.l.b16 %v472
    %v1596 = vunpack.c.h.b16 %v472
    %v1597 = vunpack.c.l.b16 %v473
    %v1598 = vunpack.c.h.b16 %v473
    %v1599 = vunpack.c.l.b16 %v474
    %v1600 = vunpack.c.h.b16 %v474
    %v1601 = vunpack.c.l.b16 %v475
    %v1602 = vunpack.c.h.b16 %v475
    %v1603 = vunpack.c.l.b16 %v476
    %v1604 = vunpack.c.h.b16 %v476
    %v1605 = vunpack.c.l.b16 %v477
    %v1606 = vunpack.c.h.b16 %v477
    %v1607 = vunpack.c.l.b16 %v478
    %v1608 = vunpack.c.h.b16 %v478
    %v1609 = vunpack.c.l.b16 %v479
    %v1610 = vunpack.c.h.b16 %v479
    %v1611 = vunpack.c.l.b16 %v480
    %v1612 = vunpack.c.h.b16 %v480
    %v1613 = vunpack.c.l.b16 %v481
    %v1614 = vunpack.c.h.b16 %v481
    %v1615 = vunpack.c.l.b16 %v482
    %v1616 = vunpack.c.h.b16 %v482
    %v1617 = vunpack.c.l.b16 %v483
    %v1618 = vunpack.c.h.b16 %v483
    %v1619 = vunpack.c.l.b16 %v484
    %v1620 = vunpack.c.h.b16 %v484
    %v1621 = vunpack.c.l.b16 %v485
    %v1622 = vunpack.c.h.b16 %v485
    %v1623 = vunpack.c.l.b16 %v486
    %v1624 = vunpack.c.h.b16 %v486
    %v1625 = vunpack.c.l.b16 %v487
    %v1626 = vunpack.c.h.b16 %v487
    %v1627 = vunpack.c.l.b16 %v488
    %v1628 = vunpack.c.h.b16 %v488
    %v1629 = vunpack.c.l.b16 %v489
    %v1630 = vunpack.c.h.b16 %v489
    %v1631 = vunpack.c.l.b16 %v490
    %v1632 = vunpack.c.h.b16 %v490
    %v1633 = vunpack.c.l.b16 %v491
    %v1634 = vunpack.c.h.b16 %v491
    %v1635 = vunpack.c.l.b16 %v492
    %v1636 = vunpack.c.h.b16 %v492
    %v1637 = vunpack.c.l.b16 %v493
    %v1638 = vunpack.c.h.b16 %v493
    %v1639 = vunpack.c.l.b16 %v494
    %v1640 = vunpack.c.h.b16 %v494
    %v1641 = vunpack.c.l.b16 %v495
    %v1642 = vunpack.c.h.b16 %v495
    %v1643 = vunpack.c.l.b16 %v496
    %v1644 = vunpack.c.h.b16 %v496
    %v1645 = vunpack.c.l.b16 %v497
    %v1646 = vunpack.c.h.b16 %v497
    %v1647 = vunpack.c.l.b16 %v498
    %v1648 = vunpack.c.h.b16 %v498
    %v1649 = vunpack.c.l.b16 %v499
    %v1650 = vunpack.c.h.b16 %v499
    %v1651 = vunpack.c.l.b16 %v500
    %v1652 = vunpack.c.h.b16 %v500
    %v1653 = vunpack.c.l.b16 %v501
    %v1654 = vunpack.c.h.b16 %v501
    %v1655 = vunpack.c.l.b16 %v502
    %v1656 = vunpack.c.h.b16 %v502
    %v1657 = vunpack.c.l.b16 %v503
    %v1658 = vunpack.c.h.b16 %v503
    %v1659 = vunpack.c.l.b16 %v504
    %v1660 = vunpack.c.h.b16 %v504
    %v1661 = vunpack.c.l.b16 %v505
    %v1662 = vunpack.c.h.b16 %v505
    %v1663 = vunpack.c.l.b16 %v506
    %v1664 = vunpack.c.h.b16 %v506
    %v1665 = vunpack.c.l.b16 %v507
    %v1666 = vunpack.c.h.b16 %v507
    %v1667 = vunpack.c.l.b16 %v508
    %v1668 = vunpack.c.h.b16 %v508
    %v1669 = vunpack.c.l.b16 %v509
    %v1670 = vunpack.c.h.b16 %v509
    %v1671 = vunpack.c.l.b16 %v510
    %v1672 = vunpack.c.h.b16 %v510
    %v1673 = vunpack.c.l.b16 %v511
    %v1674 = vunpack.c.h.b16 %v511
    %v1675 = vunpack.c.l.b16 %v512
    %v1676 = vunpack.c.h.b16 %v512
    %v1677 = vunpack.c.l.b16 %v513
    %v1678 = vunpack.c.h.b16 %v513
    %v1679 = vunpack.c.l.b16 %v514
    %v1680 = vunpack.c.h.b16 %v514
    %v1681 = vunpack.c.l.b16 %v515
    %v1682 = vunpack.c.h.b16 %v515
    %v1683 = vunpack.c.l.b16 %v516
    %v1684 = vunpack.c.h.b16 %v516
    %v1685 = vunpack.c.l.b16 %v517
    %v1686 = vunpack.c.h.b16 %v517
    %v1687 = vunpack.c.l.b16 %v518
    %v1688 = vunpack.c.h.b16 %v518
    %v1689 = vunpack.c.l.b16 %v519
    %v1690 = vunpack.c.h.b16 %v519
    %v1691 = vunpack.c.l.b16 %v520
    %v1692 = vunpack.c.h.b16 %v520
    %v1693 = vunpack.c.l.b16 %v521
    %v1694 = vunpack.c.h.b16 %v521
    %v1695 = vunpack.c.l.b16 %v522
    %v1696 = vunpack.c.h.b16 %v522
    %v1697 = vunpack.c.l.b16 %v523
    %v1698 = vunpack.c.h.b16 %v523
    %v1699 = vunpack.c.l.b16 %v524
    %v1700 = vunpack.c.h.b16 %v524
    %v1701 = vunpack.c.l.b16 %v525
    %v1702 = vunpack.c.h.b16 %v525
    %v1703 = vunpack.c.l.b16 %v526
    %v1704 = vunpack.c.h.b16 %v526
    %v1705 = vunpack.c.l.b16 %v527
    %v1706 = vunpack.c.h.b16 %v527
    %v1707 = vunpack.c.l.b16 %v528
    %v1708 = vunpack.c.h.b16 %v528
    %v1709 = vunpack.c.l.b16 %v529
    %v1710 = vunpack.c.h.b16 %v529
    %v1711 = vunpack.c.l.b16 %v530
    %v1712 = vunpack.c.h.b16 %v530
    %v1713 = vunpack.c.l.b16 %v531
    %v1714 = vunpack.c.h.b16 %v531
    %v1715 = vunpack.c.l.b16 %v532
    %v1716 = vunpack.c.h.b16 %v532
    %v1717 = vunpack.c.l.b16 %v533
    %v1718 = vunpack.c.h.b16 %v533
    %v1719 = vunpack.c.l.b16 %v534
    %v1720 = vunpack.c.h.b16 %v534
    %v1721 = vunpack.c.l.b16 %v535
    %v1722 = vunpack.c.h.b16 %v535
    %v1723 = vunpack.c.l.b16 %v536
    %v1724 = vunpack.c.h.b16 %v536
    %v1725 = vunpack.c.l.b16 %v537
    %v1726 = vunpack.c.h.b16 %v537
    %v1727 = vunpack.c.l.b16 %v538
    %v1728 = vunpack.c.h.b16 %v538
    %v1729 = vunpack.c.l.b16 %v539
    %v1730 = vunpack.c.h.b16 %v539
    %v1731 = vunpack.c.l.b16 %v540
    %v1732 = vunpack.c.h.b16 %v540
    %v1733 = vunpack.c.l.b16 %v541
    %v1734 = vunpack.c.h.b16 %v541
    %v1735 = vunpack.c.l.b16 %v542
    %v1736 = vunpack.c.h.b16 %v542
    %v1737 = vunpack.c.l.b16 %v543
    %v1738 = vunpack.c.h.b16 %v543
    %v1739 = vunpack.c.l.b16 %v544
    %v1740 = vunpack.c.h.b16 %v544
    %v1741 = vunpack.c.l.b16 %v545
    %v1742 = vunpack.c.h.b16 %v545
    %v1743 = vunpack.c.l.b16 %v546
    %v1744 = vunpack.c.h.b16 %v546
    %v1745 = vunpack.c.l.b16 %v547
    %v1746 = vunpack.c.h.b16 %v547
    %v1747 = vunpack.c.l.b16 %v548
    %v1748 = vunpack.c.h.b16 %v548
    %v1749 = vunpack.c.l.b16 %v549
    %v1750 = vunpack.c.h.b16 %v549
    %v1751 = vunpack.c.l.b16 %v550
    %v1752 = vunpack.c.h.b16 %v550
    %v1753 = vunpack.c.l.b16 %v551
    %v1754 = vunpack.c.h.b16 %v551
    %v1755 = vunpack.c.l.b16 %v552
    %v1756 = vunpack.c.h.b16 %v552
    %v1757 = vunpack.c.l.b16 %v553
    %v1758 = vunpack.c.h.b16 %v553
    %v1759 = vunpack.c.l.b16 %v554
    %v1760 = vunpack.c.h.b16 %v554
    %v1761 = vunpack.c.l.b16 %v555
    %v1762 = vunpack.c.h.b16 %v555
    %v1763 = vunpack.c.l.b16 %v556
    %v1764 = vunpack.c.h.b16 %v556
    %v1765 = vunpack.c.l.b16 %v557
    %v1766 = vunpack.c.h.b16 %v557
    %v1767 = vunpack.c.l.b16 %v558
    %v1768 = vunpack.c.h.b16 %v558
    %v1769 = vunpack.c.l.b16 %v559
    %v1770 = vunpack.c.h.b16 %v559
    %v1771 = vunpack.c.l.b16 %v560
    %v1772 = vunpack.c.h.b16 %v560
    %v1773 = vunpack.c.l.b16 %v561
    %v1774 = vunpack.c.h.b16 %v561
    %v1775 = vunpack.c.l.b16 %v562
    %v1776 = vunpack.c.h.b16 %v562
    %v1777 = vunpack.c.l.b16 %v563
    %v1778 = vunpack.c.h.b16 %v563
    %v1779 = vunpack.c.l.b16 %v564
    %v1780 = vunpack.c.h.b16 %v564
    %v1781 = vunpack.c.l.b16 %v565
    %v1782 = vunpack.c.h.b16 %v565
    %v1783 = vunpack.c.l.b16 %v566
    %v1784 = vunpack.c.h.b16 %v566
    %v1785 = vunpack.c.l.b16 %v567
    %v1786 = vunpack.c.h.b16 %v567
    %v1787 = vunpack.c.l.b16 %v568
    %v1788 = vunpack.c.h.b16 %v568
    %v1789 = vunpack.c.l.b16 %v569
    %v1790 = vunpack.c.h.b16 %v569
    %v1791 = vunpack.c.l.b16 %v570
    %v1792 = vunpack.c.h.b16 %v570
    %v1793 = vunpack.c.l.b16 %v571
    %v1794 = vunpack.c.h.b16 %v571
    %v1795 = vunpack.c.l.b16 %v572
    %v1796 = vunpack.c.h.b16 %v572
    %v1797 = vunpack.c.l.b16 %v573
    %v1798 = vunpack.c.h.b16 %v573
    %v1799 = vunpack.c.l.b16 %v574
    %v1800 = vunpack.c.h.b16 %v574
    %v1801 = vunpack.c.l.b16 %v575
    %v1802 = vunpack.c.h.b16 %v575
    %v1803 = vunpack.c.l.b16 %v576
    %v1804 = vunpack.c.h.b16 %v576
    %v1805 = vunpack.c.l.b16 %v577
    %v1806 = vunpack.c.h.b16 %v577
    %v1807 = vunpack.c.l.b16 %v578
    %v1808 = vunpack.c.h.b16 %v578
    %v1809 = vunpack.c.l.b16 %v579
    %v1810 = vunpack.c.h.b16 %v579
    %v1811 = vunpack.c.l.b16 %v580
    %v1812 = vunpack.c.h.b16 %v580
    %v1813 = vunpack.c.l.b16 %v581
    %v1814 = vunpack.c.h.b16 %v581
    %v1815 = vunpack.c.l.b16 %v582
    %v1816 = vunpack.c.h.b16 %v582
    %v1817 = vunpack.c.l.b16 %v583
    %v1818 = vunpack.c.h.b16 %v583
    %v1819 = vunpack.c.l.b16 %v584
    %v1820 = vunpack.c.h.b16 %v584
    %v1821 = vunpack.c.l.b16 %v585
    %v1822 = vunpack.c.h.b16 %v585
    %v1823 = vunpack.c.l.b16 %v586
    %v1824 = vunpack.c.h.b16 %v586
    %v1825 = vunpack.c.l.b16 %v587
    %v1826 = vunpack.c.h.b16 %v587
    %v1827 = vunpack.c.l.b16 %v588
    %v1828 = vunpack.c.h.b16 %v588
    %v1829 = vunpack.c.l.b16 %v589
    %v1830 = vunpack.c.h.b16 %v589
    %v1831 = vunpack.c.l.b16 %v590
    %v1832 = vunpack.c.h.b16 %v590
    %v1833 = vunpack.c.l.b16 %v591
    %v1834 = vunpack.c.h.b16 %v591
    %v1835 = vunpack.c.l.b16 %v592
    %v1836 = vunpack.c.h.b16 %v592
    %v1837 = vunpack.c.l.b16 %v593
    %v1838 = vunpack.c.h.b16 %v593
    %v1839 = vunpack.c.l.b16 %v594
    %v1840 = vunpack.c.h.b16 %v594
    %v1841 = vunpack.c.l.b16 %v595
    %v1842 = vunpack.c.h.b16 %v595
    %v1843 = vunpack.c.l.b16 %v596
    %v1844 = vunpack.c.h.b16 %v596
    %v1845 = vunpack.c.l.b16 %v597
    %v1846 = vunpack.c.h.b16 %v597
    %v1847 = vunpack.c.l.b16 %v598
    %v1848 = vunpack.c.h.b16 %v598
    %v1849 = vunpack.c.l.b16 %v599
    %v1850 = vunpack.c.h.b16 %v599
    %v1851 = vunpack.c.l.b16 %v600
    %v1852 = vunpack.c.h.b16 %v600
    %v1853 = vunpack.c.l.b16 %v601
    %v1854 = vunpack.c.h.b16 %v601
    %v1855 = vunpack.c.l.b16 %v602
    %v1856 = vunpack.c.h.b16 %v602
    %v1857 = vunpack.c.l.b16 %v603
    %v1858 = vunpack.c.h.b16 %v603
    %v1859 = vunpack.c.l.b16 %v604
    %v1860 = vunpack.c.h.b16 %v604
    %v1861 = vunpack.c.l.b16 %v605
    %v1862 = vunpack.c.h.b16 %v605
    %v1863 = vunpack.c.l.b16 %v606
    %v1864 = vunpack.c.h.b16 %v606
    %v1865 = vunpack.c.l.b16 %v607
    %v1866 = vunpack.c.h.b16 %v607
    %v1867 = vunpack.c.l.b16 %v608
    %v1868 = vunpack.c.h.b16 %v608
    %v1869 = vunpack.c.l.b16 %v609
    %v1870 = vunpack.c.h.b16 %v609
    %v1871 = vunpack.c.l.b16 %v610
    %v1872 = vunpack.c.h.b16 %v610
    %v1873 = vunpack.c.l.b16 %v611
    %v1874 = vunpack.c.h.b16 %v611
    %v1875 = vunpack.c.l.b16 %v612
    %v1876 = vunpack.c.h.b16 %v612
    %v1877 = vunpack.c.l.b16 %v613
    %v1878 = vunpack.c.h.b16 %v613
    %v1879 = vunpack.c.l.b16 %v614
    %v1880 = vunpack.c.h.b16 %v614
    %v1881 = vunpack.c.l.b16 %v615
    %v1882 = vunpack.c.h.b16 %v615
    %v1883 = vunpack.c.l.b16 %v616
    %v1884 = vunpack.c.h.b16 %v616
    %v1885 = vunpack.c.l.b16 %v617
    %v1886 = vunpack.c.h.b16 %v617
    %v1887 = vunpack.c.l.b16 %v618
    %v1888 = vunpack.c.h.b16 %v618
    %v1889 = vunpack.c.l.b16 %v619
    %v1890 = vunpack.c.h.b16 %v619
    %v1891 = vunpack.c.l.b16 %v620
    %v1892 = vunpack.c.h.b16 %v620
    %v1893 = vunpack.c.l.b16 %v621
    %v1894 = vunpack.c.h.b16 %v621
    %v1895 = vunpack.c.l.b16 %v622
    %v1896 = vunpack.c.h.b16 %v622
    %v1897 = vunpack.c.l.b16 %v623
    %v1898 = vunpack.c.h.b16 %v623
    %v1899 = vunpack.c.l.b16 %v624
    %v1900 = vunpack.c.h.b16 %v624
    %v1901 = vunpack.c.l.b16 %v625
    %v1902 = vunpack.c.h.b16 %v625
    %v1903 = vunpack.c.l.b16 %v626
    %v1904 = vunpack.c.h.b16 %v626
    %v1905 = vunpack.c.l.b16 %v627
    %v1906 = vunpack.c.h.b16 %v627
    %v1907 = vunpack.c.l.b16 %v628
    %v1908 = vunpack.c.h.b16 %v628
    %v1909 = vunpack.c.l.b16 %v629
    %v1910 = vunpack.c.h.b16 %v629
    %v1911 = vunpack.c.l.b16 %v630
    %v1912 = vunpack.c.h.b16 %v630
    %v1913 = vunpack.c.l.b16 %v631
    %v1914 = vunpack.c.h.b16 %v631
    %v1915 = vunpack.c.l.b16 %v632
    %v1916 = vunpack.c.h.b16 %v632
    %v1917 = vunpack.c.l.b16 %v633
    %v1918 = vunpack.c.h.b16 %v633
    %v1919 = vunpack.c.l.b16 %v634
    %v1920 = vunpack.c.h.b16 %v634
    %v1921 = vunpack.c.l.b16 %v635
    %v1922 = vunpack.c.h.b16 %v635
    %v1923 = vunpack.c.l.b16 %v636
    %v1924 = vunpack.c.h.b16 %v636
    %v1925 = vunpack.c.l.b16 %v637
    %v1926 = vunpack.c.h.b16 %v637
    %v1927 = vunpack.c.l.b16 %v638
    %v1928 = vunpack.c.h.b16 %v638
    %v1929 = vunpack.c.l.b16 %v639
    %v1930 = vunpack.c.h.b16 %v639
    %v1931 = vunpack.c.l.b16 %v640
    %v1932 = vunpack.c.h.b16 %v640
    %v1933 = vunpack.c.l.b16 %v641
    %v1934 = vunpack.c.h.b16 %v641
    %v1935 = vunpack.c.l.b16 %v642
    %v1936 = vunpack.c.h.b16 %v642
    %v1937 = vunpack.c.l.b16 %v643
    %v1938 = vunpack.c.h.b16 %v643
    %v1939 = vunpack.c.l.b16 %v644
    %v1940 = vunpack.c.h.b16 %v644
    %v1941 = vunpack.c.l.b16 %v645
    %v1942 = vunpack.c.h.b16 %v645
    %v1943 = vunpack.c.l.b16 %v646
    %v1944 = vunpack.c.h.b16 %v646
    %v1945 = vunpack.c.l.b16 %v647
    %v1946 = vunpack.c.h.b16 %v647
    %v1947 = vunpack.c.l.b16 %v648
    %v1948 = vunpack.c.h.b16 %v648
    %v1949 = vunpack.c.l.b16 %v649
    %v1950 = vunpack.c.h.b16 %v649
    %v1951 = vunpack.c.l.b16 %v650
    %v1952 = vunpack.c.h.b16 %v650
    %v1953 = vunpack.c.l.b16 %v651
    %v1954 = vunpack.c.h.b16 %v651
    %v1955 = vunpack.c.l.b16 %v652
    %v1956 = vunpack.c.h.b16 %v652
    %v1957 = vunpack.c.l.b16 %v653
    %v1958 = vunpack.c.h.b16 %v653
    %v1959 = vunpack.c.l.b16 %v654
    %v1960 = vunpack.c.h.b16 %v654
    %v1961 = vunpack.c.l.b16 %v655
    %v1962 = vunpack.c.h.b16 %v655
    %v1963 = vunpack.c.l.b16 %v656
    %v1964 = vunpack.c.h.b16 %v656
    %v1965 = vunpack.c.l.b16 %v657
    %v1966 = vunpack.c.h.b16 %v657
    %v1967 = vunpack.c.l.b16 %v658
    %v1968 = vunpack.c.h.b16 %v658
    %v1969 = vunpack.c.l.b16 %v659
    %v1970 = vunpack.c.h.b16 %v659
    %v1971 = vunpack.c.l.b16 %v660
    %v1972 = vunpack.c.h.b16 %v660
    %v1973 = vunpack.c.l.b16 %v661
    %v1974 = vunpack.c.h.b16 %v661
    %v1975 = vunpack.c.l.b16 %v662
    %v1976 = vunpack.c.h.b16 %v662
    %v1977 = vunpack.c.l.b16 %v663
    %v1978 = vunpack.c.h.b16 %v663
    %v1979 = vunpack.c.l.b16 %v664
    %v1980 = vunpack.c.h.b16 %v664
    %v1981 = vunpack.c.l.b16 %v665
    %v1982 = vunpack.c.h.b16 %v665
    %v1983 = vunpack.c.l.b16 %v666
    %v1984 = vunpack.c.h.b16 %v666
    %v1985 = vunpack.c.l.b16 %v667
    %v1986 = vunpack.c.h.b16 %v667
    %v1987 = vunpack.c.l.b16 %v668
    %v1988 = vunpack.c.h.b16 %v668
    %v1989 = vunpack.c.l.b16 %v669
    %v1990 = vunpack.c.h.b16 %v669
    %v1991 = vunpack.c.l.b16 %v670
    %v1992 = vunpack.c.h.b16 %v670
    %v1993 = vunpack.c.l.b16 %v671
    %v1994 = vunpack.c.h.b16 %v671
    %v1995 = vunpack.c.l.b16 %v672
    %v1996 = vunpack.c.h.b16 %v672
    %v1997 = vunpack.c.l.b16 %v673
    %v1998 = vunpack.c.h.b16 %v673
    %v1999 = vunpack.c.l.b16 %v674
    %v2000 = vunpack.c.h.b16 %v674
    %v2001 = vunpack.c.l.b16 %v675
    %v2002 = vunpack.c.h.b16 %v675
    %v2003 = vunpack.c.l.b16 %v676
    %v2004 = vunpack.c.h.b16 %v676
    %v2005 = vunpack.c.l.b16 %v677
    %v2006 = vunpack.c.h.b16 %v677
    %v2007 = vunpack.c.l.b16 %v678
    %v2008 = vunpack.c.h.b16 %v678
    %v2009 = vunpack.c.l.b16 %v679
    %v2010 = vunpack.c.h.b16 %v679
    %v2011 = vunpack.c.l.b16 %v680
    %v2012 = vunpack.c.h.b16 %v680
    %v2013 = vunpack.c.l.b16 %v681
    %v2014 = vunpack.c.h.b16 %v681
    %v2015 = vunpack.c.l.b16 %v682
    %v2016 = vunpack.c.h.b16 %v682
    %v2017 = vunpack.c.l.b16 %v683
    %v2018 = vunpack.c.h.b16 %v683
    %v2019 = vunpack.c.l.b16 %v684
    %v2020 = vunpack.c.h.b16 %v684
    %v2021 = vunpack.c.l.b16 %v685
    %v2022 = vunpack.c.h.b16 %v685
    %v2023 = vunpack.c.l.b16 %v686
    %v2024 = vunpack.c.h.b16 %v686
    %v2025 = vunpack.c.l.b16 %v687
    %v2026 = vunpack.c.h.b16 %v687
    %v2027 = vunpack.c.l.b16 %v688
    %v2028 = vunpack.c.h.b16 %v688
    %v2029 = vunpack.c.l.b16 %v689
    %v2030 = vunpack.c.h.b16 %v689
    %v2031 = vunpack.c.l.b16 %v690
    %v2032 = vunpack.c.h.b16 %v690
    %v2033 = vunpack.c.l.b16 %v691
    %v2034 = vunpack.c.h.b16 %v691
    %v2035 = vunpack.c.l.b16 %v692
    %v2036 = vunpack.c.h.b16 %v692
    %v2037 = vunpack.c.l.b16 %v693
    %v2038 = vunpack.c.h.b16 %v693
    %v2039 = vunpack.c.l.b16 %v694
    %v2040 = vunpack.c.h.b16 %v694
    %v2041 = vunpack.c.l.b16 %v695
    %v2042 = vunpack.c.h.b16 %v695
    %v2043 = vunpack.c.l.b16 %v696
    %v2044 = vunpack.c.h.b16 %v696
    %v2045 = vunpack.c.l.b16 %v697
    %v2046 = vunpack.c.h.b16 %v697
    %v2047 = vunpack.c.l.b16 %v698
    %v2048 = vunpack.c.h.b16 %v698
    %v2049 = vunpack.c.l.b16 %v699
    %v2050 = vunpack.c.h.b16 %v699
    %v2051 = vunpack.c.l.b16 %v700
    %v2052 = vunpack.c.h.b16 %v700
    %v2053 = vunpack.c.l.b16 %v701
    %v2054 = vunpack.c.h.b16 %v701
    %v2055 = vunpack.c.l.b16 %v702
    %v2056 = vunpack.c.h.b16 %v702
    %v2057 = vunpack.c.l.b16 %v703
    %v2058 = vunpack.c.h.b16 %v703
    %v2059 = vunpack.c.l.b16 %v704
    %v2060 = vunpack.c.h.b16 %v704
    %v2061 = vunpack.c.l.b16 %v705
    %v2062 = vunpack.c.h.b16 %v705
    %v2063 = vunpack.c.l.b16 %v706
    %v2064 = vunpack.c.h.b16 %v706
    %v2065 = vunpack.c.l.b16 %v707
    %v2066 = vunpack.c.h.b16 %v707
    %v2067 = vunpack.c.l.b16 %v708
    %v2068 = vunpack.c.h.b16 %v708
    %v2069 = vunpack.c.l.b16 %v709
    %v2070 = vunpack.c.h.b16 %v709
    %v2071 = vunpack.c.l.b16 %v710
    %v2072 = vunpack.c.h.b16 %v710
    %v2073 = vunpack.c.l.b16 %v711
    %v2074 = vunpack.c.h.b16 %v711
    %v2075 = vunpack.c.l.b16 %v712
    %v2076 = vunpack.c.h.b16 %v712
    %v2077 = vunpack.c.l.b16 %v713
    %v2078 = vunpack.c.h.b16 %v713
    %v2079 = vunpack.c.l.b16 %v714
    %v2080 = vunpack.c.h.b16 %v714
    %v2081 = vunpack.c.l.b16 %v715
    %v2082 = vunpack.c.h.b16 %v715
    %v2083 = vunpack.c.l.b16 %v716
    %v2084 = vunpack.c.h.b16 %v716
    %v2085 = vunpack.c.l.b16 %v717
    %v2086 = vunpack.c.h.b16 %v717
    %v2087 = vunpack.c.l.b16 %v718
    %v2088 = vunpack.c.h.b16 %v718
    %v2089 = vunpack.c.l.b16 %v719
    %v2090 = vunpack.c.h.b16 %v719
    %v2091 = vunpack.c.l.b16 %v720
    %v2092 = vunpack.c.h.b16 %v720
    %v2093 = vunpack.c.l.b16 %v721
    %v2094 = vunpack.c.h.b16 %v721
    %v2095 = vunpack.c.l.b16 %v722
    %v2096 = vunpack.c.h.b16 %v722
    %v2097 = vunpack.c.l.b16 %v723
    %v2098 = vunpack.c.h.b16 %v723
    %v2099 = vunpack.c.l.b16 %v724
    %v2100 = vunpack.c.h.b16 %v724
    %v2101 = vunpack.c.l.b16 %v725
    %v2102 = vunpack.c.h.b16 %v725
    %v2103 = vunpack.c.l.b16 %v726
    %v2104 = vunpack.c.h.b16 %v726
    %v2105 = vunpack.c.l.b16 %v727
    %v2106 = vunpack.c.h.b16 %v727
    %v2107 = vunpack.c.l.b16 %v728
    %v2108 = vunpack.c.h.b16 %v728
    %v2109 = vunpack.c.l.b16 %v729
    %v2110 = vunpack.c.h.b16 %v729
    %v2111 = vunpack.c.l.b16 %v730
    %v2112 = vunpack.c.h.b16 %v730
    %v2113 = vunpack.c.l.b16 %v731
    %v2114 = vunpack.c.h.b16 %v731
    %v2115 = vunpack.c.l.b16 %v732
    %v2116 = vunpack.c.h.b16 %v732
    %v2117 = vunpack.c.l.b16 %v733
    %v2118 = vunpack.c.h.b16 %v733
    %v2119 = vunpack.c.l.b16 %v734
    %v2120 = vunpack.c.h.b16 %v734
    %v2121 = vunpack.c.l.b16 %v735
    %v2122 = vunpack.c.h.b16 %v735
    %v2123 = vunpack.c.l.b16 %v736
    %v2124 = vunpack.c.h.b16 %v736
    %v2125 = vunpack.c.l.b16 %v737
    %v2126 = vunpack.c.h.b16 %v737
    %v2127 = vunpack.c.l.b16 %v738
    %v2128 = vunpack.c.h.b16 %v738
    %v2129 = vunpack.c.l.b16 %v739
    %v2130 = vunpack.c.h.b16 %v739
    %v2131 = vunpack.c.l.b16 %v740
    %v2132 = vunpack.c.h.b16 %v740
    %v2133 = vunpack.c.l.b16 %v741
    %v2134 = vunpack.c.h.b16 %v741
    %v2135 = vunpack.c.l.b16 %v742
    %v2136 = vunpack.c.h.b16 %v742
    %v2137 = vunpack.c.l.b16 %v743
    %v2138 = vunpack.c.h.b16 %v743
    %v2139 = vunpack.c.l.b16 %v744
    %v2140 = vunpack.c.h.b16 %v744
    %v2141 = vunpack.c.l.b16 %v745
    %v2142 = vunpack.c.h.b16 %v745
    %v2143 = vunpack.c.l.b16 %v746
    %v2144 = vunpack.c.h.b16 %v746
    %v2145 = vunpack.c.l.b16 %v747
    %v2146 = vunpack.c.h.b16 %v747
    %v2147 = vunpack.c.l.b16 %v748
    %v2148 = vunpack.c.h.b16 %v748
    %v2149 = vunpack.c.l.b16 %v749
    %v2150 = vunpack.c.h.b16 %v749
    %v2151 = vunpack.c.l.b16 %v750
    %v2152 = vunpack.c.h.b16 %v750
    %v2153 = vunpack.c.l.b16 %v751
    %v2154 = vunpack.c.h.b16 %v751
    %v2155 = vunpack.c.l.b16 %v752
    %v2156 = vunpack.c.h.b16 %v752
    %v2157 = vunpack.c.l.b16 %v753
    %v2158 = vunpack.c.h.b16 %v753
    %v2159 = vunpack.c.l.b16 %v754
    %v2160 = vunpack.c.h.b16 %v754
    %v2161 = vunpack.c.l.b16 %v755
    %v2162 = vunpack.c.h.b16 %v755
    %v2163 = vunpack.c.l.b16 %v756
    %v2164 = vunpack.c.h.b16 %v756
    %v2165 = vunpack.c.l.b16 %v757
    %v2166 = vunpack.c.h.b16 %v757
    %v2167 = vunpack.c.l.b16 %v758
    %v2168 = vunpack.c.h.b16 %v758
    %v2169 = vunpack.c.l.b16 %v759
    %v2170 = vunpack.c.h.b16 %v759
    %v2171 = vunpack.c.l.b16 %v760
    %v2172 = vunpack.c.h.b16 %v760
    %v2173 = vunpack.c.l.b16 %v761
    %v2174 = vunpack.c.h.b16 %v761
    %v2175 = vunpack.c.l.b16 %v762
    %v2176 = vunpack.c.h.b16 %v762
    %v2177 = vunpack.c.l.b16 %v763
    %v2178 = vunpack.c.h.b16 %v763
    %v2179 = vunpack.c.l.b16 %v764
    %v2180 = vunpack.c.h.b16 %v764
    %v2181 = vunpack.c.l.b16 %v765
    %v2182 = vunpack.c.h.b16 %v765
    %v2183 = vunpack.c.l.b16 %v766
    %v2184 = vunpack.c.h.b16 %v766
    %v2185 = vunpack.c.l.b16 %v767
    %v2186 = vunpack.c.h.b16 %v767
    %v2187 = vunpack.c.l.b16 %v768
    %v2188 = vunpack.c.h.b16 %v768
    %v2189 = vunpack.c.l.b16 %v769
    %v2190 = vunpack.c.h.b16 %v769
    %v2191 = vunpack.c.l.b16 %v770
    %v2192 = vunpack.c.h.b16 %v770
    %v2193 = vunpack.c.l.b16 %v771
    %v2194 = vunpack.c.h.b16 %v771
    %v2195 = vunpack.c.l.b16 %v772
    %v2196 = vunpack.c.h.b16 %v772
    %v2197 = vunpack.c.l.b16 %v773
    %v2198 = vunpack.c.h.b16 %v773
    %v2199 = vunpack.c.l.b16 %v774
    %v2200 = vunpack.c.h.b16 %v774
    %v2201 = vunpack.c.l.b16 %v775
    %v2202 = vunpack.c.h.b16 %v775
    %v2203 = vunpack.c.l.b16 %v776
    %v2204 = vunpack.c.h.b16 %v776
    %v2205 = vunpack.c.l.b16 %v777
    %v2206 = vunpack.c.h.b16 %v777
    %v2207 = vunpack.c.l.b16 %v778
    %v2208 = vunpack.c.h.b16 %v778
    %v2209 = vunpack.c.l.b16 %v779
    %v2210 = vunpack.c.h.b16 %v779
    %v2211 = vunpack.c.l.b16 %v780
    %v2212 = vunpack.c.h.b16 %v780
    %v2213 = vunpack.c.l.b16 %v781
    %v2214 = vunpack.c.h.b16 %v781
    %v2215 = vunpack.c.l.b16 %v782
    %v2216 = vunpack.c.h.b16 %v782
    %v2217 = vunpack.c.l.b16 %v783
    %v2218 = vunpack.c.h.b16 %v783
    %v2219 = vunpack.c.l.b16 %v784
    %v2220 = vunpack.c.h.b16 %v784
    %v2221 = vunpack.c.l.b16 %v785
    %v2222 = vunpack.c.h.b16 %v785
    %v2223 = vunpack.c.l.b16 %v786
    %v2224 = vunpack.c.h.b16 %v786
    %v2225 = vunpack.c.l.b16 %v787
    %v2226 = vunpack.c.h.b16 %v787
    %v2227 = vunpack.c.l.b16 %v788
    %v2228 = vunpack.c.h.b16 %v788
    %v2229 = vunpack.c.l.b16 %v789
    %v2230 = vunpack.c.h.b16 %v789
    %v2231 = vunpack.c.l.b16 %v790
    %v2232 = vunpack.c.h.b16 %v790
    %v2233 = vunpack.c.l.b16 %v791
    %v2234 = vunpack.c.h.b16 %v791
    %v2235 = vunpack.c.l.b16 %v792
    %v2236 = vunpack.c.h.b16 %v792
    %v2237 = vunpack.c.l.b16 %v793
    %v2238 = vunpack.c.h.b16 %v793
    %v2239 = vunpack.c.l.b16 %v794
    %v2240 = vunpack.c.h.b16 %v794
    %v2241 = vunpack.c.l.b16 %v795
    %v2242 = vunpack.c.h.b16 %v795
    %v2243 = vunpack.c.l.b16 %v796
    %v2244 = vunpack.c.h.b16 %v796
    %v2245 = vunpack.c.l.b16 %v797
    %v2246 = vunpack.c.h.b16 %v797
    %v2247 = vunpack.c.l.b16 %v798
    %v2248 = vunpack.c.h.b16 %v798
    %v2249 = vunpack.c.l.b16 %v799
    %v2250 = vunpack.c.h.b16 %v799
    %v2251 = vunpack.c.l.b16 %v800
    %v2252 = vunpack.c.h.b16 %v800
    %v2253 = vunpack.c.l.b16 %v801
    %v2254 = vunpack.c.h.b16 %v801
    %v2255 = vunpack.c.l.b16 %v802
    %v2256 = vunpack.c.h.b16 %v802
    %v2257 = vunpack.c.l.b16 %v803
    %v2258 = vunpack.c.h.b16 %v803
    %v2259 = vunpack.c.l.b16 %v804
    %v2260 = vunpack.c.h.b16 %v804
    %v2261 = vunpack.c.l.b16 %v805
    %v2262 = vunpack.c.h.b16 %v805
    %v2263 = vunpack.c.l.b16 %v806
    %v2264 = vunpack.c.h.b16 %v806
    %v2265 = vunpack.c.l.b16 %v807
    %v2266 = vunpack.c.h.b16 %v807
    %v2267 = vunpack.c.l.b16 %v808
    %v2268 = vunpack.c.h.b16 %v808
    %v2269 = vunpack.c.l.b16 %v809
    %v2270 = vunpack.c.h.b16 %v809
    %v2271 = vunpack.c.l.b16 %v810
    %v2272 = vunpack.c.h.b16 %v810
    %v2273 = vunpack.c.l.b16 %v811
    %v2274 = vunpack.c.h.b16 %v811
    %v2275 = vunpack.c.l.b16 %v812
    %v2276 = vunpack.c.h.b16 %v812
    %v2277 = vunpack.c.l.b16 %v813
    %v2278 = vunpack.c.h.b16 %v813
    %v2279 = vunpack.c.l.b16 %v814
    %v2280 = vunpack.c.h.b16 %v814
    %v2281 = vunpack.c.l.b16 %v815
    %v2282 = vunpack.c.h.b16 %v815
    %v2283 = vunpack.c.l.b16 %v816
    %v2284 = vunpack.c.h.b16 %v816
    %v2285 = vunpack.c.l.b16 %v817
    %v2286 = vunpack.c.h.b16 %v817
    %v2287 = vunpack.c.l.b16 %v818
    %v2288 = vunpack.c.h.b16 %v818
    %v2289 = vunpack.c.l.b16 %v819
    %v2290 = vunpack.c.h.b16 %v819
    %v2291 = vunpack.c.l.b16 %v820
    %v2292 = vunpack.c.h.b16 %v820
    %v2293 = vunpack.c.l.b16 %v821
    %v2294 = vunpack.c.h.b16 %v821
    %v2295 = vunpack.c.l.b16 %v822
    %v2296 = vunpack.c.h.b16 %v822
    %v2297 = vunpack.c.l.b16 %v823
    %v2298 = vunpack.c.h.b16 %v823
    %v2299 = vunpack.c.l.b16 %v824
    %v2300 = vunpack.c.h.b16 %v824
    %v2301 = vunpack.c.l.b16 %v825
    %v2302 = vunpack.c.h.b16 %v825
    %v2303 = vunpack.c.l.b16 %v826
    %v2304 = vunpack.c.h.b16 %v826
    %v2305 = vunpack.c.l.b16 %v827
    %v2306 = vunpack.c.h.b16 %v827
    %v2307 = vunpack.c.l.b16 %v828
    %v2308 = vunpack.c.h.b16 %v828
    %v2309 = vunpack.c.l.b16 %v829
    %v2310 = vunpack.c.h.b16 %v829
    %v2311 = vunpack.c.l.b16 %v830
    %v2312 = vunpack.c.h.b16 %v830
    %v2313 = vunpack.c.l.b16 %v831
    %v2314 = vunpack.c.h.b16 %v831
    %v2315 = vunpack.c.l.b16 %v832
    %v2316 = vunpack.c.h.b16 %v832
    %v2317 = vunpack.c.l.b16 %v833
    %v2318 = vunpack.c.h.b16 %v833
    %v2319 = vunpack.c.l.b16 %v834
    %v2320 = vunpack.c.h.b16 %v834
    %v2321 = vunpack.c.l.b16 %v835
    %v2322 = vunpack.c.h.b16 %v835
    %v2323 = vunpack.c.l.b16 %v836
    %v2324 = vunpack.c.h.b16 %v836
    %v2325 = vunpack.c.l.b16 %v837
    %v2326 = vunpack.c.h.b16 %v837
    %v2327 = vunpack.c.l.b16 %v838
    %v2328 = vunpack.c.h.b16 %v838
    %v2329 = vunpack.c.l.b16 %v839
    %v2330 = vunpack.c.h.b16 %v839
    %v2331 = vunpack.c.l.b16 %v840
    %v2332 = vunpack.c.h.b16 %v840
    %v2333 = vunpack.c.l.b16 %v841
    %v2334 = vunpack.c.h.b16 %v841
    %v2335 = vunpack.c.l.b16 %v842
    %v2336 = vunpack.c.h.b16 %v842
    %v2337 = vunpack.c.l.b16 %v843
    %v2338 = vunpack.c.h.b16 %v843
    %v2339 = vunpack.c.l.b16 %v844
    %v2340 = vunpack.c.h.b16 %v844
    %v2341 = vunpack.c.l.b16 %v845
    %v2342 = vunpack.c.h.b16 %v845
    %v2343 = vunpack.c.l.b16 %v846
    %v2344 = vunpack.c.h.b16 %v846
    %v2345 = vunpack.c.l.b16 %v847
    %v2346 = vunpack.c.h.b16 %v847
    %v2347 = vunpack.c.l.b16 %v848
    %v2348 = vunpack.c.h.b16 %v848
    %v2349 = vunpack.c.l.b16 %v849
    %v2350 = vunpack.c.h.b16 %v849
    %v2351 = vunpack.c.l.b16 %v850
    %v2352 = vunpack.c.h.b16 %v850
    %v2353 = vunpack.c.l.b16 %v851
    %v2354 = vunpack.c.h.b16 %v851
    %v2355 = vunpack.c.l.b16 %v852
    %v2356 = vunpack.c.h.b16 %v852
    %v2357 = vunpack.c.l.b16 %v853
    %v2358 = vunpack.c.h.b16 %v853
    %v2359 = vunpack.c.l.b16 %v854
    %v2360 = vunpack.c.h.b16 %v854
    %v2361 = vunpack.c.l.b16 %v855
    %v2362 = vunpack.c.h.b16 %v855
    %v2363 = vunpack.c.l.b16 %v856
    %v2364 = vunpack.c.h.b16 %v856
    %v2365 = vunpack.c.l.b16 %v857
    %v2366 = vunpack.c.h.b16 %v857
    %v2367 = vunpack.c.l.b16 %v858
    %v2368 = vunpack.c.h.b16 %v858
    %v2369 = vunpack.c.l.b16 %v859
    %v2370 = vunpack.c.h.b16 %v859
    %v2371 = vunpack.c.l.b16 %v860
    %v2372 = vunpack.c.h.b16 %v860
    %v2373 = vunpack.c.l.b16 %v861
    %v2374 = vunpack.c.h.b16 %v861
    %v2375 = vunpack.c.l.b16 %v862
    %v2376 = vunpack.c.h.b16 %v862
    %v2377 = vunpack.c.l.b16 %v863
    %v2378 = vunpack.c.h.b16 %v863
    %v2379 = vunpack.c.l.b16 %v864
    %v2380 = vunpack.c.h.b16 %v864
    %v2381 = vunpack.c.l.b16 %v865
    %v2382 = vunpack.c.h.b16 %v865
    %v2383 = vunpack.c.l.b16 %v866
    %v2384 = vunpack.c.h.b16 %v866
    %v2385 = vunpack.c.l.b16 %v867
    %v2386 = vunpack.c.h.b16 %v867
    %v2387 = vunpack.c.l.b16 %v868
    %v2388 = vunpack.c.h.b16 %v868
    %v2389 = vunpack.c.l.b16 %v869
    %v2390 = vunpack.c.h.b16 %v869
    %v2391 = vunpack.c.l.b16 %v870
    %v2392 = vunpack.c.h.b16 %v870
    %v2393 = vunpack.c.l.b16 %v871
    %v2394 = vunpack.c.h.b16 %v871
    %v2395 = vunpack.c.l.b16 %v872
    %v2396 = vunpack.c.h.b16 %v872
    %v2397 = vunpack.c.l.b16 %v873
    %v2398 = vunpack.c.h.b16 %v873
    %v2399 = vunpack.c.l.b16 %v874
    %v2400 = vunpack.c.h.b16 %v874
    %v2401 = vunpack.c.l.b16 %v875
    %v2402 = vunpack.c.h.b16 %v875
    %v2403 = vunpack.c.l.b16 %v876
    %v2404 = vunpack.c.h.b16 %v876
    %v2405 = vunpack.c.l.b16 %v877
    %v2406 = vunpack.c.h.b16 %v877
    %v2407 = vunpack.c.l.b16 %v878
    %v2408 = vunpack.c.h.b16 %v878
    %v2409 = vunpack.c.l.b16 %v879
    %v2410 = vunpack.c.h.b16 %v879
    %v2411 = vunpack.c.l.b16 %v880
    %v2412 = vunpack.c.h.b16 %v880
    %v2413 = vunpack.c.l.b16 %v881
    %v2414 = vunpack.c.h.b16 %v881
    %v2415 = vunpack.c.l.b16 %v882
    %v2416 = vunpack.c.h.b16 %v882
    %v2417 = vunpack.c.l.b16 %v883
    %v2418 = vunpack.c.h.b16 %v883
    %v2419 = vunpack.c.l.b16 %v884
    %v2420 = vunpack.c.h.b16 %v884
    %v2421 = vpack.c.b16 %v1405, %v1397
    %v2422 = vpack.c.b16 %v1406, %v1398
    %v2423 = vpack.c.b16 %v1407, %v1399
    %v2424 = vpack.c.b16 %v1408, %v1400
    %v2425 = vpack.c.b16 %v1409, %v1401
    %v2426 = vpack.c.b16 %v1410, %v1402
    %v2427 = vpack.c.b16 %v1411, %v1403
    %v2428 = vpack.c.b16 %v1412, %v1404
    %v2429 = vpack.c.b16 %v1421, %v1413
    %v2430 = vpack.c.b16 %v1422, %v1414
    %v2431 = vpack.c.b16 %v1423, %v1415
    %v2432 = vpack.c.b16 %v1424, %v1416
    %v2433 = vpack.c.b16 %v1425, %v1417
    %v2434 = vpack.c.b16 %v1426, %v1418
    %v2435 = vpack.c.b16 %v1427, %v1419
    %v2436 = vpack.c.b16 %v1428, %v1420
    %v2437 = vpack.c.b16 %v1437, %v1429
    %v2438 = vpack.c.b16 %v1438, %v1430
    %v2439 = vpack.c.b16 %v1439, %v1431
    %v2440 = vpack.c.b16 %v1440, %v1432
    %v2441 = vpack.c.b16 %v1441, %v1433
    %v2442 = vpack.c.b16 %v1442, %v1434
    %v2443 = vpack.c.b16 %v1443, %v1435
    %v2444 = vpack.c.b16 %v1444, %v1436
    %v2445 = vpack.c.b16 %v1453, %v1445
    %v2446 = vpack.c.b16 %v1454, %v1446
    %v2447 = vpack.c.b16 %v1455, %v1447
    %v2448 = vpack.c.b16 %v1456, %v1448
    %v2449 = vpack.c.b16 %v1457, %v1449
    %v2450 = vpack.c.b16 %v1458, %v1450
    %v2451 = vpack.c.b16 %v1459, %v1451
    %v2452 = vpack.c.b16 %v1460, %v1452
    %v2453 = vpack.c.b16 %v1469, %v1461
    %v2454 = vpack.c.b16 %v1470, %v1462
    %v2455 = vpack.c.b16 %v1471, %v1463
    %v2456 = vpack.c.b16 %v1472, %v1464
    %v2457 = vpack.c.b16 %v1473, %v1465
    %v2458 = vpack.c.b16 %v1474, %v1466
    %v2459 = vpack.c.b16 %v1475, %v1467
    %v2460 = vpack.c.b16 %v1476, %v1468
    %v2461 = vpack.c.b16 %v1485, %v1477
    %v2462 = vpack.c.b16 %v1486, %v1478
    %v2463 = vpack.c.b16 %v1487, %v1479
    %v2464 = vpack.c.b16 %v1488, %v1480
    %v2465 = vpack.c.b16 %v1489, %v1481
    %v2466 = vpack.c.b16 %v1490, %v1482
    %v2467 = vpack.c.b16 %v1491, %v1483
    %v2468 = vpack.c.b16 %v1492, %v1484
    %v2469 = vpack.c.b16 %v1501, %v1493
    %v2470 = vpack.c.b16 %v1502, %v1494
    %v2471 = vpack.c.b16 %v1503, %v1495
    %v2472 = vpack.c.b16 %v1504, %v1496
    %v2473 = vpack.c.b16 %v1505, %v1497
    %v2474 = vpack.c.b16 %v1506, %v1498
    %v2475 = vpack.c.b16 %v1507, %v1499
    %v2476 = vpack.c.b16 %v1508, %v1500
    %v2477 = vpack.c.b16 %v1517, %v1509
    %v2478 = vpack.c.b16 %v1518, %v1510
    %v2479 = vpack.c.b16 %v1519, %v1511
    %v2480 = vpack.c.b16 %v1520, %v1512
    %v2481 = vpack.c.b16 %v1521, %v1513
    %v2482 = vpack.c.b16 %v1522, %v1514
    %v2483 = vpack.c.b16 %v1523, %v1515
    %v2484 = vpack.c.b16 %v1524, %v1516
    %v2485 = vpack.c.b16 %v1533, %v1525
    %v2486 = vpack.c.b16 %v1534, %v1526
    %v2487 = vpack.c.b16 %v1535, %v1527
    %v2488 = vpack.c.b16 %v1536, %v1528
    %v2489 = vpack.c.b16 %v1537, %v1529
    %v2490 = vpack.c.b16 %v1538, %v1530
    %v2491 = vpack.c.b16 %v1539, %v1531
    %v2492 = vpack.c.b16 %v1540, %v1532
    %v2493 = vpack.c.b16 %v1549, %v1541
    %v2494 = vpack.c.b16 %v1550, %v1542
    %v2495 = vpack.c.b16 %v1551, %v1543
    %v2496 = vpack.c.b16 %v1552, %v1544
    %v2497 = vpack.c.b16 %v1553, %v1545
    %v2498 = vpack.c.b16 %v1554, %v1546
    %v2499 = vpack.c.b16 %v1555, %v1547
    %v2500 = vpack.c.b16 %v1556, %v1548
    %v2501 = vpack.c.b16 %v1565, %v1557
    %v2502 = vpack.c.b16 %v1566, %v1558
    %v2503 = vpack.c.b16 %v1567, %v1559
    %v2504 = vpack.c.b16 %v1568, %v1560
    %v2505 = vpack.c.b16 %v1569, %v1561
    %v2506 = vpack.c.b16 %v1570, %v1562
    %v2507 = vpack.c.b16 %v1571, %v1563
    %v2508 = vpack.c.b16 %v1572, %v1564
    %v2509 = vpack.c.b16 %v1581, %v1573
    %v2510 = vpack.c.b16 %v1582, %v1574
    %v2511 = vpack.c.b16 %v1583, %v1575
    %v2512 = vpack.c.b16 %v1584, %v1576
    %v2513 = vpack.c.b16 %v1585, %v1577
    %v2514 = vpack.c.b16 %v1586, %v1578
    %v2515 = vpack.c.b16 %v1587, %v1579
    %v2516 = vpack.c.b16 %v1588, %v1580
    %v2517 = vpack.c.b16 %v1597, %v1589
    %v2518 = vpack.c.b16 %v1598, %v1590
    %v2519 = vpack.c.b16 %v1599, %v1591
    %v2520 = vpack.c.b16 %v1600, %v1592
    %v2521 = vpack.c.b16 %v1601, %v1593
    %v2522 = vpack.c.b16 %v1602, %v1594
    %v2523 = vpack.c.b16 %v1603, %v1595
    %v2524 = vpack.c.b16 %v1604, %v1596
    %v2525 = vpack.c.b16 %v1613, %v1605
    %v2526 = vpack.c.b16 %v1614, %v1606
    %v2527 = vpack.c.b16 %v1615, %v1607
    %v2528 = vpack.c.b16 %v1616, %v1608
    %v2529 = vpack.c.b16 %v1617, %v1609
    %v2530 = vpack.c.b16 %v1618, %v1610
    %v2531 = vpack.c.b16 %v1619, %v1611
    %v2532 = vpack.c.b16 %v1620, %v1612
    %v2533 = vpack.c.b16 %v1629, %v1621
    %v2534 = vpack.c.b16 %v1630, %v1622
    %v2535 = vpack.c.b16 %v1631, %v1623
    %v2536 = vpack.c.b16 %v1632, %v1624
    %v2537 = vpack.c.b16 %v1633, %v1625
    %v2538 = vpack.c.b16 %v1634, %v1626
    %v2539 = vpack.c.b16 %v1635, %v1627
    %v2540 = vpack.c.b16 %v1636, %v1628
    %v2541 = vpack.c.b16 %v1645, %v1637
    %v2542 = vpack.c.b16 %v1646, %v1638
    %v2543 = vpack.c.b16 %v1647, %v1639
    %v2544 = vpack.c.b16 %v1648, %v1640
    %v2545 = vpack.c.b16 %v1649, %v1641
    %v2546 = vpack.c.b16 %v1650, %v1642
    %v2547 = vpack.c.b16 %v1651, %v1643
    %v2548 = vpack.c.b16 %v1652, %v1644
    %v2549 = vpack.c.b16 %v1661, %v1653
    %v2550 = vpack.c.b16 %v1662, %v1654
    %v2551 = vpack.c.b16 %v1663, %v1655
    %v2552 = vpack.c.b16 %v1664, %v1656
    %v2553 = vpack.c.b16 %v1665, %v1657
    %v2554 = vpack.c.b16 %v1666, %v1658
    %v2555 = vpack.c.b16 %v1667, %v1659
    %v2556 = vpack.c.b16 %v1668, %v1660
    %v2557 = vpack.c.b16 %v1677, %v1669
    %v2558 = vpack.c.b16 %v1678, %v1670
    %v2559 = vpack.c.b16 %v1679, %v1671
    %v2560 = vpack.c.b16 %v1680, %v1672
    %v2561 = vpack.c.b16 %v1681, %v1673
    %v2562 = vpack.c.b16 %v1682, %v1674
    %v2563 = vpack.c.b16 %v1683, %v1675
    %v2564 = vpack.c.b16 %v1684, %v1676
    %v2565 = vpack.c.b16 %v1693, %v1685
    %v2566 = vpack.c.b16 %v1694, %v1686
    %v2567 = vpack.c.b16 %v1695, %v1687
    %v2568 = vpack.c.b16 %v1696, %v1688
    %v2569 = vpack.c.b16 %v1697, %v1689
    %v2570 = vpack.c.b16 %v1698, %v1690
    %v2571 = vpack.c.b16 %v1699, %v1691
    %v2572 = vpack.c.b16 %v1700, %v1692
    %v2573 = vpack.c.b16 %v1709, %v1701
    %v2574 = vpack.c.b16 %v1710, %v1702
    %v2575 = vpack.c.b16 %v1711, %v1703
    %v2576 = vpack.c.b16 %v1712, %v1704
    %v2577 = vpack.c.b16 %v1713, %v1705
    %v2578 = vpack.c.b16 %v1714, %v1706
    %v2579 = vpack.c.b16 %v1715, %v1707
    %v2580 = vpack.c.b16 %v1716, %v1708
    %v2581 = vpack.c.b16 %v1725, %v1717
    %v2582 = vpack.c.b16 %v1726, %v1718
    %v2583 = vpack.c.b16 %v1727, %v1719
    %v2584 = vpack.c.b16 %v1728, %v1720
    %v2585 = vpack.c.b16 %v1729, %v1721
    %v2586 = vpack.c.b16 %v1730, %v1722
    %v2587 = vpack.c.b16 %v1731, %v1723
    %v2588 = vpack.c.b16 %v1732, %v1724
    %v2589 = vpack.c.b16 %v1741, %v1733
    %v2590 = vpack.c.b16 %v1742, %v1734
    %v2591 = vpack.c.b16 %v1743, %v1735
    %v2592 = vpack.c.b16 %v1744, %v1736
    %v2593 = vpack.c.b16 %v1745, %v1737
    %v2594 = vpack.c.b16 %v1746, %v1738
    %v2595 = vpack.c.b16 %v1747, %v1739
    %v2596 = vpack.c.b16 %v1748, %v1740
    %v2597 = vpack.c.b16 %v1757, %v1749
    %v2598 = vpack.c.b16 %v1758, %v1750
    %v2599 = vpack.c.b16 %v1759, %v1751
    %v2600 = vpack.c.b16 %v1760, %v1752
    %v2601 = vpack.c.b16 %v1761, %v1753
    %v2602 = vpack.c.b16 %v1762, %v1754
    %v2603 = vpack.c.b16 %v1763, %v1755
    %v2604 = vpack.c.b16 %v1764, %v1756
    %v2605 = vpack.c.b16 %v1773, %v1765
    %v2606 = vpack.c.b16 %v1774, %v1766
    %v2607 = vpack.c.b16 %v1775, %v1767
    %v2608 = vpack.c.b16 %v1776, %v1768
    %v2609 = vpack.c.b16 %v1777, %v1769
    %v2610 = vpack.c.b16 %v1778, %v1770
    %v2611 = vpack.c.b16 %v1779, %v1771
    %v2612 = vpack.c.b16 %v1780, %v1772
    %v2613 = vpack.c.b16 %v1789, %v1781
    %v2614 = vpack.c.b16 %v1790, %v1782
    %v2615 = vpack.c.b16 %v1791, %v1783
    %v2616 = vpack.c.b16 %v1792, %v1784
    %v2617 = vpack.c.b16 %v1793, %v1785
    %v2618 = vpack.c.b16 %v1794, %v1786
    %v2619 = vpack.c.b16 %v1795, %v1787
    %v2620 = vpack.c.b16 %v1796, %v1788
    %v2621 = vpack.c.b16 %v1805, %v1797
    %v2622 = vpack.c.b16 %v1806, %v1798
    %v2623 = vpack.c.b16 %v1807, %v1799
    %v2624 = vpack.c.b16 %v1808, %v1800
    %v2625 = vpack.c.b16 %v1809, %v1801
    %v2626 = vpack.c.b16 %v1810, %v1802
    %v2627 = vpack.c.b16 %v1811, %v1803
    %v2628 = vpack.c.b16 %v1812, %v1804
    %v2629 = vpack.c.b16 %v1821, %v1813
    %v2630 = vpack.c.b16 %v1822, %v1814
    %v2631 = vpack.c.b16 %v1823, %v1815
    %v2632 = vpack.c.b16 %v1824, %v1816
    %v2633 = vpack.c.b16 %v1825, %v1817
    %v2634 = vpack.c.b16 %v1826, %v1818
    %v2635 = vpack.c.b16 %v1827, %v1819
    %v2636 = vpack.c.b16 %v1828, %v1820
    %v2637 = vpack.c.b16 %v1837, %v1829
    %v2638 = vpack.c.b16 %v1838, %v1830
    %v2639 = vpack.c.b16 %v1839, %v1831
    %v2640 = vpack.c.b16 %v1840, %v1832
    %v2641 = vpack.c.b16 %v1841, %v1833
    %v2642 = vpack.c.b16 %v1842, %v1834
    %v2643 = vpack.c.b16 %v1843, %v1835
    %v2644 = vpack.c.b16 %v1844, %v1836
    %v2645 = vpack.c.b16 %v1853, %v1845
    %v2646 = vpack.c.b16 %v1854, %v1846
    %v2647 = vpack.c.b16 %v1855, %v1847
    %v2648 = vpack.c.b16 %v1856, %v1848
    %v2649 = vpack.c.b16 %v1857, %v1849
    %v2650 = vpack.c.b16 %v1858, %v1850
    %v2651 = vpack.c.b16 %v1859, %v1851
    %v2652 = vpack.c.b16 %v1860, %v1852
    %v2653 = vpack.c.b16 %v1869, %v1861
    %v2654 = vpack.c.b16 %v1870, %v1862
    %v2655 = vpack.c.b16 %v1871, %v1863
    %v2656 = vpack.c.b16 %v1872, %v1864
    %v2657 = vpack.c.b16 %v1873, %v1865
    %v2658 = vpack.c.b16 %v1874, %v1866
    %v2659 = vpack.c.b16 %v1875, %v1867
    %v2660 = vpack.c.b16 %v1876, %v1868
    %v2661 = vpack.c.b16 %v1885, %v1877
    %v2662 = vpack.c.b16 %v1886, %v1878
    %v2663 = vpack.c.b16 %v1887, %v1879
    %v2664 = vpack.c.b16 %v1888, %v1880
    %v2665 = vpack.c.b16 %v1889, %v1881
    %v2666 = vpack.c.b16 %v1890, %v1882
    %v2667 = vpack.c.b16 %v1891, %v1883
    %v2668 = vpack.c.b16 %v1892, %v1884
    %v2669 = vpack.c.b16 %v1901, %v1893
    %v2670 = vpack.c.b16 %v1902, %v1894
    %v2671 = vpack.c.b16 %v1903, %v1895
    %v2672 = vpack.c.b16 %v1904, %v1896
    %v2673 = vpack.c.b16 %v1905, %v1897
    %v2674 = vpack.c.b16 %v1906, %v1898
    %v2675 = vpack.c.b16 %v1907, %v1899
    %v2676 = vpack.c.b16 %v1908, %v1900
    %v2677 = vpack.c.b16 %v1917, %v1909
    %v2678 = vpack.c.b16 %v1918, %v1910
    %v2679 = vpack.c.b16 %v1919, %v1911
    %v2680 = vpack.c.b16 %v1920, %v1912
    %v2681 = vpack.c.b16 %v1921, %v1913
    %v2682 = vpack.c.b16 %v1922, %v1914
    %v2683 = vpack.c.b16 %v1923, %v1915
    %v2684 = vpack.c.b16 %v1924, %v1916
    %v2685 = vpack.c.b16 %v1933, %v1925
    %v2686 = vpack.c.b16 %v1934, %v1926
    %v2687 = vpack.c.b16 %v1935, %v1927
    %v2688 = vpack.c.b16 %v1936, %v1928
    %v2689 = vpack.c.b16 %v1937, %v1929
    %v2690 = vpack.c.b16 %v1938, %v1930
    %v2691 = vpack.c.b16 %v1939, %v1931
    %v2692 = vpack.c.b16 %v1940, %v1932
    %v2693 = vpack.c.b16 %v1949, %v1941
    %v2694 = vpack.c.b16 %v1950, %v1942
    %v2695 = vpack.c.b16 %v1951, %v1943
    %v2696 = vpack.c.b16 %v1952, %v1944
    %v2697 = vpack.c.b16 %v1953, %v1945
    %v2698 = vpack.c.b16 %v1954, %v1946
    %v2699 = vpack.c.b16 %v1955, %v1947
    %v2700 = vpack.c.b16 %v1956, %v1948
    %v2701 = vpack.c.b16 %v1965, %v1957
    %v2702 = vpack.c.b16 %v1966, %v1958
    %v2703 = vpack.c.b16 %v1967, %v1959
    %v2704 = vpack.c.b16 %v1968, %v1960
    %v2705 = vpack.c.b16 %v1969, %v1961
    %v2706 = vpack.c.b16 %v1970, %v1962
    %v2707 = vpack.c.b16 %v1971, %v1963
    %v2708 = vpack.c.b16 %v1972, %v1964
    %v2709 = vpack.c.b16 %v1981, %v1973
    %v2710 = vpack.c.b16 %v1982, %v1974
    %v2711 = vpack.c.b16 %v1983, %v1975
    %v2712 = vpack.c.b16 %v1984, %v1976
    %v2713 = vpack.c.b16 %v1985, %v1977
    %v2714 = vpack.c.b16 %v1986, %v1978
    %v2715 = vpack.c.b16 %v1987, %v1979
    %v2716 = vpack.c.b16 %v1988, %v1980
    %v2717 = vpack.c.b16 %v1997, %v1989
    %v2718 = vpack.c.b16 %v1998, %v1990
    %v2719 = vpack.c.b16 %v1999, %v1991
    %v2720 = vpack.c.b16 %v2000, %v1992
    %v2721 = vpack.c.b16 %v2001, %v1993
    %v2722 = vpack.c.b16 %v2002, %v1994
    %v2723 = vpack.c.b16 %v2003, %v1995
    %v2724 = vpack.c.b16 %v2004, %v1996
    %v2725 = vpack.c.b16 %v2013, %v2005
    %v2726 = vpack.c.b16 %v2014, %v2006
    %v2727 = vpack.c.b16 %v2015, %v2007
    %v2728 = vpack.c.b16 %v2016, %v2008
    %v2729 = vpack.c.b16 %v2017, %v2009
    %v2730 = vpack.c.b16 %v2018, %v2010
    %v2731 = vpack.c.b16 %v2019, %v2011
    %v2732 = vpack.c.b16 %v2020, %v2012
    %v2733 = vpack.c.b16 %v2029, %v2021
    %v2734 = vpack.c.b16 %v2030, %v2022
    %v2735 = vpack.c.b16 %v2031, %v2023
    %v2736 = vpack.c.b16 %v2032, %v2024
    %v2737 = vpack.c.b16 %v2033, %v2025
    %v2738 = vpack.c.b16 %v2034, %v2026
    %v2739 = vpack.c.b16 %v2035, %v2027
    %v2740 = vpack.c.b16 %v2036, %v2028
    %v2741 = vpack.c.b16 %v2045, %v2037
    %v2742 = vpack.c.b16 %v2046, %v2038
    %v2743 = vpack.c.b16 %v2047, %v2039
    %v2744 = vpack.c.b16 %v2048, %v2040
    %v2745 = vpack.c.b16 %v2049, %v2041
    %v2746 = vpack.c.b16 %v2050, %v2042
    %v2747 = vpack.c.b16 %v2051, %v2043
    %v2748 = vpack.c.b16 %v2052, %v2044
    %v2749 = vpack.c.b16 %v2061, %v2053
    %v2750 = vpack.c.b16 %v2062, %v2054
    %v2751 = vpack.c.b16 %v2063, %v2055
    %v2752 = vpack.c.b16 %v2064, %v2056
    %v2753 = vpack.c.b16 %v2065, %v2057
    %v2754 = vpack.c.b16 %v2066, %v2058
    %v2755 = vpack.c.b16 %v2067, %v2059
    %v2756 = vpack.c.b16 %v2068, %v2060
    %v2757 = vpack.c.b16 %v2077, %v2069
    %v2758 = vpack.c.b16 %v2078, %v2070
    %v2759 = vpack.c.b16 %v2079, %v2071
    %v2760 = vpack.c.b16 %v2080, %v2072
    %v2761 = vpack.c.b16 %v2081, %v2073
    %v2762 = vpack.c.b16 %v2082, %v2074
    %v2763 = vpack.c.b16 %v2083, %v2075
    %v2764 = vpack.c.b16 %v2084, %v2076
    %v2765 = vpack.c.b16 %v2093, %v2085
    %v2766 = vpack.c.b16 %v2094, %v2086
    %v2767 = vpack.c.b16 %v2095, %v2087
    %v2768 = vpack.c.b16 %v2096, %v2088
    %v2769 = vpack.c.b16 %v2097, %v2089
    %v2770 = vpack.c.b16 %v2098, %v2090
    %v2771 = vpack.c.b16 %v2099, %v2091
    %v2772 = vpack.c.b16 %v2100, %v2092
    %v2773 = vpack.c.b16 %v2109, %v2101
    %v2774 = vpack.c.b16 %v2110, %v2102
    %v2775 = vpack.c.b16 %v2111, %v2103
    %v2776 = vpack.c.b16 %v2112, %v2104
    %v2777 = vpack.c.b16 %v2113, %v2105
    %v2778 = vpack.c.b16 %v2114, %v2106
    %v2779 = vpack.c.b16 %v2115, %v2107
    %v2780 = vpack.c.b16 %v2116, %v2108
    %v2781 = vpack.c.b16 %v2125, %v2117
    %v2782 = vpack.c.b16 %v2126, %v2118
    %v2783 = vpack.c.b16 %v2127, %v2119
    %v2784 = vpack.c.b16 %v2128, %v2120
    %v2785 = vpack.c.b16 %v2129, %v2121
    %v2786 = vpack.c.b16 %v2130, %v2122
    %v2787 = vpack.c.b16 %v2131, %v2123
    %v2788 = vpack.c.b16 %v2132, %v2124
    %v2789 = vpack.c.b16 %v2141, %v2133
    %v2790 = vpack.c.b16 %v2142, %v2134
    %v2791 = vpack.c.b16 %v2143, %v2135
    %v2792 = vpack.c.b16 %v2144, %v2136
    %v2793 = vpack.c.b16 %v2145, %v2137
    %v2794 = vpack.c.b16 %v2146, %v2138
    %v2795 = vpack.c.b16 %v2147, %v2139
    %v2796 = vpack.c.b16 %v2148, %v2140
    %v2797 = vpack.c.b16 %v2157, %v2149
    %v2798 = vpack.c.b16 %v2158, %v2150
    %v2799 = vpack.c.b16 %v2159, %v2151
    %v2800 = vpack.c.b16 %v2160, %v2152
    %v2801 = vpack.c.b16 %v2161, %v2153
    %v2802 = vpack.c.b16 %v2162, %v2154
    %v2803 = vpack.c.b16 %v2163, %v2155
    %v2804 = vpack.c.b16 %v2164, %v2156
    %v2805 = vpack.c.b16 %v2173, %v2165
    %v2806 = vpack.c.b16 %v2174, %v2166
    %v2807 = vpack.c.b16 %v2175, %v2167
    %v2808 = vpack.c.b16 %v2176, %v2168
    %v2809 = vpack.c.b16 %v2177, %v2169
    %v2810 = vpack.c.b16 %v2178, %v2170
    %v2811 = vpack.c.b16 %v2179, %v2171
    %v2812 = vpack.c.b16 %v2180, %v2172
    %v2813 = vpack.c.b16 %v2189, %v2181
    %v2814 = vpack.c.b16 %v2190, %v2182
    %v2815 = vpack.c.b16 %v2191, %v2183
    %v2816 = vpack.c.b16 %v2192, %v2184
    %v2817 = vpack.c.b16 %v2193, %v2185
    %v2818 = vpack.c.b16 %v2194, %v2186
    %v2819 = vpack.c.b16 %v2195, %v2187
    %v2820 = vpack.c.b16 %v2196, %v2188
    %v2821 = vpack.c.b16 %v2205, %v2197
    %v2822 = vpack.c.b16 %v2206, %v2198
    %v2823 = vpack.c.b16 %v2207, %v2199
    %v2824 = vpack.c.b16 %v2208, %v2200
    %v2825 = vpack.c.b16 %v2209, %v2201
    %v2826 = vpack.c.b16 %v2210, %v2202
    %v2827 = vpack.c.b16 %v2211, %v2203
    %v2828 = vpack.c.b16 %v2212, %v2204
    %v2829 = vpack.c.b16 %v2221, %v2213
    %v2830 = vpack.c.b16 %v2222, %v2214
    %v2831 = vpack.c.b16 %v2223, %v2215
    %v2832 = vpack.c.b16 %v2224, %v2216
    %v2833 = vpack.c.b16 %v2225, %v2217
    %v2834 = vpack.c.b16 %v2226, %v2218
    %v2835 = vpack.c.b16 %v2227, %v2219
    %v2836 = vpack.c.b16 %v2228, %v2220
    %v2837 = vpack.c.b16 %v2237, %v2229
    %v2838 = vpack.c.b16 %v2238, %v2230
    %v2839 = vpack.c.b16 %v2239, %v2231
    %v2840 = vpack.c.b16 %v2240, %v2232
    %v2841 = vpack.c.b16 %v2241, %v2233
    %v2842 = vpack.c.b16 %v2242, %v2234
    %v2843 = vpack.c.b16 %v2243, %v2235
    %v2844 = vpack.c.b16 %v2244, %v2236
    %v2845 = vpack.c.b16 %v2253, %v2245
    %v2846 = vpack.c.b16 %v2254, %v2246
    %v2847 = vpack.c.b16 %v2255, %v2247
    %v2848 = vpack.c.b16 %v2256, %v2248
    %v2849 = vpack.c.b16 %v2257, %v2249
    %v2850 = vpack.c.b16 %v2258, %v2250
    %v2851 = vpack.c.b16 %v2259, %v2251
    %v2852 = vpack.c.b16 %v2260, %v2252
    %v2853 = vpack.c.b16 %v2269, %v2261
    %v2854 = vpack.c.b16 %v2270, %v2262
    %v2855 = vpack.c.b16 %v2271, %v2263
    %v2856 = vpack.c.b16 %v2272, %v2264
    %v2857 = vpack.c.b16 %v2273, %v2265
    %v2858 = vpack.c.b16 %v2274, %v2266
    %v2859 = vpack.c.b16 %v2275, %v2267
    %v2860 = vpack.c.b16 %v2276, %v2268
    %v2861 = vpack.c.b16 %v2285, %v2277
    %v2862 = vpack.c.b16 %v2286, %v2278
    %v2863 = vpack.c.b16 %v2287, %v2279
    %v2864 = vpack.c.b16 %v2288, %v2280
    %v2865 = vpack.c.b16 %v2289, %v2281
    %v2866 = vpack.c.b16 %v2290, %v2282
    %v2867 = vpack.c.b16 %v2291, %v2283
    %v2868 = vpack.c.b16 %v2292, %v2284
    %v2869 = vpack.c.b16 %v2301, %v2293
    %v2870 = vpack.c.b16 %v2302, %v2294
    %v2871 = vpack.c.b16 %v2303, %v2295
    %v2872 = vpack.c.b16 %v2304, %v2296
    %v2873 = vpack.c.b16 %v2305, %v2297
    %v2874 = vpack.c.b16 %v2306, %v2298
    %v2875 = vpack.c.b16 %v2307, %v2299
    %v2876 = vpack.c.b16 %v2308, %v2300
    %v2877 = vpack.c.b16 %v2317, %v2309
    %v2878 = vpack.c.b16 %v2318, %v2310
    %v2879 = vpack.c.b16 %v2319, %v2311
    %v2880 = vpack.c.b16 %v2320, %v2312
    %v2881 = vpack.c.b16 %v2321, %v2313
    %v2882 = vpack.c.b16 %v2322, %v2314
    %v2883 = vpack.c.b16 %v2323, %v2315
    %v2884 = vpack.c.b16 %v2324, %v2316
    %v2885 = vpack.c.b16 %v2333, %v2325
    %v2886 = vpack.c.b16 %v2334, %v2326
    %v2887 = vpack.c.b16 %v2335, %v2327
    %v2888 = vpack.c.b16 %v2336, %v2328
    %v2889 = vpack.c.b16 %v2337, %v2329
    %v2890 = vpack.c.b16 %v2338, %v2330
    %v2891 = vpack.c.b16 %v2339, %v2331
    %v2892 = vpack.c.b16 %v2340, %v2332
    %v2893 = vpack.c.b16 %v2349, %v2341
    %v2894 = vpack.c.b16 %v2350, %v2342
    %v2895 = vpack.c.b16 %v2351, %v2343
    %v2896 = vpack.c.b16 %v2352, %v2344
    %v2897 = vpack.c.b16 %v2353, %v2345
    %v2898 = vpack.c.b16 %v2354, %v2346
    %v2899 = vpack.c.b16 %v2355, %v2347
    %v2900 = vpack.c.b16 %v2356, %v2348
    %v2901 = vpack.c.b16 %v2365, %v2357
    %v2902 = vpack.c.b16 %v2366, %v2358
    %v2903 = vpack.c.b16 %v2367, %v2359
    %v2904 = vpack.c.b16 %v2368, %v2360
    %v2905 = vpack.c.b16 %v2369, %v2361
    %v2906 = vpack.c.b16 %v2370, %v2362
    %v2907 = vpack.c.b16 %v2371, %v2363
    %v2908 = vpack.c.b16 %v2372, %v2364
    %v2909 = vpack.c.b16 %v2381, %v2373
    %v2910 = vpack.c.b16 %v2382, %v2374
    %v2911 = vpack.c.b16 %v2383, %v2375
    %v2912 = vpack.c.b16 %v2384, %v2376
    %v2913 = vpack.c.b16 %v2385, %v2377
    %v2914 = vpack.c.b16 %v2386, %v2378
    %v2915 = vpack.c.b16 %v2387, %v2379
    %v2916 = vpack.c.b16 %v2388, %v2380
    %v2917 = vpack.c.b16 %v2397, %v2389
    %v2918 = vpack.c.b16 %v2398, %v2390
    %v2919 = vpack.c.b16 %v2399, %v2391
    %v2920 = vpack.c.b16 %v2400, %v2392
    %v2921 = vpack.c.b16 %v2401, %v2393
    %v2922 = vpack.c.b16 %v2402, %v2394
    %v2923 = vpack.c.b16 %v2403, %v2395
    %v2924 = vpack.c.b16 %v2404, %v2396
    %v2925 = vpack.c.b16 %v2413, %v2405
    %v2926 = vpack.c.b16 %v2414, %v2406
    %v2927 = vpack.c.b16 %v2415, %v2407
    %v2928 = vpack.c.b16 %v2416, %v2408
    %v2929 = vpack.c.b16 %v2417, %v2409
    %v2930 = vpack.c.b16 %v2418, %v2410
    %v2931 = vpack.c.b16 %v2419, %v2411
    %v2932 = vpack.c.b16 %v2420, %v2412
    %3445 = vmatprep.subr.bf16.mxu0 %v2422
    %3446 = vmatpush1.bf16.msra.mxu0 %v2421
    %3447 = vmatprep.subr.bf16.mxu0 %v2430
    %3448 = vmatpush1.bf16.msra.mxu0 %v2429
    %3449 = vmatprep.subr.bf16.mxu0 %v2438
    %3450 = vmatpush1.bf16.msra.mxu0 %v2437
    %3451 = vmatprep.subr.bf16.mxu0 %v2446
    %3452 = vmatpush1.bf16.msra.mxu0 %v2445
    %3453 = vmatprep.subr.bf16.mxu0 %v2454
    %3454 = vmatpush1.bf16.msra.mxu0 %v2453
    %3455 = vmatprep.subr.bf16.mxu0 %v2462
    %3456 = vmatpush1.bf16.msra.mxu0 %v2461
    %3457 = vmatprep.subr.bf16.mxu0 %v2470
    %3458 = vmatpush1.bf16.msra.mxu0 %v2469
    %3459 = vmatprep.subr.bf16.mxu0 %v2478
    %3460 = vmatpush1.bf16.msra.mxu0 %v2477
    %3461 = vmatprep.subr.bf16.mxu0 %v2486
    %3462 = vmatpush1.bf16.msra.mxu0 %v2485
    %3463 = vmatprep.subr.bf16.mxu0 %v2494
    %3464 = vmatpush1.bf16.msra.mxu0 %v2493
    %3465 = vmatprep.subr.bf16.mxu0 %v2502
    %3466 = vmatpush1.bf16.msra.mxu0 %v2501
    %3467 = vmatprep.subr.bf16.mxu0 %v2510
    %3468 = vmatpush1.bf16.msra.mxu0 %v2509
    %3469 = vmatprep.subr.bf16.mxu0 %v2518
    %3470 = vmatpush1.bf16.msra.mxu0 %v2517
    %3471 = vmatprep.subr.bf16.mxu0 %v2526
    %3472 = vmatpush1.bf16.msra.mxu0 %v2525
    %3473 = vmatprep.subr.bf16.mxu0 %v2534
    %3474 = vmatpush1.bf16.msra.mxu0 %v2533
    %3475 = vmatprep.subr.bf16.mxu0 %v2542
    %3476 = vmatpush1.bf16.msra.mxu0 %v2541
    %3477 = vmatprep.mubr.bf16.mxu0 %v366
    %3478 = vmatmul.mubr.bf16.gmra.mrb[0].mxu0 %v365
    %v3479 = vpop.f32.mrb[0].mxu0
    %v3480 = vadd.f32 0.0, %v3479
    %v3481 = vpop.f32.mrb[0].mxu0
    %v3482 = vadd.f32 0.0, %v3481
    %v3483 = vpop.f32.mrb[0].mxu0
    %v3484 = vadd.f32 0.0, %v3483
    %v3485 = vpop.f32.mrb[0].mxu0
    %v3486 = vadd.f32 0.0, %v3485
    %3487 = vdwg.mxu0
    %3488 = vmatprep.subr.bf16.mxu0 %v2550
    %3489 = vmatpush1.bf16.msra.mxu0 %v2549
    %3490 = vmatprep.subr.bf16.mxu0 %v2558
    %3491 = vmatpush1.bf16.msra.mxu0 %v2557
    %3492 = vmatprep.subr.bf16.mxu0 %v2566
    %3493 = vmatpush1.bf16.msra.mxu0 %v2565
    %3494 = vmatprep.subr.bf16.mxu0 %v2574
    %3495 = vmatpush1.bf16.msra.mxu0 %v2573
    %3496 = vmatprep.subr.bf16.mxu0 %v2582
    %3497 = vmatpush1.bf16.msra.mxu0 %v2581
    %3498 = vmatprep.subr.bf16.mxu0 %v2590
    %3499 = vmatpush1.bf16.msra.mxu0 %v2589
    %3500 = vmatprep.subr.bf16.mxu0 %v2598
    %3501 = vmatpush1.bf16.msra.mxu0 %v2597
    %3502 = vmatprep.subr.bf16.mxu0 %v2606
    %3503 = vmatpush1.bf16.msra.mxu0 %v2605
    %3504 = vmatprep.subr.bf16.mxu0 %v2614
    %3505 = vmatpush1.bf16.msra.mxu0 %v2613
    %3506 = vmatprep.subr.bf16.mxu0 %v2622
    %3507 = vmatpush1.bf16.msra.mxu0 %v2621
    %3508 = vmatprep.subr.bf16.mxu0 %v2630
    %3509 = vmatpush1.bf16.msra.mxu0 %v2629
    %3510 = vmatprep.subr.bf16.mxu0 %v2638
    %3511 = vmatpush1.bf16.msra.mxu0 %v2637
    %3512 = vmatprep.subr.bf16.mxu0 %v2646
    %3513 = vmatpush1.bf16.msra.mxu0 %v2645
    %3514 = vmatprep.subr.bf16.mxu0 %v2654
    %3515 = vmatpush1.bf16.msra.mxu0 %v2653
    %3516 = vmatprep.subr.bf16.mxu0 %v2662
    %3517 = vmatpush1.bf16.msra.mxu0 %v2661
    %3518 = vmatprep.subr.bf16.mxu0 %v2670
    %3519 = vmatpush1.bf16.msra.mxu0 %v2669
    %3520 = vmatprep.mubr.bf16.mxu0 %v368
    %3521 = vmatmul.mubr.bf16.gmra.mrb[0].mxu0 %v367
    %v3522 = vpop.f32.mrb[0].mxu0
    %v3523 = vadd.f32 %v3480, %v3522
    %v3524 = vpop.f32.mrb[0].mxu0
    %v3525 = vadd.f32 %v3482, %v3524
    %v3526 = vpop.f32.mrb[0].mxu0
    %v3527 = vadd.f32 %v3484, %v3526
    %v3528 = vpop.f32.mrb[0].mxu0
    %v3529 = vadd.f32 %v3486, %v3528
    %3530 = vdwg.mxu0
    %3531 = vmatprep.subr.bf16.mxu0 %v2678
    %3532 = vmatpush1.bf16.msra.mxu0 %v2677
    %3533 = vmatprep.subr.bf16.mxu0 %v2686
    %3534 = vmatpush1.bf16.msra.mxu0 %v2685
    %3535 = vmatprep.subr.bf16.mxu0 %v2694
    %3536 = vmatpush1.bf16.msra.mxu0 %v2693
    %3537 = vmatprep.subr.bf16.mxu0 %v2702
    %3538 = vmatpush1.bf16.msra.mxu0 %v2701
    %3539 = vmatprep.subr.bf16.mxu0 %v2710
    %3540 = vmatpush1.bf16.msra.mxu0 %v2709
    %3541 = vmatprep.subr.bf16.mxu0 %v2718
    %3542 = vmatpush1.bf16.msra.mxu0 %v2717
    %3543 = vmatprep.subr.bf16.mxu0 %v2726
    %3544 = vmatpush1.bf16.msra.mxu0 %v2725
    %3545 = vmatprep.subr.bf16.mxu0 %v2734
    %3546 = vmatpush1.bf16.msra.mxu0 %v2733
    %3547 = vmatprep.subr.bf16.mxu0 %v2742
    %3548 = vmatpush1.bf16.msra.mxu0 %v2741
    %3549 = vmatprep.subr.bf16.mxu0 %v2750
    %3550 = vmatpush1.bf16.msra.mxu0 %v2749
    %3551 = vmatprep.subr.bf16.mxu0 %v2758
    %3552 = vmatpush1.bf16.msra.mxu0 %v2757
    %3553 = vmatprep.subr.bf16.mxu0 %v2766
    %3554 = vmatpush1.bf16.msra.mxu0 %v2765
    %3555 = vmatprep.subr.bf16.mxu0 %v2774
    %3556 = vmatpush1.bf16.msra.mxu0 %v2773
    %3557 = vmatprep.subr.bf16.mxu0 %v2782
    %3558 = vmatpush1.bf16.msra.mxu0 %v2781
    %3559 = vmatprep.subr.bf16.mxu0 %v2790
    %3560 = vmatpush1.bf16.msra.mxu0 %v2789
    %3561 = vmatprep.subr.bf16.mxu0 %v2798
    %3562 = vmatpush1.bf16.msra.mxu0 %v2797
    %3563 = vmatprep.mubr.bf16.mxu0 %v370
    %3564 = vmatmul.mubr.bf16.gmra.mrb[0].mxu0 %v369
    %v3565 = vpop.f32.mrb[0].mxu0
    %v3566 = vadd.f32 %v3523, %v3565
    %v3567 = vpop.f32.mrb[0].mxu0
    %v3568 = vadd.f32 %v3525, %v3567
    %v3569 = vpop.f32.mrb[0].mxu0
    %v3570 = vadd.f32 %v3527, %v3569
    %v3571 = vpop.f32.mrb[0].mxu0
    %v3572 = vadd.f32 %v3529, %v3571
    %3573 = vdwg.mxu0
    %3574 = vmatprep.subr.bf16.mxu0 %v2806
    %3575 = vmatpush1.bf16.msra.mxu0 %v2805
    %3576 = vmatprep.subr.bf16.mxu0 %v2814
    %3577 = vmatpush1.bf16.msra.mxu0 %v2813
    %3578 = vmatprep.subr.bf16.mxu0 %v2822
    %3579 = vmatpush1.bf16.msra.mxu0 %v2821
    %3580 = vmatprep.subr.bf16.mxu0 %v2830
    %3581 = vmatpush1.bf16.msra.mxu0 %v2829
    %3582 = vmatprep.subr.bf16.mxu0 %v2838
    %3583 = vmatpush1.bf16.msra.mxu0 %v2837
    %3584 = vmatprep.subr.bf16.mxu0 %v2846
    %3585 = vmatpush1.bf16.msra.mxu0 %v2845
    %3586 = vmatprep.subr.bf16.mxu0 %v2854
    %3587 = vmatpush1.bf16.msra.mxu0 %v2853
    %3588 = vmatprep.subr.bf16.mxu0 %v2862
    %3589 = vmatpush1.bf16.msra.mxu0 %v2861
    %3590 = vmatprep.subr.bf16.mxu0 %v2870
    %3591 = vmatpush1.bf16.msra.mxu0 %v2869
    %3592 = vmatprep.subr.bf16.mxu0 %v2878
    %3593 = vmatpush1.bf16.msra.mxu0 %v2877
    %3594 = vmatprep.subr.bf16.mxu0 %v2886
    %3595 = vmatpush1.bf16.msra.mxu0 %v2885
    %3596 = vmatprep.subr.bf16.mxu0 %v2894
    %3597 = vmatpush1.bf16.msra.mxu0 %v2893
    %3598 = vmatprep.subr.bf16.mxu0 %v2902
    %3599 = vmatpush1.bf16.msra.mxu0 %v2901
    %3600 = vmatprep.subr.bf16.mxu0 %v2910
    %3601 = vmatpush1.bf16.msra.mxu0 %v2909
    %3602 = vmatprep.subr.bf16.mxu0 %v2918
    %3603 = vmatpush1.bf16.msra.mxu0 %v2917
    %3604 = vmatprep.subr.bf16.mxu0 %v2926
    %3605 = vmatpush1.bf16.msra.mxu0 %v2925
    %3606 = vmatprep.mubr.bf16.mxu0 %v372
    %3607 = vmatmul.mubr.bf16.gmra.mrb[0].mxu0 %v371
    %v3608 = vpop.f32.mrb[0].mxu0
    %v3609 = vadd.f32 %v3566, %v3608
    %v3610 = vpop.f32.mrb[0].mxu0
    %v3611 = vadd.f32 %v3568, %v3610
    %v3612 = vpop.f32.mrb[0].mxu0
    %v3613 = vadd.f32 %v3570, %v3612
    %v3614 = vpop.f32.mrb[0].mxu0
    %v3615 = vadd.f32 %v3572, %v3614
    %3616 = vdwg.mxu0
    %3617 = vmatprep.subr.bf16.mxu0 %v2424
    %3618 = vmatpush1.bf16.msra.mxu0 %v2423
    %3619 = vmatprep.subr.bf16.mxu0 %v2432
    %3620 = vmatpush1.bf16.msra.mxu0 %v2431
    %3621 = vmatprep.subr.bf16.mxu0 %v2440
    %3622 = vmatpush1.bf16.msra.mxu0 %v2439
    %3623 = vmatprep.subr.bf16.mxu0 %v2448
    %3624 = vmatpush1.bf16.msra.mxu0 %v2447
    %3625 = vmatprep.subr.bf16.mxu0 %v2456
    %3626 = vmatpush1.bf16.msra.mxu0 %v2455
    %3627 = vmatprep.subr.bf16.mxu0 %v2464
    %3628 = vmatpush1.bf16.msra.mxu0 %v2463
    %3629 = vmatprep.subr.bf16.mxu0 %v2472
    %3630 = vmatpush1.bf16.msra.mxu0 %v2471
    %3631 = vmatprep.subr.bf16.mxu0 %v2480
    %3632 = vmatpush1.bf16.msra.mxu0 %v2479
    %3633 = vmatprep.subr.bf16.mxu0 %v2488
    %3634 = vmatpush1.bf16.msra.mxu0 %v2487
    %3635 = vmatprep.subr.bf16.mxu0 %v2496
    %3636 = vmatpush1.bf16.msra.mxu0 %v2495
    %3637 = vmatprep.subr.bf16.mxu0 %v2504
    %3638 = vmatpush1.bf16.msra.mxu0 %v2503
    %3639 = vmatprep.subr.bf16.mxu0 %v2512
    %3640 = vmatpush1.bf16.msra.mxu0 %v2511
    %3641 = vmatprep.subr.bf16.mxu0 %v2520
    %3642 = vmatpush1.bf16.msra.mxu0 %v2519
    %3643 = vmatprep.subr.bf16.mxu0 %v2528
    %3644 = vmatpush1.bf16.msra.mxu0 %v2527
    %3645 = vmatprep.subr.bf16.mxu0 %v2536
    %3646 = vmatpush1.bf16.msra.mxu0 %v2535
    %3647 = vmatprep.subr.bf16.mxu0 %v2544
    %3648 = vmatpush1.bf16.msra.mxu0 %v2543
    %3649 = vmatprep.mubr.bf16.mxu0 %v366
    %3650 = vmatmul.mubr.bf16.gmra.mrb[0].mxu0 %v365
    %v3651 = vpop.f32.mrb[0].mxu0
    %v3652 = vadd.f32 0.0, %v3651
    %v3653 = vpop.f32.mrb[0].mxu0
    %v3654 = vadd.f32 0.0, %v3653
    %v3655 = vpop.f32.mrb[0].mxu0
    %v3656 = vadd.f32 0.0, %v3655
    %v3657 = vpop.f32.mrb[0].mxu0
    %v3658 = vadd.f32 0.0, %v3657
    %3659 = vdwg.mxu0
    %3660 = vmatprep.subr.bf16.mxu0 %v2552
    %3661 = vmatpush1.bf16.msra.mxu0 %v2551
    %3662 = vmatprep.subr.bf16.mxu0 %v2560
    %3663 = vmatpush1.bf16.msra.mxu0 %v2559
    %3664 = vmatprep.subr.bf16.mxu0 %v2568
    %3665 = vmatpush1.bf16.msra.mxu0 %v2567
    %3666 = vmatprep.subr.bf16.mxu0 %v2576
    %3667 = vmatpush1.bf16.msra.mxu0 %v2575
    %3668 = vmatprep.subr.bf16.mxu0 %v2584
    %3669 = vmatpush1.bf16.msra.mxu0 %v2583
    %3670 = vmatprep.subr.bf16.mxu0 %v2592
    %3671 = vmatpush1.bf16.msra.mxu0 %v2591
    %3672 = vmatprep.subr.bf16.mxu0 %v2600
    %3673 = vmatpush1.bf16.msra.mxu0 %v2599
    %3674 = vmatprep.subr.bf16.mxu0 %v2608
    %3675 = vmatpush1.bf16.msra.mxu0 %v2607
    %3676 = vmatprep.subr.bf16.mxu0 %v2616
    %3677 = vmatpush1.bf16.msra.mxu0 %v2615
    %3678 = vmatprep.subr.bf16.mxu0 %v2624
    %3679 = vmatpush1.bf16.msra.mxu0 %v2623
    %3680 = vmatprep.subr.bf16.mxu0 %v2632
    %3681 = vmatpush1.bf16.msra.mxu0 %v2631
    %3682 = vmatprep.subr.bf16.mxu0 %v2640
    %3683 = vmatpush1.bf16.msra.mxu0 %v2639
    %3684 = vmatprep.subr.bf16.mxu0 %v2648
    %3685 = vmatpush1.bf16.msra.mxu0 %v2647
    %3686 = vmatprep.subr.bf16.mxu0 %v2656
    %3687 = vmatpush1.bf16.msra.mxu0 %v2655
    %3688 = vmatprep.subr.bf16.mxu0 %v2664
    %3689 = vmatpush1.bf16.msra.mxu0 %v2663
    %3690 = vmatprep.subr.bf16.mxu0 %v2672
    %3691 = vmatpush1.bf16.msra.mxu0 %v2671
    %3692 = vmatprep.mubr.bf16.mxu0 %v368
    %3693 = vmatmul.mubr.bf16.gmra.mrb[0].mxu0 %v367
    %v3694 = vpop.f32.mrb[0].mxu0
    %v3695 = vadd.f32 %v3652, %v3694
    %v3696 = vpop.f32.mrb[0].mxu0
    %v3697 = vadd.f32 %v3654, %v3696
    %v3698 = vpop.f32.mrb[0].mxu0
    %v3699 = vadd.f32 %v3656, %v3698
    %v3700 = vpop.f32.mrb[0].mxu0
    %v3701 = vadd.f32 %v3658, %v3700
    %3702 = vdwg.mxu0
    %3703 = vmatprep.subr.bf16.mxu0 %v2680
    %3704 = vmatpush1.bf16.msra.mxu0 %v2679
    %3705 = vmatprep.subr.bf16.mxu0 %v2688
    %3706 = vmatpush1.bf16.msra.mxu0 %v2687
    %3707 = vmatprep.subr.bf16.mxu0 %v2696
    %3708 = vmatpush1.bf16.msra.mxu0 %v2695
    %3709 = vmatprep.subr.bf16.mxu0 %v2704
    %3710 = vmatpush1.bf16.msra.mxu0 %v2703
    %3711 = vmatprep.subr.bf16.mxu0 %v2712
    %3712 = vmatpush1.bf16.msra.mxu0 %v2711
    %3713 = vmatprep.subr.bf16.mxu0 %v2720
    %3714 = vmatpush1.bf16.msra.mxu0 %v2719
    %3715 = vmatprep.subr.bf16.mxu0 %v2728
    %3716 = vmatpush1.bf16.msra.mxu0 %v2727
    %3717 = vmatprep.subr.bf16.mxu0 %v2736
    %3718 = vmatpush1.bf16.msra.mxu0 %v2735
    %3719 = vmatprep.subr.bf16.mxu0 %v2744
    %3720 = vmatpush1.bf16.msra.mxu0 %v2743
    %3721 = vmatprep.subr.bf16.mxu0 %v2752
    %3722 = vmatpush1.bf16.msra.mxu0 %v2751
    %3723 = vmatprep.subr.bf16.mxu0 %v2760
    %3724 = vmatpush1.bf16.msra.mxu0 %v2759
    %3725 = vmatprep.subr.bf16.mxu0 %v2768
    %3726 = vmatpush1.bf16.msra.mxu0 %v2767
    %3727 = vmatprep.subr.bf16.mxu0 %v2776
    %3728 = vmatpush1.bf16.msra.mxu0 %v2775
    %3729 = vmatprep.subr.bf16.mxu0 %v2784
    %3730 = vmatpush1.bf16.msra.mxu0 %v2783
    %3731 = vmatprep.subr.bf16.mxu0 %v2792
    %3732 = vmatpush1.bf16.msra.mxu0 %v2791
    %3733 = vmatprep.subr.bf16.mxu0 %v2800
    %3734 = vmatpush1.bf16.msra.mxu0 %v2799
    %3735 = vmatprep.mubr.bf16.mxu0 %v370
    %3736 = vmatmul.mubr.bf16.gmra.mrb[0].mxu0 %v369
    %v3737 = vpop.f32.mrb[0].mxu0
    %v3738 = vadd.f32 %v3695, %v3737
    %v3739 = vpop.f32.mrb[0].mxu0
    %v3740 = vadd.f32 %v3697, %v3739
    %v3741 = vpop.f32.mrb[0].mxu0
    %v3742 = vadd.f32 %v3699, %v3741
    %v3743 = vpop.f32.mrb[0].mxu0
    %v3744 = vadd.f32 %v3701, %v3743
    %3745 = vdwg.mxu0
    %3746 = vmatprep.subr.bf16.mxu0 %v2808
    %3747 = vmatpush1.bf16.msra.mxu0 %v2807
    %3748 = vmatprep.subr.bf16.mxu0 %v2816
    %3749 = vmatpush1.bf16.msra.mxu0 %v2815
    %3750 = vmatprep.subr.bf16.mxu0 %v2824
    %3751 = vmatpush1.bf16.msra.mxu0 %v2823
    %3752 = vmatprep.subr.bf16.mxu0 %v2832
    %3753 = vmatpush1.bf16.msra.mxu0 %v2831
    %3754 = vmatprep.subr.bf16.mxu0 %v2840
    %3755 = vmatpush1.bf16.msra.mxu0 %v2839
    %3756 = vmatprep.subr.bf16.mxu0 %v2848
    %3757 = vmatpush1.bf16.msra.mxu0 %v2847
    %3758 = vmatprep.subr.bf16.mxu0 %v2856
    %3759 = vmatpush1.bf16.msra.mxu0 %v2855
    %3760 = vmatprep.subr.bf16.mxu0 %v2864
    %3761 = vmatpush1.bf16.msra.mxu0 %v2863
    %3762 = vmatprep.subr.bf16.mxu0 %v2872
    %3763 = vmatpush1.bf16.msra.mxu0 %v2871
    %3764 = vmatprep.subr.bf16.mxu0 %v2880
    %3765 = vmatpush1.bf16.msra.mxu0 %v2879
    %3766 = vmatprep.subr.bf16.mxu0 %v2888
    %3767 = vmatpush1.bf16.msra.mxu0 %v2887
    %3768 = vmatprep.subr.bf16.mxu0 %v2896
    %3769 = vmatpush1.bf16.msra.mxu0 %v2895
    %3770 = vmatprep.subr.bf16.mxu0 %v2904
    %3771 = vmatpush1.bf16.msra.mxu0 %v2903
    %3772 = vmatprep.subr.bf16.mxu0 %v2912
    %3773 = vmatpush1.bf16.msra.mxu0 %v2911
    %3774 = vmatprep.subr.bf16.mxu0 %v2920
    %3775 = vmatpush1.bf16.msra.mxu0 %v2919
    %3776 = vmatprep.subr.bf16.mxu0 %v2928
    %3777 = vmatpush1.bf16.msra.mxu0 %v2927
    %3778 = vmatprep.mubr.bf16.mxu0 %v372
    %3779 = vmatmul.mubr.bf16.gmra.mrb[0].mxu0 %v371
    %v3780 = vpop.f32.mrb[0].mxu0
    %v3781 = vadd.f32 %v3738, %v3780
    %v3782 = vpop.f32.mrb[0].mxu0
    %v3783 = vadd.f32 %v3740, %v3782
    %v3784 = vpop.f32.mrb[0].mxu0
    %v3785 = vadd.f32 %v3742, %v3784
    %v3786 = vpop.f32.mrb[0].mxu0
    %v3787 = vadd.f32 %v3744, %v3786
    %3788 = vdwg.mxu0
    %3789 = vmatprep.subr.bf16.mxu0 %v2426
    %3790 = vmatpush1.bf16.msra.mxu0 %v2425
    %3791 = vmatprep.subr.bf16.mxu0 %v2434
    %3792 = vmatpush1.bf16.msra.mxu0 %v2433
    %3793 = vmatprep.subr.bf16.mxu0 %v2442
    %3794 = vmatpush1.bf16.msra.mxu0 %v2441
    %3795 = vmatprep.subr.bf16.mxu0 %v2450
    %3796 = vmatpush1.bf16.msra.mxu0 %v2449
    %3797 = vmatprep.subr.bf16.mxu0 %v2458
    %3798 = vmatpush1.bf16.msra.mxu0 %v2457
    %3799 = vmatprep.subr.bf16.mxu0 %v2466
    %3800 = vmatpush1.bf16.msra.mxu0 %v2465
    %3801 = vmatprep.subr.bf16.mxu0 %v2474
    %3802 = vmatpush1.bf16.msra.mxu0 %v2473
    %3803 = vmatprep.subr.bf16.mxu0 %v2482
    %3804 = vmatpush1.bf16.msra.mxu0 %v2481
    %3805 = vmatprep.subr.bf16.mxu0 %v2490
    %3806 = vmatpush1.bf16.msra.mxu0 %v2489
    %3807 = vmatprep.subr.bf16.mxu0 %v2498
    %3808 = vmatpush1.bf16.msra.mxu0 %v2497
    %3809 = vmatprep.subr.bf16.mxu0 %v2506
    %3810 = vmatpush1.bf16.msra.mxu0 %v2505
    %3811 = vmatprep.subr.bf16.mxu0 %v2514
    %3812 = vmatpush1.bf16.msra.mxu0 %v2513
    %3813 = vmatprep.subr.bf16.mxu0 %v2522
    %3814 = vmatpush1.bf16.msra.mxu0 %v2521
    %3815 = vmatprep.subr.bf16.mxu0 %v2530
    %3816 = vmatpush1.bf16.msra.mxu0 %v2529
    %3817 = vmatprep.subr.bf16.mxu0 %v2538
    %3818 = vmatpush1.bf16.msra.mxu0 %v2537
    %3819 = vmatprep.subr.bf16.mxu0 %v2546
    %3820 = vmatpush1.bf16.msra.mxu0 %v2545
    %3821 = vmatprep.mubr.bf16.mxu0 %v366
    %3822 = vmatmul.mubr.bf16.gmra.mrb[0].mxu0 %v365
    %v3823 = vpop.f32.mrb[0].mxu0
    %v3824 = vadd.f32 0.0, %v3823
    %v3825 = vpop.f32.mrb[0].mxu0
    %v3826 = vadd.f32 0.0, %v3825
    %v3827 = vpop.f32.mrb[0].mxu0
    %v3828 = vadd.f32 0.0, %v3827
    %v3829 = vpop.f32.mrb[0].mxu0
    %v3830 = vadd.f32 0.0, %v3829
    %3831 = vdwg.mxu0
    %3832 = vmatprep.subr.bf16.mxu0 %v2554
    %3833 = vmatpush1.bf16.msra.mxu0 %v2553
    %3834 = vmatprep.subr.bf16.mxu0 %v2562
    %3835 = vmatpush1.bf16.msra.mxu0 %v2561
    %3836 = vmatprep.subr.bf16.mxu0 %v2570
    %3837 = vmatpush1.bf16.msra.mxu0 %v2569
    %3838 = vmatprep.subr.bf16.mxu0 %v2578
    %3839 = vmatpush1.bf16.msra.mxu0 %v2577
    %3840 = vmatprep.subr.bf16.mxu0 %v2586
    %3841 = vmatpush1.bf16.msra.mxu0 %v2585
    %3842 = vmatprep.subr.bf16.mxu0 %v2594
    %3843 = vmatpush1.bf16.msra.mxu0 %v2593
    %3844 = vmatprep.subr.bf16.mxu0 %v2602
    %3845 = vmatpush1.bf16.msra.mxu0 %v2601
    %3846 = vmatprep.subr.bf16.mxu0 %v2610
    %3847 = vmatpush1.bf16.msra.mxu0 %v2609
    %3848 = vmatprep.subr.bf16.mxu0 %v2618
    %3849 = vmatpush1.bf16.msra.mxu0 %v2617
    %3850 = vmatprep.subr.bf16.mxu0 %v2626
    %3851 = vmatpush1.bf16.msra.mxu0 %v2625
    %3852 = vmatprep.subr.bf16.mxu0 %v2634
    %3853 = vmatpush1.bf16.msra.mxu0 %v2633
    %3854 = vmatprep.subr.bf16.mxu0 %v2642
    %3855 = vmatpush1.bf16.msra.mxu0 %v2641
    %3856 = vmatprep.subr.bf16.mxu0 %v2650
    %3857 = vmatpush1.bf16.msra.mxu0 %v2649
    %3858 = vmatprep.subr.bf16.mxu0 %v2658
    %3859 = vmatpush1.bf16.msra.mxu0 %v2657
    %3860 = vmatprep.subr.bf16.mxu0 %v2666
    %3861 = vmatpush1.bf16.msra.mxu0 %v2665
    %3862 = vmatprep.subr.bf16.mxu0 %v2674
    %3863 = vmatpush1.bf16.msra.mxu0 %v2673
    %3864 = vmatprep.mubr.bf16.mxu0 %v368
    %3865 = vmatmul.mubr.bf16.gmra.mrb[0].mxu0 %v367
    %v3866 = vpop.f32.mrb[0].mxu0
    %v3867 = vadd.f32 %v3824, %v3866
    %v3868 = vpop.f32.mrb[0].mxu0
    %v3869 = vadd.f32 %v3826, %v3868
    %v3870 = vpop.f32.mrb[0].mxu0
    %v3871 = vadd.f32 %v3828, %v3870
    %v3872 = vpop.f32.mrb[0].mxu0
    %v3873 = vadd.f32 %v3830, %v3872
    %3874 = vdwg.mxu0
    %3875 = vmatprep.subr.bf16.mxu0 %v2682
    %3876 = vmatpush1.bf16.msra.mxu0 %v2681
    %3877 = vmatprep.subr.bf16.mxu0 %v2690
    %3878 = vmatpush1.bf16.msra.mxu0 %v2689
    %3879 = vmatprep.subr.bf16.mxu0 %v2698
    %3880 = vmatpush1.bf16.msra.mxu0 %v2697
    %3881 = vmatprep.subr.bf16.mxu0 %v2706
    %3882 = vmatpush1.bf16.msra.mxu0 %v2705
    %3883 = vmatprep.subr.bf16.mxu0 %v2714
    %3884 = vmatpush1.bf16.msra.mxu0 %v2713
    %3885 = vmatprep.subr.bf16.mxu0 %v2722
    %3886 = vmatpush1.bf16.msra.mxu0 %v2721
    %3887 = vmatprep.subr.bf16.mxu0 %v2730
    %3888 = vmatpush1.bf16.msra.mxu0 %v2729
    %3889 = vmatprep.subr.bf16.mxu0 %v2738
    %3890 = vmatpush1.bf16.msra.mxu0 %v2737
    %3891 = vmatprep.subr.bf16.mxu0 %v2746
    %3892 = vmatpush1.bf16.msra.mxu0 %v2745
    %3893 = vmatprep.subr.bf16.mxu0 %v2754
    %3894 = vmatpush1.bf16.msra.mxu0 %v2753
    %3895 = vmatprep.subr.bf16.mxu0 %v2762
    %3896 = vmatpush1.bf16.msra.mxu0 %v2761
    %3897 = vmatprep.subr.bf16.mxu0 %v2770
    %3898 = vmatpush1.bf16.msra.mxu0 %v2769
    %3899 = vmatprep.subr.bf16.mxu0 %v2778
    %3900 = vmatpush1.bf16.msra.mxu0 %v2777
    %3901 = vmatprep.subr.bf16.mxu0 %v2786
    %3902 = vmatpush1.bf16.msra.mxu0 %v2785
    %3903 = vmatprep.subr.bf16.mxu0 %v2794
    %3904 = vmatpush1.bf16.msra.mxu0 %v2793
    %3905 = vmatprep.subr.bf16.mxu0 %v2802
    %3906 = vmatpush1.bf16.msra.mxu0 %v2801
    %3907 = vmatprep.mubr.bf16.mxu0 %v370
    %3908 = vmatmul.mubr.bf16.gmra.mrb[0].mxu0 %v369
    %v3909 = vpop.f32.mrb[0].mxu0
    %v3910 = vadd.f32 %v3867, %v3909
    %v3911 = vpop.f32.mrb[0].mxu0
    %v3912 = vadd.f32 %v3869, %v3911
    %v3913 = vpop.f32.mrb[0].mxu0
    %v3914 = vadd.f32 %v3871, %v3913
    %v3915 = vpop.f32.mrb[0].mxu0
    %v3916 = vadd.f32 %v3873, %v3915
    %3917 = vdwg.mxu0
    %3918 = vmatprep.subr.bf16.mxu0 %v2810
    %3919 = vmatpush1.bf16.msra.mxu0 %v2809
    %3920 = vmatprep.subr.bf16.mxu0 %v2818
    %3921 = vmatpush1.bf16.msra.mxu0 %v2817
    %3922 = vmatprep.subr.bf16.mxu0 %v2826
    %3923 = vmatpush1.bf16.msra.mxu0 %v2825
    %3924 = vmatprep.subr.bf16.mxu0 %v2834
    %3925 = vmatpush1.bf16.msra.mxu0 %v2833
    %3926 = vmatprep.subr.bf16.mxu0 %v2842
    %3927 = vmatpush1.bf16.msra.mxu0 %v2841
    %3928 = vmatprep.subr.bf16.mxu0 %v2850
    %3929 = vmatpush1.bf16.msra.mxu0 %v2849
    %3930 = vmatprep.subr.bf16.mxu0 %v2858
    %3931 = vmatpush1.bf16.msra.mxu0 %v2857
    %3932 = vmatprep.subr.bf16.mxu0 %v2866
    %3933 = vmatpush1.bf16.msra.mxu0 %v2865
    %3934 = vmatprep.subr.bf16.mxu0 %v2874
    %3935 = vmatpush1.bf16.msra.mxu0 %v2873
    %3936 = vmatprep.subr.bf16.mxu0 %v2882
    %3937 = vmatpush1.bf16.msra.mxu0 %v2881
    %3938 = vmatprep.subr.bf16.mxu0 %v2890
    %3939 = vmatpush1.bf16.msra.mxu0 %v2889
    %3940 = vmatprep.subr.bf16.mxu0 %v2898
    %3941 = vmatpush1.bf16.msra.mxu0 %v2897
    %3942 = vmatprep.subr.bf16.mxu0 %v2906
    %3943 = vmatpush1.bf16.msra.mxu0 %v2905
    %3944 = vmatprep.subr.bf16.mxu0 %v2914
    %3945 = vmatpush1.bf16.msra.mxu0 %v2913
    %3946 = vmatprep.subr.bf16.mxu0 %v2922
    %3947 = vmatpush1.bf16.msra.mxu0 %v2921
    %3948 = vmatprep.subr.bf16.mxu0 %v2930
    %3949 = vmatpush1.bf16.msra.mxu0 %v2929
    %3950 = vmatprep.mubr.bf16.mxu0 %v372
    %3951 = vmatmul.mubr.bf16.gmra.mrb[0].mxu0 %v371
    %v3952 = vpop.f32.mrb[0].mxu0
    %v3953 = vadd.f32 %v3910, %v3952
    %v3954 = vpop.f32.mrb[0].mxu0
    %v3955 = vadd.f32 %v3912, %v3954
    %v3956 = vpop.f32.mrb[0].mxu0
    %v3957 = vadd.f32 %v3914, %v3956
    %v3958 = vpop.f32.mrb[0].mxu0
    %v3959 = vadd.f32 %v3916, %v3958
    %3960 = vdwg.mxu0
    %3961 = vmatprep.subr.bf16.mxu0 %v2428
    %3962 = vmatpush1.bf16.msra.mxu0 %v2427
    %3963 = vmatprep.subr.bf16.mxu0 %v2436
    %3964 = vmatpush1.bf16.msra.mxu0 %v2435
    %3965 = vmatprep.subr.bf16.mxu0 %v2444
    %3966 = vmatpush1.bf16.msra.mxu0 %v2443
    %3967 = vmatprep.subr.bf16.mxu0 %v2452
    %3968 = vmatpush1.bf16.msra.mxu0 %v2451
    %3969 = vmatprep.subr.bf16.mxu0 %v2460
    %3970 = vmatpush1.bf16.msra.mxu0 %v2459
    %3971 = vmatprep.subr.bf16.mxu0 %v2468
    %3972 = vmatpush1.bf16.msra.mxu0 %v2467
    %3973 = vmatprep.subr.bf16.mxu0 %v2476
    %3974 = vmatpush1.bf16.msra.mxu0 %v2475
    %3975 = vmatprep.subr.bf16.mxu0 %v2484
    %3976 = vmatpush1.bf16.msra.mxu0 %v2483
    %3977 = vmatprep.subr.bf16.mxu0 %v2492
    %3978 = vmatpush1.bf16.msra.mxu0 %v2491
    %3979 = vmatprep.subr.bf16.mxu0 %v2500
    %3980 = vmatpush1.bf16.msra.mxu0 %v2499
    %3981 = vmatprep.subr.bf16.mxu0 %v2508
    %3982 = vmatpush1.bf16.msra.mxu0 %v2507
    %3983 = vmatprep.subr.bf16.mxu0 %v2516
    %3984 = vmatpush1.bf16.msra.mxu0 %v2515
    %3985 = vmatprep.subr.bf16.mxu0 %v2524
    %3986 = vmatpush1.bf16.msra.mxu0 %v2523
    %3987 = vmatprep.subr.bf16.mxu0 %v2532
    %3988 = vmatpush1.bf16.msra.mxu0 %v2531
    %3989 = vmatprep.subr.bf16.mxu0 %v2540
    %3990 = vmatpush1.bf16.msra.mxu0 %v2539
    %3991 = vmatprep.subr.bf16.mxu0 %v2548
    %3992 = vmatpush1.bf16.msra.mxu0 %v2547
    %3993 = vmatprep.mubr.bf16.mxu0 %v366
    %3994 = vmatmul.mubr.bf16.gmra.mrb[0].mxu0 %v365
    %v3995 = vpop.f32.mrb[0].mxu0
    %v3996 = vadd.f32 0.0, %v3995
    %v3997 = vpop.f32.mrb[0].mxu0
    %v3998 = vadd.f32 0.0, %v3997
    %v3999 = vpop.f32.mrb[0].mxu0
    %v4000 = vadd.f32 0.0, %v3999
    %v4001 = vpop.f32.mrb[0].mxu0
    %v4002 = vadd.f32 0.0, %v4001
    %4003 = vdwg.mxu0
    %4004 = vmatprep.subr.bf16.mxu0 %v2556
    %4005 = vmatpush1.bf16.msra.mxu0 %v2555
    %4006 = vmatprep.subr.bf16.mxu0 %v2564
    %4007 = vmatpush1.bf16.msra.mxu0 %v2563
    %4008 = vmatprep.subr.bf16.mxu0 %v2572
    %4009 = vmatpush1.bf16.msra.mxu0 %v2571
    %4010 = vmatprep.subr.bf16.mxu0 %v2580
    %4011 = vmatpush1.bf16.msra.mxu0 %v2579
    %4012 = vmatprep.subr.bf16.mxu0 %v2588
    %4013 = vmatpush1.bf16.msra.mxu0 %v2587
    %4014 = vmatprep.subr.bf16.mxu0 %v2596
    %4015 = vmatpush1.bf16.msra.mxu0 %v2595
    %4016 = vmatprep.subr.bf16.mxu0 %v2604
    %4017 = vmatpush1.bf16.msra.mxu0 %v2603
    %4018 = vmatprep.subr.bf16.mxu0 %v2612
    %4019 = vmatpush1.bf16.msra.mxu0 %v2611
    %4020 = vmatprep.subr.bf16.mxu0 %v2620
    %4021 = vmatpush1.bf16.msra.mxu0 %v2619
    %4022 = vmatprep.subr.bf16.mxu0 %v2628
    %4023 = vmatpush1.bf16.msra.mxu0 %v2627
    %4024 = vmatprep.subr.bf16.mxu0 %v2636
    %4025 = vmatpush1.bf16.msra.mxu0 %v2635
    %4026 = vmatprep.subr.bf16.mxu0 %v2644
    %4027 = vmatpush1.bf16.msra.mxu0 %v2643
    %4028 = vmatprep.subr.bf16.mxu0 %v2652
    %4029 = vmatpush1.bf16.msra.mxu0 %v2651
    %4030 = vmatprep.subr.bf16.mxu0 %v2660
    %4031 = vmatpush1.bf16.msra.mxu0 %v2659
    %4032 = vmatprep.subr.bf16.mxu0 %v2668
    %4033 = vmatpush1.bf16.msra.mxu0 %v2667
    %4034 = vmatprep.subr.bf16.mxu0 %v2676
    %4035 = vmatpush1.bf16.msra.mxu0 %v2675
    %4036 = vmatprep.mubr.bf16.mxu0 %v368
    %4037 = vmatmul.mubr.bf16.gmra.mrb[0].mxu0 %v367
    %v4038 = vpop.f32.mrb[0].mxu0
    %v4039 = vadd.f32 %v3996, %v4038
    %v4040 = vpop.f32.mrb[0].mxu0
    %v4041 = vadd.f32 %v3998, %v4040
    %v4042 = vpop.f32.mrb[0].mxu0
    %v4043 = vadd.f32 %v4000, %v4042
    %v4044 = vpop.f32.mrb[0].mxu0
    %v4045 = vadd.f32 %v4002, %v4044
    %4046 = vdwg.mxu0
    %4047 = vmatprep.subr.bf16.mxu0 %v2684
    %4048 = vmatpush1.bf16.msra.mxu0 %v2683
    %4049 = vmatprep.subr.bf16.mxu0 %v2692
    %4050 = vmatpush1.bf16.msra.mxu0 %v2691
    %4051 = vmatprep.subr.bf16.mxu0 %v2700
    %4052 = vmatpush1.bf16.msra.mxu0 %v2699
    %4053 = vmatprep.subr.bf16.mxu0 %v2708
    %4054 = vmatpush1.bf16.msra.mxu0 %v2707
    %4055 = vmatprep.subr.bf16.mxu0 %v2716
    %4056 = vmatpush1.bf16.msra.mxu0 %v2715
    %4057 = vmatprep.subr.bf16.mxu0 %v2724
    %4058 = vmatpush1.bf16.msra.mxu0 %v2723
    %4059 = vmatprep.subr.bf16.mxu0 %v2732
    %4060 = vmatpush1.bf16.msra.mxu0 %v2731
    %4061 = vmatprep.subr.bf16.mxu0 %v2740
    %4062 = vmatpush1.bf16.msra.mxu0 %v2739
    %4063 = vmatprep.subr.bf16.mxu0 %v2748
    %4064 = vmatpush1.bf16.msra.mxu0 %v2747
    %4065 = vmatprep.subr.bf16.mxu0 %v2756
    %4066 = vmatpush1.bf16.msra.mxu0 %v2755
    %4067 = vmatprep.subr.bf16.mxu0 %v2764
    %4068 = vmatpush1.bf16.msra.mxu0 %v2763
    %4069 = vmatprep.subr.bf16.mxu0 %v2772
    %4070 = vmatpush1.bf16.msra.mxu0 %v2771
    %4071 = vmatprep.subr.bf16.mxu0 %v2780
    %4072 = vmatpush1.bf16.msra.mxu0 %v2779
    %4073 = vmatprep.subr.bf16.mxu0 %v2788
    %4074 = vmatpush1.bf16.msra.mxu0 %v2787
    %4075 = vmatprep.subr.bf16.mxu0 %v2796
    %4076 = vmatpush1.bf16.msra.mxu0 %v2795
    %4077 = vmatprep.subr.bf16.mxu0 %v2804
    %4078 = vmatpush1.bf16.msra.mxu0 %v2803
    %4079 = vmatprep.mubr.bf16.mxu0 %v370
    %4080 = vmatmul.mubr.bf16.gmra.mrb[0].mxu0 %v369
    %v4081 = vpop.f32.mrb[0].mxu0
    %v4082 = vadd.f32 %v4039, %v4081
    %v4083 = vpop.f32.mrb[0].mxu0
    %v4084 = vadd.f32 %v4041, %v4083
    %v4085 = vpop.f32.mrb[0].mxu0
    %v4086 = vadd.f32 %v4043, %v4085
    %v4087 = vpop.f32.mrb[0].mxu0
    %v4088 = vadd.f32 %v4045, %v4087
    %4089 = vdwg.mxu0
    %4090 = vmatprep.subr.bf16.mxu0 %v2812
    %4091 = vmatpush1.bf16.msra.mxu0 %v2811
    %4092 = vmatprep.subr.bf16.mxu0 %v2820
    %4093 = vmatpush1.bf16.msra.mxu0 %v2819
    %4094 = vmatprep.subr.bf16.mxu0 %v2828
    %4095 = vmatpush1.bf16.msra.mxu0 %v2827
    %4096 = vmatprep.subr.bf16.mxu0 %v2836
    %4097 = vmatpush1.bf16.msra.mxu0 %v2835
    %4098 = vmatprep.subr.bf16.mxu0 %v2844
    %4099 = vmatpush1.bf16.msra.mxu0 %v2843
    %4100 = vmatprep.subr.bf16.mxu0 %v2852
    %4101 = vmatpush1.bf16.msra.mxu0 %v2851
    %4102 = vmatprep.subr.bf16.mxu0 %v2860
    %4103 = vmatpush1.bf16.msra.mxu0 %v2859
    %4104 = vmatprep.subr.bf16.mxu0 %v2868
    %4105 = vmatpush1.bf16.msra.mxu0 %v2867
    %4106 = vmatprep.subr.bf16.mxu0 %v2876
    %4107 = vmatpush1.bf16.msra.mxu0 %v2875
    %4108 = vmatprep.subr.bf16.mxu0 %v2884
    %4109 = vmatpush1.bf16.msra.mxu0 %v2883
    %4110 = vmatprep.subr.bf16.mxu0 %v2892
    %4111 = vmatpush1.bf16.msra.mxu0 %v2891
    %4112 = vmatprep.subr.bf16.mxu0 %v2900
    %4113 = vmatpush1.bf16.msra.mxu0 %v2899
    %4114 = vmatprep.subr.bf16.mxu0 %v2908
    %4115 = vmatpush1.bf16.msra.mxu0 %v2907
    %4116 = vmatprep.subr.bf16.mxu0 %v2916
    %4117 = vmatpush1.bf16.msra.mxu0 %v2915
    %4118 = vmatprep.subr.bf16.mxu0 %v2924
    %4119 = vmatpush1.bf16.msra.mxu0 %v2923
    %4120 = vmatprep.subr.bf16.mxu0 %v2932
    %4121 = vmatpush1.bf16.msra.mxu0 %v2931
    %4122 = vmatprep.mubr.bf16.mxu0 %v372
    %4123 = vmatmul.mubr.bf16.gmra.mrb[0].mxu0 %v371
    %v4124 = vpop.f32.mrb[0].mxu0
    %v4125 = vadd.f32 %v4082, %v4124
    %v4126 = vpop.f32.mrb[0].mxu0
    %v4127 = vadd.f32 %v4084, %v4126
    %v4128 = vpop.f32.mrb[0].mxu0
    %v4129 = vadd.f32 %v4086, %v4128
    %v4130 = vpop.f32.mrb[0].mxu0
    %v4131 = vadd.f32 %v4088, %v4130
    %4132 = vdwg.mxu0
    %v4133 = vmax.f32 %v3609, 0.0
    %v4134 = vmax.f32 %v3611, 0.0
    %v4135 = vmax.f32 %v3781, 0.0
    %v4136 = vmax.f32 %v3783, 0.0
    %v4137 = vmax.f32 %v3953, 0.0
    %v4138 = vmax.f32 %v3955, 0.0
    %v4139 = vmax.f32 %v4125, 0.0
    %v4140 = vmax.f32 %v4127, 0.0
    %v4141 = vmax.f32 %v3613, 0.0
    %v4142 = vmax.f32 %v3615, 0.0
    %v4143 = vmax.f32 %v3785, 0.0
    %v4144 = vmax.f32 %v3787, 0.0
    %v4145 = vmax.f32 %v3957, 0.0
    %v4146 = vmax.f32 %v3959, 0.0
    %v4147 = vmax.f32 %v4129, 0.0
    %v4148 = vmax.f32 %v4131, 0.0
    %v4149 = vpack.c.bf16 %v4141, %v4133
    %v4150 = vpack.c.bf16 %v4142, %v4134
    %v4151 = vpack.c.bf16 %v4143, %v4135
    %v4152 = vpack.c.bf16 %v4144, %v4136
    %v4153 = vpack.c.bf16 %v4145, %v4137
    %v4154 = vpack.c.bf16 %v4146, %v4138
    %v4155 = vpack.c.bf16 %v4147, %v4139
    %v4156 = vpack.c.bf16 %v4148, %v4140
    %v4157 = vld [vmem:[#allocation8] sm:$0xf]
    %v4158 = vld [vmem:[#allocation8 + $0x4] sm:$0xf]
    %v4159 = vld [vmem:[#allocation8 + $0x8] sm:$0xf]
    %v4160 = vld [vmem:[#allocation8 + $0xc] sm:$0xf]
    %v4161 = vld [vmem:[#allocation8 + $0x10] sm:$0xf]
    %v4162 = vld [vmem:[#allocation8 + $0x14] sm:$0xf]
    %v4163 = vld [vmem:[#allocation8 + $0x18] sm:$0xf]
    %v4164 = vld [vmem:[#allocation8 + $0x1c] sm:$0xf]
    %v4165 = vld [vmem:[#allocation8 + $0x20] sm:$0xf]
    %v4166 = vld [vmem:[#allocation8 + $0x24] sm:$0xf]
    %v4167 = vld [vmem:[#allocation8 + $0x28] sm:$0xf]
    %v4168 = vld [vmem:[#allocation8 + $0x2c] sm:$0xf]
    %v4169 = vld [vmem:[#allocation8 + $0x30] sm:$0xf]
    %v4170 = vld [vmem:[#allocation8 + $0x34] sm:$0xf]
    %v4171 = vld [vmem:[#allocation8 + $0x38] sm:$0xf]
    %v4172 = vld [vmem:[#allocation8 + $0x3c] sm:$0xf]
    %v4173 = vld [vmem:[#allocation8 + $0x40] sm:$0xf]
    %v4174 = vld [vmem:[#allocation8 + $0x44] sm:$0xf]
    %v4175 = vld [vmem:[#allocation8 + $0x48] sm:$0xf]
    %v4176 = vld [vmem:[#allocation8 + $0x4c] sm:$0xf]
    %v4177 = vld [vmem:[#allocation8 + $0x50] sm:$0xf]
    %v4178 = vld [vmem:[#allocation8 + $0x54] sm:$0xf]
    %v4179 = vld [vmem:[#allocation8 + $0x58] sm:$0xf]
    %v4180 = vld [vmem:[#allocation8 + $0x5c] sm:$0xf]
    %v4181 = vld [vmem:[#allocation8 + $0x60] sm:$0xf]
    %v4182 = vld [vmem:[#allocation8 + $0x64] sm:$0xf]
    %v4183 = vld [vmem:[#allocation8 + $0x68] sm:$0xf]
    %v4184 = vld [vmem:[#allocation8 + $0x6c] sm:$0xf]
    %v4185 = vld [vmem:[#allocation8 + $0x70] sm:$0xf]
    %v4186 = vld [vmem:[#allocation8 + $0x74] sm:$0xf]
    %v4187 = vld [vmem:[#allocation8 + $0x78] sm:$0xf]
    %v4188 = vld [vmem:[#allocation8 + $0x7c] sm:$0xf]
    %v4189 = vld [vmem:[#allocation8 + $0x80] sm:$0xf]
    %v4190 = vld [vmem:[#allocation8 + $0x84] sm:$0xf]
    %v4191 = vld [vmem:[#allocation8 + $0x88] sm:$0xf]
    %v4192 = vld [vmem:[#allocation8 + $0x8c] sm:$0xf]
    %v4193 = vld [vmem:[#allocation8 + $0x90] sm:$0xf]
    %v4194 = vld [vmem:[#allocation8 + $0x94] sm:$0xf]
    %v4195 = vld [vmem:[#allocation8 + $0x98] sm:$0xf]
    %v4196 = vld [vmem:[#allocation8 + $0x9c] sm:$0xf]
    %v4197 = vld [vmem:[#allocation8 + $0xa0] sm:$0xf]
    %v4198 = vld [vmem:[#allocation8 + $0xa4] sm:$0xf]
    %v4199 = vld [vmem:[#allocation8 + $0xa8] sm:$0xf]
    %v4200 = vld [vmem:[#allocation8 + $0xac] sm:$0xf]
    %v4201 = vld [vmem:[#allocation8 + $0xb0] sm:$0xf]
    %v4202 = vld [vmem:[#allocation8 + $0xb4] sm:$0xf]
    %v4203 = vld [vmem:[#allocation8 + $0xb8] sm:$0xf]
    %v4204 = vld [vmem:[#allocation8 + $0xbc] sm:$0xf]
    %v4205 = vld [vmem:[#allocation8 + $0xc0] sm:$0xf]
    %v4206 = vld [vmem:[#allocation8 + $0xc4] sm:$0xf]
    %v4207 = vld [vmem:[#allocation8 + $0xc8] sm:$0xf]
    %v4208 = vld [vmem:[#allocation8 + $0xcc] sm:$0xf]
    %v4209 = vld [vmem:[#allocation8 + $0xd0] sm:$0xf]
    %v4210 = vld [vmem:[#allocation8 + $0xd4] sm:$0xf]
    %v4211 = vld [vmem:[#allocation8 + $0xd8] sm:$0xf]
    %v4212 = vld [vmem:[#allocation8 + $0xdc] sm:$0xf]
    %v4213 = vld [vmem:[#allocation8 + $0xe0] sm:$0xf]
    %v4214 = vld [vmem:[#allocation8 + $0xe4] sm:$0xf]
    %v4215 = vld [vmem:[#allocation8 + $0xe8] sm:$0xf]
    %v4216 = vld [vmem:[#allocation8 + $0xec] sm:$0xf]
    %v4217 = vld [vmem:[#allocation8 + $0xf0] sm:$0xf]
    %v4218 = vld [vmem:[#allocation8 + $0xf4] sm:$0xf]
    %v4219 = vld [vmem:[#allocation8 + $0xf8] sm:$0xf]
    %v4220 = vld [vmem:[#allocation8 + $0xfc] sm:$0xf]
    %v4221 = vld [vmem:[#allocation8 + $0x100] sm:$0xf]
    %v4222 = vld [vmem:[#allocation8 + $0x104] sm:$0xf]
    %v4223 = vld [vmem:[#allocation8 + $0x108] sm:$0xf]
    %v4224 = vld [vmem:[#allocation8 + $0x10c] sm:$0xf]
    %v4225 = vld [vmem:[#allocation8 + $0x110] sm:$0xf]
    %v4226 = vld [vmem:[#allocation8 + $0x114] sm:$0xf]
    %v4227 = vld [vmem:[#allocation8 + $0x118] sm:$0xf]
    %v4228 = vld [vmem:[#allocation8 + $0x11c] sm:$0xf]
    %v4229 = vld [vmem:[#allocation8 + $0x120] sm:$0xf]
    %v4230 = vld [vmem:[#allocation8 + $0x124] sm:$0xf]
    %v4231 = vld [vmem:[#allocation8 + $0x128] sm:$0xf]
    %v4232 = vld [vmem:[#allocation8 + $0x12c] sm:$0xf]
    %v4233 = vld [vmem:[#allocation8 + $0x130] sm:$0xf]
    %v4234 = vld [vmem:[#allocation8 + $0x134] sm:$0xf]
    %v4235 = vld [vmem:[#allocation8 + $0x138] sm:$0xf]
    %v4236 = vld [vmem:[#allocation8 + $0x13c] sm:$0xf]
    %v4237 = vld [vmem:[#allocation8 + $0x140] sm:$0xf]
    %v4238 = vld [vmem:[#allocation8 + $0x144] sm:$0xf]
    %v4239 = vld [vmem:[#allocation8 + $0x148] sm:$0xf]
    %v4240 = vld [vmem:[#allocation8 + $0x14c] sm:$0xf]
    %v4241 = vld [vmem:[#allocation8 + $0x150] sm:$0xf]
    %v4242 = vld [vmem:[#allocation8 + $0x154] sm:$0xf]
    %v4243 = vld [vmem:[#allocation8 + $0x158] sm:$0xf]
    %v4244 = vld [vmem:[#allocation8 + $0x15c] sm:$0xf]
    %v4245 = vld [vmem:[#allocation8 + $0x160] sm:$0xf]
    %v4246 = vld [vmem:[#allocation8 + $0x164] sm:$0xf]
    %v4247 = vld [vmem:[#allocation8 + $0x168] sm:$0xf]
    %v4248 = vld [vmem:[#allocation8 + $0x16c] sm:$0xf]
    %v4249 = vld [vmem:[#allocation8 + $0x170] sm:$0xf]
    %v4250 = vld [vmem:[#allocation8 + $0x174] sm:$0xf]
    %v4251 = vld [vmem:[#allocation8 + $0x178] sm:$0xf]
    %v4252 = vld [vmem:[#allocation8 + $0x17c] sm:$0xf]
    %v4253 = vld [vmem:[#allocation8 + $0x180] sm:$0xf]
    %v4254 = vld [vmem:[#allocation8 + $0x184] sm:$0xf]
    %v4255 = vld [vmem:[#allocation8 + $0x188] sm:$0xf]
    %v4256 = vld [vmem:[#allocation8 + $0x18c] sm:$0xf]
    %v4257 = vld [vmem:[#allocation8 + $0x190] sm:$0xf]
    %v4258 = vld [vmem:[#allocation8 + $0x194] sm:$0xf]
    %v4259 = vld [vmem:[#allocation8 + $0x198] sm:$0xf]
    %v4260 = vld [vmem:[#allocation8 + $0x19c] sm:$0xf]
    %v4261 = vld [vmem:[#allocation8 + $0x1a0] sm:$0xf]
    %v4262 = vld [vmem:[#allocation8 + $0x1a4] sm:$0xf]
    %v4263 = vld [vmem:[#allocation8 + $0x1a8] sm:$0xf]
    %v4264 = vld [vmem:[#allocation8 + $0x1ac] sm:$0xf]
    %v4265 = vld [vmem:[#allocation8 + $0x1b0] sm:$0xf]
    %v4266 = vld [vmem:[#allocation8 + $0x1b4] sm:$0xf]
    %v4267 = vld [vmem:[#allocation8 + $0x1b8] sm:$0xf]
    %v4268 = vld [vmem:[#allocation8 + $0x1bc] sm:$0xf]
    %v4269 = vld [vmem:[#allocation8 + $0x1c0] sm:$0xf]
    %v4270 = vld [vmem:[#allocation8 + $0x1c4] sm:$0xf]
    %v4271 = vld [vmem:[#allocation8 + $0x1c8] sm:$0xf]
    %v4272 = vld [vmem:[#allocation8 + $0x1cc] sm:$0xf]
    %v4273 = vld [vmem:[#allocation8 + $0x1d0] sm:$0xf]
    %v4274 = vld [vmem:[#allocation8 + $0x1d4] sm:$0xf]
    %v4275 = vld [vmem:[#allocation8 + $0x1d8] sm:$0xf]
    %v4276 = vld [vmem:[#allocation8 + $0x1dc] sm:$0xf]
    %v4277 = vld [vmem:[#allocation8 + $0x1e0] sm:$0xf]
    %v4278 = vld [vmem:[#allocation8 + $0x1e4] sm:$0xf]
    %v4279 = vld [vmem:[#allocation8 + $0x1e8] sm:$0xf]
    %v4280 = vld [vmem:[#allocation8 + $0x1ec] sm:$0xf]
    %v4281 = vld [vmem:[#allocation8 + $0x1f0] sm:$0xf]
    %v4282 = vld [vmem:[#allocation8 + $0x1f4] sm:$0xf]
    %v4283 = vld [vmem:[#allocation8 + $0x1f8] sm:$0xf]
    %v4284 = vld [vmem:[#allocation8 + $0x1fc] sm:$0xf]
    %v4413 = vunpack.c.l.b16 %v4157
    %v4414 = vunpack.c.l.b16 %v4158
    %v4415 = vunpack.c.l.b16 %v4159
    %v4416 = vunpack.c.l.b16 %v4160
    %v4417 = vunpack.c.l.b16 %v4161
    %v4418 = vunpack.c.l.b16 %v4162
    %v4419 = vunpack.c.l.b16 %v4163
    %v4420 = vunpack.c.l.b16 %v4164
    %v4421 = vunpack.c.l.b16 %v4165
    %v4422 = vunpack.c.l.b16 %v4166
    %v4423 = vunpack.c.l.b16 %v4167
    %v4424 = vunpack.c.l.b16 %v4168
    %v4425 = vunpack.c.l.b16 %v4169
    %v4426 = vunpack.c.l.b16 %v4170
    %v4427 = vunpack.c.l.b16 %v4171
    %v4428 = vunpack.c.l.b16 %v4172
    %v4429 = vunpack.c.l.b16 %v4173
    %v4430 = vunpack.c.l.b16 %v4174
    %v4431 = vunpack.c.l.b16 %v4175
    %v4432 = vunpack.c.l.b16 %v4176
    %v4433 = vunpack.c.l.b16 %v4177
    %v4434 = vunpack.c.l.b16 %v4178
    %v4435 = vunpack.c.l.b16 %v4179
    %v4436 = vunpack.c.l.b16 %v4180
    %v4437 = vunpack.c.l.b16 %v4181
    %v4438 = vunpack.c.l.b16 %v4182
    %v4439 = vunpack.c.l.b16 %v4183
    %v4440 = vunpack.c.l.b16 %v4184
    %v4441 = vunpack.c.l.b16 %v4185
    %v4442 = vunpack.c.l.b16 %v4186
    %v4443 = vunpack.c.l.b16 %v4187
    %v4444 = vunpack.c.l.b16 %v4188
    %v4445 = vunpack.c.l.b16 %v4189
    %v4446 = vunpack.c.l.b16 %v4190
    %v4447 = vunpack.c.l.b16 %v4191
    %v4448 = vunpack.c.l.b16 %v4192
    %v4449 = vunpack.c.l.b16 %v4193
    %v4450 = vunpack.c.l.b16 %v4194
    %v4451 = vunpack.c.l.b16 %v4195
    %v4452 = vunpack.c.l.b16 %v4196
    %v4453 = vunpack.c.l.b16 %v4197
    %v4454 = vunpack.c.l.b16 %v4198
    %v4455 = vunpack.c.l.b16 %v4199
    %v4456 = vunpack.c.l.b16 %v4200
    %v4457 = vunpack.c.l.b16 %v4201
    %v4458 = vunpack.c.l.b16 %v4202
    %v4459 = vunpack.c.l.b16 %v4203
    %v4460 = vunpack.c.l.b16 %v4204
    %v4461 = vunpack.c.l.b16 %v4205
    %v4462 = vunpack.c.l.b16 %v4206
    %v4463 = vunpack.c.l.b16 %v4207
    %v4464 = vunpack.c.l.b16 %v4208
    %v4465 = vunpack.c.l.b16 %v4209
    %v4466 = vunpack.c.l.b16 %v4210
    %v4467 = vunpack.c.l.b16 %v4211
    %v4468 = vunpack.c.l.b16 %v4212
    %v4469 = vunpack.c.l.b16 %v4213
    %v4470 = vunpack.c.l.b16 %v4214
    %v4471 = vunpack.c.l.b16 %v4215
    %v4472 = vunpack.c.l.b16 %v4216
    %v4473 = vunpack.c.l.b16 %v4217
    %v4474 = vunpack.c.l.b16 %v4218
    %v4475 = vunpack.c.l.b16 %v4219
    %v4476 = vunpack.c.l.b16 %v4220
    %v4477 = vunpack.c.l.b16 %v4221
    %v4478 = vunpack.c.l.b16 %v4222
    %v4479 = vunpack.c.l.b16 %v4223
    %v4480 = vunpack.c.l.b16 %v4224
    %v4481 = vunpack.c.l.b16 %v4225
    %v4482 = vunpack.c.l.b16 %v4226
    %v4483 = vunpack.c.l.b16 %v4227
    %v4484 = vunpack.c.l.b16 %v4228
    %v4485 = vunpack.c.l.b16 %v4229
    %v4486 = vunpack.c.l.b16 %v4230
    %v4487 = vunpack.c.l.b16 %v4231
    %v4488 = vunpack.c.l.b16 %v4232
    %v4489 = vunpack.c.l.b16 %v4233
    %v4490 = vunpack.c.l.b16 %v4234
    %v4491 = vunpack.c.l.b16 %v4235
    %v4492 = vunpack.c.l.b16 %v4236
    %v4493 = vunpack.c.l.b16 %v4237
    %v4494 = vunpack.c.l.b16 %v4238
    %v4495 = vunpack.c.l.b16 %v4239
    %v4496 = vunpack.c.l.b16 %v4240
    %v4497 = vunpack.c.l.b16 %v4241
    %v4498 = vunpack.c.l.b16 %v4242
    %v4499 = vunpack.c.l.b16 %v4243
    %v4500 = vunpack.c.l.b16 %v4244
    %v4501 = vunpack.c.l.b16 %v4245
    %v4502 = vunpack.c.l.b16 %v4246
    %v4503 = vunpack.c.l.b16 %v4247
    %v4504 = vunpack.c.l.b16 %v4248
    %v4505 = vunpack.c.l.b16 %v4249
    %v4506 = vunpack.c.l.b16 %v4250
    %v4507 = vunpack.c.l.b16 %v4251
    %v4508 = vunpack.c.l.b16 %v4252
    %v4509 = vunpack.c.l.b16 %v4253
    %v4510 = vunpack.c.l.b16 %v4254
    %v4511 = vunpack.c.l.b16 %v4255
    %v4512 = vunpack.c.l.b16 %v4256
    %v4513 = vunpack.c.l.b16 %v4257
    %v4514 = vunpack.c.l.b16 %v4258
    %v4515 = vunpack.c.l.b16 %v4259
    %v4516 = vunpack.c.l.b16 %v4260
    %v4517 = vunpack.c.l.b16 %v4261
    %v4518 = vunpack.c.l.b16 %v4262
    %v4519 = vunpack.c.l.b16 %v4263
    %v4520 = vunpack.c.l.b16 %v4264
    %v4521 = vunpack.c.l.b16 %v4265
    %v4522 = vunpack.c.l.b16 %v4266
    %v4523 = vunpack.c.l.b16 %v4267
    %v4524 = vunpack.c.l.b16 %v4268
    %v4525 = vunpack.c.l.b16 %v4269
    %v4526 = vunpack.c.l.b16 %v4270
    %v4527 = vunpack.c.l.b16 %v4271
    %v4528 = vunpack.c.l.b16 %v4272
    %v4529 = vunpack.c.l.b16 %v4273
    %v4530 = vunpack.c.l.b16 %v4274
    %v4531 = vunpack.c.l.b16 %v4275
    %v4532 = vunpack.c.l.b16 %v4276
    %v4533 = vunpack.c.l.b16 %v4277
    %v4534 = vunpack.c.l.b16 %v4278
    %v4535 = vunpack.c.l.b16 %v4279
    %v4536 = vunpack.c.l.b16 %v4280
    %v4537 = vunpack.c.l.b16 %v4281
    %v4538 = vunpack.c.l.b16 %v4282
    %v4539 = vunpack.c.l.b16 %v4283
    %v4540 = vunpack.c.l.b16 %v4284
    %v4541 = vpack.c.b16 %v4414, %v4413
    %v4542 = vpack.c.b16 %v4416, %v4415
    %v4543 = vpack.c.b16 %v4418, %v4417
    %v4544 = vpack.c.b16 %v4420, %v4419
    %v4545 = vpack.c.b16 %v4422, %v4421
    %v4546 = vpack.c.b16 %v4424, %v4423
    %v4547 = vpack.c.b16 %v4426, %v4425
    %v4548 = vpack.c.b16 %v4428, %v4427
    %v4549 = vpack.c.b16 %v4430, %v4429
    %v4550 = vpack.c.b16 %v4432, %v4431
    %v4551 = vpack.c.b16 %v4434, %v4433
    %v4552 = vpack.c.b16 %v4436, %v4435
    %v4553 = vpack.c.b16 %v4438, %v4437
    %v4554 = vpack.c.b16 %v4440, %v4439
    %v4555 = vpack.c.b16 %v4442, %v4441
    %v4556 = vpack.c.b16 %v4444, %v4443
    %v4557 = vpack.c.b16 %v4446, %v4445
    %v4558 = vpack.c.b16 %v4448, %v4447
    %v4559 = vpack.c.b16 %v4450, %v4449
    %v4560 = vpack.c.b16 %v4452, %v4451
    %v4561 = vpack.c.b16 %v4454, %v4453
    %v4562 = vpack.c.b16 %v4456, %v4455
    %v4563 = vpack.c.b16 %v4458, %v4457
    %v4564 = vpack.c.b16 %v4460, %v4459
    %v4565 = vpack.c.b16 %v4462, %v4461
    %v4566 = vpack.c.b16 %v4464, %v4463
    %v4567 = vpack.c.b16 %v4466, %v4465
    %v4568 = vpack.c.b16 %v4468, %v4467
    %v4569 = vpack.c.b16 %v4470, %v4469
    %v4570 = vpack.c.b16 %v4472, %v4471
    %v4571 = vpack.c.b16 %v4474, %v4473
    %v4572 = vpack.c.b16 %v4476, %v4475
    %v4573 = vpack.c.b16 %v4478, %v4477
    %v4574 = vpack.c.b16 %v4480, %v4479
    %v4575 = vpack.c.b16 %v4482, %v4481
    %v4576 = vpack.c.b16 %v4484, %v4483
    %v4577 = vpack.c.b16 %v4486, %v4485
    %v4578 = vpack.c.b16 %v4488, %v4487
    %v4579 = vpack.c.b16 %v4490, %v4489
    %v4580 = vpack.c.b16 %v4492, %v4491
    %v4581 = vpack.c.b16 %v4494, %v4493
    %v4582 = vpack.c.b16 %v4496, %v4495
    %v4583 = vpack.c.b16 %v4498, %v4497
    %v4584 = vpack.c.b16 %v4500, %v4499
    %v4585 = vpack.c.b16 %v4502, %v4501
    %v4586 = vpack.c.b16 %v4504, %v4503
    %v4587 = vpack.c.b16 %v4506, %v4505
    %v4588 = vpack.c.b16 %v4508, %v4507
    %v4589 = vpack.c.b16 %v4510, %v4509
    %v4590 = vpack.c.b16 %v4512, %v4511
    %v4591 = vpack.c.b16 %v4514, %v4513
    %v4592 = vpack.c.b16 %v4516, %v4515
    %v4593 = vpack.c.b16 %v4518, %v4517
    %v4594 = vpack.c.b16 %v4520, %v4519
    %v4595 = vpack.c.b16 %v4522, %v4521
    %v4596 = vpack.c.b16 %v4524, %v4523
    %v4597 = vpack.c.b16 %v4526, %v4525
    %v4598 = vpack.c.b16 %v4528, %v4527
    %v4599 = vpack.c.b16 %v4530, %v4529
    %v4600 = vpack.c.b16 %v4532, %v4531
    %v4601 = vpack.c.b16 %v4534, %v4533
    %v4602 = vpack.c.b16 %v4536, %v4535
    %v4603 = vpack.c.b16 %v4538, %v4537
    %v4604 = vpack.c.b16 %v4540, %v4539
    %4669 = vmatprep.subr.bf16.mxu0 0
    %4670 = vmatpush1.bf16.msra.mxu0 %v4541
    %4671 = vmatprep.subr.bf16.mxu0 0
    %4672 = vmatpush1.bf16.msra.mxu0 %v4542
    %4673 = vmatprep.subr.bf16.mxu0 0
    %4674 = vmatpush1.bf16.msra.mxu0 %v4543
    %4675 = vmatprep.subr.bf16.mxu0 0
    %4676 = vmatpush1.bf16.msra.mxu0 %v4544
    %4677 = vmatprep.subr.bf16.mxu0 0
    %4678 = vmatpush1.bf16.msra.mxu0 %v4545
    %4679 = vmatprep.subr.bf16.mxu0 0
    %4680 = vmatpush1.bf16.msra.mxu0 %v4546
    %4681 = vmatprep.subr.bf16.mxu0 0
    %4682 = vmatpush1.bf16.msra.mxu0 %v4547
    %4683 = vmatprep.subr.bf16.mxu0 0
    %4684 = vmatpush1.bf16.msra.mxu0 %v4548
    %4685 = vmatprep.subr.bf16.mxu0 0
    %4686 = vmatpush1.bf16.msra.mxu0 %v4549
    %4687 = vmatprep.subr.bf16.mxu0 0
    %4688 = vmatpush1.bf16.msra.mxu0 %v4550
    %4689 = vmatprep.subr.bf16.mxu0 0
    %4690 = vmatpush1.bf16.msra.mxu0 %v4551
    %4691 = vmatprep.subr.bf16.mxu0 0
    %4692 = vmatpush1.bf16.msra.mxu0 %v4552
    %4693 = vmatprep.subr.bf16.mxu0 0
    %4694 = vmatpush1.bf16.msra.mxu0 %v4553
    %4695 = vmatprep.subr.bf16.mxu0 0
    %4696 = vmatpush1.bf16.msra.mxu0 %v4554
    %4697 = vmatprep.subr.bf16.mxu0 0
    %4698 = vmatpush1.bf16.msra.mxu0 %v4555
    %4699 = vmatprep.subr.bf16.mxu0 0
    %4700 = vmatpush1.bf16.msra.mxu0 %v4556
    %4701 = vmatprep.mubr.bf16.mxu0 %v4150
    %4702 = vmatmul.mubr.bf16.gmra.mrb[0].mxu0 %v4149
    %v4703 = vpop.f32.mrb[0].mxu0
    %v4704 = vadd.f32 0.0, %v4703
    %v4705 = vpop.f32.mrb[0].mxu0
    %v4706 = vpop.f32.mrb[0].mxu0
    %v4707 = vadd.f32 0.0, %v4706
    %v4708 = vpop.f32.mrb[0].mxu0
    %4709 = vdwg.mxu0
    %4710 = vmatprep.subr.bf16.mxu0 0
    %4711 = vmatpush1.bf16.msra.mxu0 %v4557
    %4712 = vmatprep.subr.bf16.mxu0 0
    %4713 = vmatpush1.bf16.msra.mxu0 %v4558
    %4714 = vmatprep.subr.bf16.mxu0 0
    %4715 = vmatpush1.bf16.msra.mxu0 %v4559
    %4716 = vmatprep.subr.bf16.mxu0 0
    %4717 = vmatpush1.bf16.msra.mxu0 %v4560
    %4718 = vmatprep.subr.bf16.mxu0 0
    %4719 = vmatpush1.bf16.msra.mxu0 %v4561
    %4720 = vmatprep.subr.bf16.mxu0 0
    %4721 = vmatpush1.bf16.msra.mxu0 %v4562
    %4722 = vmatprep.subr.bf16.mxu0 0
    %4723 = vmatpush1.bf16.msra.mxu0 %v4563
    %4724 = vmatprep.subr.bf16.mxu0 0
    %4725 = vmatpush1.bf16.msra.mxu0 %v4564
    %4726 = vmatprep.subr.bf16.mxu0 0
    %4727 = vmatpush1.bf16.msra.mxu0 %v4565
    %4728 = vmatprep.subr.bf16.mxu0 0
    %4729 = vmatpush1.bf16.msra.mxu0 %v4566
    %4730 = vmatprep.subr.bf16.mxu0 0
    %4731 = vmatpush1.bf16.msra.mxu0 %v4567
    %4732 = vmatprep.subr.bf16.mxu0 0
    %4733 = vmatpush1.bf16.msra.mxu0 %v4568
    %4734 = vmatprep.subr.bf16.mxu0 0
    %4735 = vmatpush1.bf16.msra.mxu0 %v4569
    %4736 = vmatprep.subr.bf16.mxu0 0
    %4737 = vmatpush1.bf16.msra.mxu0 %v4570
    %4738 = vmatprep.subr.bf16.mxu0 0
    %4739 = vmatpush1.bf16.msra.mxu0 %v4571
    %4740 = vmatprep.subr.bf16.mxu0 0
    %4741 = vmatpush1.bf16.msra.mxu0 %v4572
    %4742 = vmatprep.mubr.bf16.mxu0 %v4152
    %4743 = vmatmul.mubr.bf16.gmra.mrb[0].mxu0 %v4151
    %v4744 = vpop.f32.mrb[0].mxu0
    %v4745 = vadd.f32 %v4704, %v4744
    %v4746 = vpop.f32.mrb[0].mxu0
    %v4747 = vpop.f32.mrb[0].mxu0
    %v4748 = vadd.f32 %v4707, %v4747
    %v4749 = vpop.f32.mrb[0].mxu0
    %4750 = vdwg.mxu0
    %4751 = vmatprep.subr.bf16.mxu0 0
    %4752 = vmatpush1.bf16.msra.mxu0 %v4573
    %4753 = vmatprep.subr.bf16.mxu0 0
    %4754 = vmatpush1.bf16.msra.mxu0 %v4574
    %4755 = vmatprep.subr.bf16.mxu0 0
    %4756 = vmatpush1.bf16.msra.mxu0 %v4575
    %4757 = vmatprep.subr.bf16.mxu0 0
    %4758 = vmatpush1.bf16.msra.mxu0 %v4576
    %4759 = vmatprep.subr.bf16.mxu0 0
    %4760 = vmatpush1.bf16.msra.mxu0 %v4577
    %4761 = vmatprep.subr.bf16.mxu0 0
    %4762 = vmatpush1.bf16.msra.mxu0 %v4578
    %4763 = vmatprep.subr.bf16.mxu0 0
    %4764 = vmatpush1.bf16.msra.mxu0 %v4579
    %4765 = vmatprep.subr.bf16.mxu0 0
    %4766 = vmatpush1.bf16.msra.mxu0 %v4580
    %4767 = vmatprep.subr.bf16.mxu0 0
    %4768 = vmatpush1.bf16.msra.mxu0 %v4581
    %4769 = vmatprep.subr.bf16.mxu0 0
    %4770 = vmatpush1.bf16.msra.mxu0 %v4582
    %4771 = vmatprep.subr.bf16.mxu0 0
    %4772 = vmatpush1.bf16.msra.mxu0 %v4583
    %4773 = vmatprep.subr.bf16.mxu0 0
    %4774 = vmatpush1.bf16.msra.mxu0 %v4584
    %4775 = vmatprep.subr.bf16.mxu0 0
    %4776 = vmatpush1.bf16.msra.mxu0 %v4585
    %4777 = vmatprep.subr.bf16.mxu0 0
    %4778 = vmatpush1.bf16.msra.mxu0 %v4586
    %4779 = vmatprep.subr.bf16.mxu0 0
    %4780 = vmatpush1.bf16.msra.mxu0 %v4587
    %4781 = vmatprep.subr.bf16.mxu0 0
    %4782 = vmatpush1.bf16.msra.mxu0 %v4588
    %4783 = vmatprep.mubr.bf16.mxu0 %v4154
    %4784 = vmatmul.mubr.bf16.gmra.mrb[0].mxu0 %v4153
    %v4785 = vpop.f32.mrb[0].mxu0
    %v4786 = vadd.f32 %v4745, %v4785
    %v4787 = vpop.f32.mrb[0].mxu0
    %v4788 = vpop.f32.mrb[0].mxu0
    %v4789 = vadd.f32 %v4748, %v4788
    %v4790 = vpop.f32.mrb[0].mxu0
    %4791 = vdwg.mxu0
    %4792 = vmatprep.subr.bf16.mxu0 0
    %4793 = vmatpush1.bf16.msra.mxu0 %v4589
    %4794 = vmatprep.subr.bf16.mxu0 0
    %4795 = vmatpush1.bf16.msra.mxu0 %v4590
    %4796 = vmatprep.subr.bf16.mxu0 0
    %4797 = vmatpush1.bf16.msra.mxu0 %v4591
    %4798 = vmatprep.subr.bf16.mxu0 0
    %4799 = vmatpush1.bf16.msra.mxu0 %v4592
    %4800 = vmatprep.subr.bf16.mxu0 0
    %4801 = vmatpush1.bf16.msra.mxu0 %v4593
    %4802 = vmatprep.subr.bf16.mxu0 0
    %4803 = vmatpush1.bf16.msra.mxu0 %v4594
    %4804 = vmatprep.subr.bf16.mxu0 0
    %4805 = vmatpush1.bf16.msra.mxu0 %v4595
    %4806 = vmatprep.subr.bf16.mxu0 0
    %4807 = vmatpush1.bf16.msra.mxu0 %v4596
    %4808 = vmatprep.subr.bf16.mxu0 0
    %4809 = vmatpush1.bf16.msra.mxu0 %v4597
    %4810 = vmatprep.subr.bf16.mxu0 0
    %4811 = vmatpush1.bf16.msra.mxu0 %v4598
    %4812 = vmatprep.subr.bf16.mxu0 0
    %4813 = vmatpush1.bf16.msra.mxu0 %v4599
    %4814 = vmatprep.subr.bf16.mxu0 0
    %4815 = vmatpush1.bf16.msra.mxu0 %v4600
    %4816 = vmatprep.subr.bf16.mxu0 0
    %4817 = vmatpush1.bf16.msra.mxu0 %v4601
    %4818 = vmatprep.subr.bf16.mxu0 0
    %4819 = vmatpush1.bf16.msra.mxu0 %v4602
    %4820 = vmatprep.subr.bf16.mxu0 0
    %4821 = vmatpush1.bf16.msra.mxu0 %v4603
    %4822 = vmatprep.subr.bf16.mxu0 0
    %4823 = vmatpush1.bf16.msra.mxu0 %v4604
    %4824 = vmatprep.mubr.bf16.mxu0 %v4156
    %4825 = vmatmul.mubr.bf16.gmra.mrb[0].mxu0 %v4155
    %v4826 = vpop.f32.mrb[0].mxu0
    %v4827 = vadd.f32 %v4786, %v4826
    %v4828 = vpop.f32.mrb[0].mxu0
    %v4829 = vpop.f32.mrb[0].mxu0
    %v4830 = vadd.f32 %v4789, %v4829
    %v4831 = vpop.f32.mrb[0].mxu0
    %4832 = vdwg.mxu0
    %4833 = vst [vmem:[#allocation10] sm:$0xff] %v4827
    %4834 = vst [vmem:[#allocation10 + $0x8] sm:$0xff] %v4830
    // Predicated region
    $region34: #{tpu_custom_call.1} parent=1 // pred_check
      _
    $region35: #{tpu_custom_call.1} parent=1 // pred_check_branch
      %4836 = sbr.rel (0) target = $region37
    $region36: #{tpu_custom_call.1} parent=1 // pred_region
      %s4838 = ssub.s32 256, 256
      %4839 = vsyncadd [#allocation4], %s4838
      %s4840 = sshll.u32 [#allocation10], 4
      %s4841 = int_to_ptr.vmem [resolvable:$true] %s4840
      %4846 = dma.vmem_to_hbm [thread:$0]  %s4841, 256, %s4, [#allocation4], 128, 128, 8
    $region37: #{tpu_custom_call.1} parent=1 // pred_fallthru
      _
    // Predicated region
    $region38: #{tpu_custom_call.1} parent=1 // pred_check
      _
    $region39: #{tpu_custom_call.1} parent=1 // pred_check_branch
      %4848 = sbr.rel (0) target = $region41
    $region40: #{tpu_custom_call.1} parent=1 // pred_region
      %4849 = dma.done [#allocation4], 256
    $region41: #{tpu_custom_call.1} parent=1 // pred_fallthru
      _
    %4850 = vsyncpa [#allocation3], 1
    %4851 = vsyncpa [#allocation6], 1
    %4852 = vsyncpa [#allocation9], 1
    %4853 = vsyncpa [#allocation4], 1

</llo_original>
